<compile_context>
chip_gen: v7x
topology: tpu7x:2x2x1
jax: 0.10.0
libtpu: 0.0.40
codegen_flags: <defaults>
</compile_context>

<pallas_src>
import functools

import jax
import jax.numpy as jnp
from jax.experimental import pallas as pl
from jax.experimental.pallas import tpu as pltpu

EPS = 1e-5
LANE = 128
# Scoped-VMEM budget: resident weights + halo scratch + double-buffered image blocks
# stay well inside v7x's 64 MiB physical VMEM (and trivially inside v5e/v6e's 128 MiB).
_VMEM_LIMIT = 32 * 1024 * 1024


# --------------------------------------------------------------------------- #
# Small helpers
# --------------------------------------------------------------------------- #
def _round_up(a, b):
    return (a + b - 1) // b * b


def _pad_last(a, target):
    """Zero-pad the last axis up to `target` (lane-dense channels)."""
    d = target - a.shape[-1]
    if d == 0:
        return a
    return jnp.pad(a, [(0, 0)] * (a.ndim - 1) + [(0, d)])


def _pad_last2(a, rows, cols):
    """Zero-pad the last two axes up to (rows, cols)."""
    dr, dc = rows - a.shape[-2], cols - a.shape[-1]
    if dr == 0 and dc == 0:
        return a
    return jnp.pad(a, [(0, 0)] * (a.ndim - 2) + [(0, dr), (0, dc)])


def _fold_bn(gamma, beta, mean, var, eps=EPS):
    scale = (gamma / jnp.sqrt(var + eps)).astype(jnp.float32)
    shift = (beta - mean * scale).astype(jnp.float32)
    return scale, shift


# --------------------------------------------------------------------------- #
# Fused kernel body (per image)
# --------------------------------------------------------------------------- #
def _block_body(x_ref, s1_ref, t1_ref, w1_ref, b1_ref,
                s2_ref, t2_ref, w2_ref, b2_ref,
                s3_ref, t3_ref, w3_ref, b3_ref,
                proj, o_ref, pad_ref, *, ho, wo):
    """One image: BN1+ReLU+conv1, BN2+ReLU, 3x3 SAME conv (9 MXU taps on a bf16
    zero-halo plane), BN3+ReLU+conv3 + shortcut.  h1/h2/shortcut never leave VMEM."""
    hw = ho * wo
    cm = w2_ref.shape[-1]
    wp = pad_ref.shape[1]          # sublane-padded halo width (>= wo + 2)

    x = x_ref[0].astype(jnp.float32)                                   # (hw, ci)

    # --- BN1 + ReLU + 1x1 conv1 (stride already folded into the input layout) ---
    a1 = jnp.maximum(x * s1_ref[...] + t1_ref[...], 0.0).astype(jnp.bfloat16)
    h1 = jnp.dot(a1, w1_ref[...], preferred_element_type=jnp.float32) + b1_ref[...]

    # --- BN2 + ReLU written once (bf16) into the zero-halo plane ---
    a2 = jnp.maximum(h1 * s2_ref[...] + t2_ref[...], 0.0).astype(jnp.bfloat16)
    pad_ref[0:1, :, :] = jnp.zeros((1, wp, cm), jnp.bfloat16)
    pad_ref[ho + 1:ho + 2, :, :] = jnp.zeros((1, wp, cm), jnp.bfloat16)
    pad_ref[:, 0:1, :] = jnp.zeros((ho + 2, 1, cm), jnp.bfloat16)
    pad_ref[:, wo + 1:wo + 2, :] = jnp.zeros((ho + 2, 1, cm), jnp.bfloat16)
    pad_ref[1:ho + 1, 1:wo + 1, :] = a2.reshape(ho, wo, cm)

    # --- 3x3 SAME conv: 3 column-shifted bf16 slabs x 3 contiguous row taps.
    #     Tap results are summed as values: no per-tap VMEM accumulator RMWs.
    acc = None
    for dx in range(3):
        slab = pad_ref[:, dx:dx + wo, :].reshape((ho + 2) * wo, cm)     # bf16
        for dy in range(3):
            patch = slab[dy * wo:dy * wo + hw, :]
            contrib = jnp.dot(patch, w2_ref[3 * dy + dx],
                              preferred_element_type=jnp.float32)
            acc = contrib if acc is None else acc + contrib
    h2 = acc + b2_ref[...]

    # --- Fused epilogue: BN3 + ReLU + 1x1 conv3 + shortcut ---
    a3 = jnp.maximum(h2 * s3_ref[...] + t3_ref[...], 0.0).astype(jnp.bfloat16)
    y = jnp.dot(a3, w3_ref[...], preferred_element_type=jnp.float32) + b3_ref[...]

    if proj is not None:
        ssc_ref, tsc_ref, wsc_ref, bsc_ref = proj
        asc = jnp.maximum(x * ssc_ref[...] + tsc_ref[...], 0.0).astype(jnp.bfloat16)
        sc = jnp.dot(asc, wsc_ref[...], preferred_element_type=jnp.float32) + bsc_ref[...]
    else:
        sc = x  # identity shortcut (requires cin == 4*out_channels, lane-padded equal)

    o_ref[0] = (y + sc).astype(o_ref.dtype)


def _block_kernel_proj(x_ref, s1_ref, t1_ref, w1_ref, b1_ref,
                       s2_ref, t2_ref, w2_ref, b2_ref,
                       s3_ref, t3_ref, w3_ref, b3_ref,
                       ssc_ref, tsc_ref, wsc_ref, bsc_ref,
                       o_ref, pad_ref, *, ho, wo):
    _block_body(x_ref, s1_ref, t1_ref, w1_ref, b1_ref,
                s2_ref, t2_ref, w2_ref, b2_ref,
                s3_ref, t3_ref, w3_ref, b3_ref,
                (ssc_ref, tsc_ref, wsc_ref, bsc_ref),
                o_ref, pad_ref, ho=ho, wo=wo)


def _block_kernel_id(x_ref, s1_ref, t1_ref, w1_ref, b1_ref,
                     s2_ref, t2_ref, w2_ref, b2_ref,
                     s3_ref, t3_ref, w3_ref, b3_ref,
                     o_ref, pad_ref, *, ho, wo):
    _block_body(x_ref, s1_ref, t1_ref, w1_ref, b1_ref,
                s2_ref, t2_ref, w2_ref, b2_ref,
                s3_ref, t3_ref, w3_ref, b3_ref,
                None, o_ref, pad_ref, ho=ho, wo=wo)


# --------------------------------------------------------------------------- #
# Pallas wrapper
# --------------------------------------------------------------------------- #
def _fused_block(xs, s1, t1, w1, b1, s2, t2, w2, b2, s3, t3, w3, b3, proj, ho, wo):
    n, hw, ci = xs.shape
    cm = w1.shape[-1]
    co = w3.shape[-1]
    wp = _round_up(wo + 2, 8)   # sublane-aligned halo width

    x_spec = pl.BlockSpec((1, hw, ci), lambda i: (i, 0, 0))
    o_spec = pl.BlockSpec((1, hw, co), lambda i: (i, 0, 0))
    ci_vec = pl.BlockSpec((1, ci), lambda i: (0, 0))
    cm_vec = pl.BlockSpec((1, cm), lambda i: (0, 0))
    co_vec = pl.BlockSpec((1, co), lambda i: (0, 0))

    in_specs = [x_spec, ci_vec, ci_vec,
                pl.BlockSpec((ci, cm), lambda i: (0, 0)), cm_vec,
                cm_vec, cm_vec,
                pl.BlockSpec((9, cm, cm), lambda i: (0, 0, 0)), cm_vec,
                cm_vec, cm_vec,
                pl.BlockSpec((cm, co), lambda i: (0, 0)), co_vec]
    args = [xs, s1, t1, w1, b1, s2, t2, w2, b2, s3, t3, w3, b3]

    if proj is not None:
        ssc, tsc, wsc, bsc = proj
        in_specs += [ci_vec, ci_vec,
                     pl.BlockSpec((ci, co), lambda i: (0, 0)), co_vec]
        args += [ssc, tsc, wsc, bsc]
        kernel = functools.partial(_block_kernel_proj, ho=ho, wo=wo)
        proj_flops = 2 * hw * ci * co
    else:
        kernel = functools.partial(_block_kernel_id, ho=ho, wo=wo)
        proj_flops = 0

    flops = n * (2 * hw * (ci * cm + 9 * cm * cm + cm * co) + proj_flops)
    bytes_accessed = int(sum(a.size * a.dtype.itemsize for a in args)
                         + n * hw * co * 2)
    cost = pl.CostEstimate(flops=flops, transcendentals=0,
                           bytes_accessed=bytes_accessed)

    return pl.pallas_call(
        kernel,
        grid=(n,),
        in_specs=in_specs,
        out_specs=o_spec,
        out_shape=jax.ShapeDtypeStruct((n, hw, co), jnp.bfloat16),
        scratch_shapes=[
            pltpu.VMEM((ho + 2, wp, cm), jnp.bfloat16),   # bf16 zero-halo plane
        ],
        compiler_params=pltpu.CompilerParams(
            dimension_semantics=("parallel",),
            vmem_limit_bytes=_VMEM_LIMIT,
        ),
        cost_estimate=cost,
    )(*args)


# --------------------------------------------------------------------------- #
# Module: parameters + forward
# --------------------------------------------------------------------------- #
def init_params(key, in_channels, out_channels):
    cexp = out_channels * 4
    keys = jax.random.split(key, 12)

    def bn_params(k, c):
        k1, k2, k3, k4 = jax.random.split(k, 4)
        gamma = 1.0 + 0.1 * jax.random.normal(k1, (c,), jnp.float32)
        beta = 0.1 * jax.random.normal(k2, (c,), jnp.float32)
        mean = 0.1 * jax.random.normal(k3, (c,), jnp.float32)
        var = 1.0 + 0.1 * jnp.abs(jax.random.normal(k4, (c,), jnp.float32))
        return (gamma, beta, mean, var)

    p = {
        "bn1": bn_params(keys[0], in_channels),
        "w1": 0.1 * jax.random.normal(keys[1], (in_channels, out_channels), jnp.float32),
        "b1": 0.1 * jax.random.normal(keys[2], (out_channels,), jnp.float32),
        "bn2": bn_params(keys[3], out_channels),
        "w2": 0.1 * jax.random.normal(keys[4], (3, 3, out_channels, out_channels), jnp.float32),
        "b2": 0.1 * jax.random.normal(keys[5], (out_channels,), jnp.float32),
        "bn3": bn_params(keys[6], out_channels),
        "w3": 0.1 * jax.random.normal(keys[7], (out_channels, cexp), jnp.float32),
        "b3": 0.1 * jax.random.normal(keys[8], (cexp,), jnp.float32),
    }
    if in_channels != cexp:
        p["bnsc"] = bn_params(keys[9], in_channels)
        p["wsc"] = 0.1 * jax.random.normal(keys[10], (in_channels, cexp), jnp.float32)
        p["bsc"] = 0.1 * jax.random.normal(keys[11], (cexp,), jnp.float32)
    else:
        p["bnsc"] = p["wsc"] = p["bsc"] = None
    return p


@functools.partial(jax.jit, static_argnames=("stride",))
def preact_bottleneck(x_nchw, params, stride):
    """Forward pass.  Input / output: NCHW (PyTorch convention)."""
    n, cin, h, w = x_nchw.shape
    cmid = params["w1"].shape[1]
    cexp = params["w3"].shape[1]
    ho = (h - 1) // stride + 1
    wo = (w - 1) // stride + 1
    hw = ho * wo

    ci_p = _round_up(cin, LANE)
    cm_p = _round_up(cmid, LANE)
    co_p = _round_up(cexp, LANE)

    # Boundary: NCHW -> strided NHWC bf16, lane-padded channels, per-image rows.
    # The stride-s 1x1 convs only read every s-th pixel, so full-resolution x is
    # never materialized past this single (XLA-fused) layout op.
    xs = jnp.transpose(x_nchw[:, :, ::stride, ::stride], (0, 2, 3, 1)).astype(jnp.bfloat16)
    xs = _pad_last(xs, ci_p).reshape(n, hw, ci_p)

    # Fold BN params; lane-pad everything; weights as bf16 MXU operands.
    s1, t1 = _fold_bn(*params["bn1"])
    s1 = _pad_last(s1.reshape(1, -1), ci_p)
    t1 = _pad_last(t1.reshape(1, -1), ci_p)
    w1 = _pad_last2(params["w1"], ci_p, cm_p).astype(jnp.bfloat16)
    b1 = _pad_last(params["b1"].reshape(1, -1), cm_p)

    s2, t2 = _fold_bn(*params["bn2"])
    s2 = _pad_last(s2.reshape(1, -1), cm_p)
    t2 = _pad_last(t2.reshape(1, -1), cm_p)
    w2 = _pad_last2(params["w2"], cm_p, cm_p).reshape(9, cm_p, cm_p).astype(jnp.bfloat16)
    b2 = _pad_last(params["b2"].reshape(1, -1), cm_p)

    s3, t3 = _fold_bn(*params["bn3"])
    s3 = _pad_last(s3.reshape(1, -1), cm_p)
    t3 = _pad_last(t3.reshape(1, -1), cm_p)
    w3 = _pad_last2(params["w3"], cm_p, co_p).astype(jnp.bfloat16)
    b3 = _pad_last(params["b3"].reshape(1, -1), co_p)

    if params["wsc"] is not None:
        ssc, tsc = _fold_bn(*params["bnsc"])
        proj = (_pad_last(ssc.reshape(1, -1), ci_p),
                _pad_last(tsc.reshape(1, -1), ci_p),
                _pad_last2(params["wsc"], ci_p, co_p).astype(jnp.bfloat16),
                _pad_last(params["bsc"].reshape(1, -1), co_p))
    else:
        # Identity shortcut: only semantically valid for cin == 4*out_channels
        # (standard pre-act ResNet); stride is folded into the layout either way.
        # TODO(synk): original forward applies bn2/bn3 to x and returns None; not reproducible.
        if ci_p != co_p:
            raise ValueError("identity shortcut requires in_channels == 4*out_channels")
        proj = None

    out = _fused_block(xs, s1, t1, w1, b1, s2, t2, w2, b2, s3, t3, w3, b3, proj, ho, wo)
    out = out[..., :cexp].reshape(n, ho, wo, cexp)
    return jnp.transpose(out, (0, 3, 1, 2)).astype(jnp.float32)  # -> NCHW


# --------------------------------------------------------------------------- #
# Pure-JAX reference (mirrors the kernel's bf16 rounding points)
# --------------------------------------------------------------------------- #
def ref_forward(x_nchw, p, stride):
    bf, f32 = jnp.bfloat16, jnp.float32
    x = jnp.transpose(x_nchw[:, :, ::stride, ::stride], (0, 2, 3, 1)).astype(bf)
    xf = x.astype(f32)

    def bnrelu(t, prm):
        s, sh = _fold_bn(*prm)
        return jnp.maximum(t * s + sh, 0.0)

    a1 = bnrelu(xf, p["bn1"]).astype(bf)
    h1 = jnp.einsum("nhwc,co->nhwo", a1, p["w1"].astype(bf),
                    preferred_element_type=f32) + p["b1"]            # stays f32

    a2 = bnrelu(h1, p["bn2"]).astype(bf)
    h2 = jax.lax.conv_general_dilated(
        a2, p["w2"].astype(bf), (1, 1), "SAME",
        dimension_numbers=("NHWC", "HWIO", "NHWC"),
        preferred_element_type=f32) + p["b2"]

    a3 = bnrelu(h2, p["bn3"]).astype(bf)
    h3 = jnp.einsum("nhwc,co->nhwo", a3, p["w3"].astype(bf),
                    preferred_element_type=f32) + p["b3"]

    if p["wsc"] is not None:
        asc = bnrelu(xf, p["bnsc"]).astype(bf)
        sc = jnp.einsum("nhwc,co->nhwo", asc, p["wsc"].astype(bf),
                        preferred_element_type=f32) + p["bsc"]
    else:
        sc = xf
    out = (h3 + sc).astype(bf)                                        # kernel emits bf16
    return jnp.transpose(out, (0, 3, 1, 2)).astype(f32)


# --------------------------------------------------------------------------- #
if __name__ == "__main__":
    in_channels, out_channels, stride = 4, 4, 2
    n, h, w = 2, 16, 16

    key = jax.random.PRNGKey(0)
    kx, kp = jax.random.split(key)
    x = jax.random.normal(kx, (n, in_channels, h, w), jnp.float32)
    params = init_params(kp, in_channels, out_channels)

    out = jax.block_until_ready(preact_bottleneck(x, params, stride))
    ref = ref_forward(x, params, stride)

    ho, wo = (h - 1) // stride + 1, (w - 1) // stride + 1
    assert out.shape == (n, out_channels * 4, ho, wo), out.shape
    # bf16 output: compare with a relative tolerance (floor for near-zero values);
    # differences are bounded by ~1 bf16 ulp from accumulation-order rounding flips.
    tol = 2e-2 * (jnp.abs(ref) + 0.5)
    assert bool(jnp.all(jnp.abs(out - ref) <= tol)), (
        f"max abs err {float(jnp.max(jnp.abs(out - ref)))}")
    print("KERNEL_OK")
</pallas_src>

<mosaic_0001>
module attributes {stable_mosaic.version = 11 : i64} {
  func.func @_block_kernel_proj(%arg0: i32, %arg1: memref<1x64x128xbf16, #tpu.memory_space<vmem>>, %arg2: memref<1x128xf32, #tpu.memory_space<vmem>>, %arg3: memref<1x128xf32, #tpu.memory_space<vmem>>, %arg4: memref<128x128xbf16, #tpu.memory_space<vmem>>, %arg5: memref<1x128xf32, #tpu.memory_space<vmem>>, %arg6: memref<1x128xf32, #tpu.memory_space<vmem>>, %arg7: memref<1x128xf32, #tpu.memory_space<vmem>>, %arg8: memref<9x128x128xbf16, #tpu.memory_space<vmem>>, %arg9: memref<1x128xf32, #tpu.memory_space<vmem>>, %arg10: memref<1x128xf32, #tpu.memory_space<vmem>>, %arg11: memref<1x128xf32, #tpu.memory_space<vmem>>, %arg12: memref<128x128xbf16, #tpu.memory_space<vmem>>, %arg13: memref<1x128xf32, #tpu.memory_space<vmem>>, %arg14: memref<1x128xf32, #tpu.memory_space<vmem>>, %arg15: memref<1x128xf32, #tpu.memory_space<vmem>>, %arg16: memref<128x128xbf16, #tpu.memory_space<vmem>>, %arg17: memref<1x128xf32, #tpu.memory_space<vmem>>, %arg18: memref<1x64x128xbf16, #tpu.memory_space<vmem>>, %arg19: memref<10x16x128xbf16, #tpu.memory_space<vmem>>) attributes {dimension_semantics = [#tpu.dimension_semantics<parallel>], iteration_bounds = array<i64: 2>, scalar_prefetch = 0 : i64, scratch_operands = 1 : i64, tpu.core_type = #tpu.core_type<tc>, window_params = [{transform_indices = @transform_0, window_bounds = array<i64: 1, 64, 128>}, {pipeline_mode = #tpu.pipeline_mode<synchronous>, transform_indices = @transform_1, window_bounds = array<i64: 1, 128>}, {pipeline_mode = #tpu.pipeline_mode<synchronous>, transform_indices = @transform_2, window_bounds = array<i64: 1, 128>}, {pipeline_mode = #tpu.pipeline_mode<synchronous>, transform_indices = @transform_3, window_bounds = array<i64: 128, 128>}, {pipeline_mode = #tpu.pipeline_mode<synchronous>, transform_indices = @transform_4, window_bounds = array<i64: 1, 128>}, {pipeline_mode = #tpu.pipeline_mode<synchronous>, transform_indices = @transform_5, window_bounds = array<i64: 1, 128>}, {pipeline_mode = #tpu.pipeline_mode<synchronous>, transform_indices = @transform_6, window_bounds = array<i64: 1, 128>}, {pipeline_mode = #tpu.pipeline_mode<synchronous>, transform_indices = @transform_7, window_bounds = array<i64: 9, 128, 128>}, {pipeline_mode = #tpu.pipeline_mode<synchronous>, transform_indices = @transform_8, window_bounds = array<i64: 1, 128>}, {pipeline_mode = #tpu.pipeline_mode<synchronous>, transform_indices = @transform_9, window_bounds = array<i64: 1, 128>}, {pipeline_mode = #tpu.pipeline_mode<synchronous>, transform_indices = @transform_10, window_bounds = array<i64: 1, 128>}, {pipeline_mode = #tpu.pipeline_mode<synchronous>, transform_indices = @transform_11, window_bounds = array<i64: 128, 128>}, {pipeline_mode = #tpu.pipeline_mode<synchronous>, transform_indices = @transform_12, window_bounds = array<i64: 1, 128>}, {pipeline_mode = #tpu.pipeline_mode<synchronous>, transform_indices = @transform_13, window_bounds = array<i64: 1, 128>}, {pipeline_mode = #tpu.pipeline_mode<synchronous>, transform_indices = @transform_14, window_bounds = array<i64: 1, 128>}, {pipeline_mode = #tpu.pipeline_mode<synchronous>, transform_indices = @transform_15, window_bounds = array<i64: 128, 128>}, {pipeline_mode = #tpu.pipeline_mode<synchronous>, transform_indices = @transform_16, window_bounds = array<i64: 1, 128>}, {transform_indices = @transform_17, window_bounds = array<i64: 1, 64, 128>}]} {
    %c0 = arith.constant 0 : index
    %c0_0 = arith.constant 0 : index
    %c0_1 = arith.constant 0 : index
    %0 = vector.load %arg1[%c0, %c0_0, %c0_1] : memref<1x64x128xbf16, #tpu.memory_space<vmem>>, vector<1x64x128xbf16>
    %1 = vector.shape_cast %0 : vector<1x64x128xbf16> to vector<64x128xbf16>
    %2 = arith.extf %1 : vector<64x128xbf16> to vector<64x128xf32>
    %c0_2 = arith.constant 0 : index
    %c0_3 = arith.constant 0 : index
    %3 = vector.load %arg2[%c0_2, %c0_3] : memref<1x128xf32, #tpu.memory_space<vmem>>, vector<1x128xf32>
    %4 = vector.broadcast %3 : vector<1x128xf32> to vector<64x128xf32>
    %5 = arith.mulf %2, %4 : vector<64x128xf32>
    %c0_4 = arith.constant 0 : index
    %c0_5 = arith.constant 0 : index
    %6 = vector.load %arg3[%c0_4, %c0_5] : memref<1x128xf32, #tpu.memory_space<vmem>>, vector<1x128xf32>
    %7 = vector.broadcast %6 : vector<1x128xf32> to vector<64x128xf32>
    %8 = arith.addf %5, %7 : vector<64x128xf32>
    %cst = arith.constant 0.000000e+00 : f32
    %9 = vector.broadcast %cst : f32 to vector<64x128xf32>
    %10 = arith.maximumf %8, %9 : vector<64x128xf32>
    %11 = arith.truncf %10 : vector<64x128xf32> to vector<64x128xbf16>
    %c0_6 = arith.constant 0 : index
    %c0_7 = arith.constant 0 : index
    %12 = vector.load %arg4[%c0_6, %c0_7] : memref<128x128xbf16, #tpu.memory_space<vmem>>, vector<128x128xbf16>
    %cst_8 = arith.constant dense<0.000000e+00> : vector<64x128xf32>
    %13 = tpu.matmul %11, %12, %cst_8 {dimension_numbers = #tpu.dot_dimension_numbers<[1], [0], [0], [1], [0, 0, 1, 1], [], []>} : vector<64x128xbf16>, vector<128x128xbf16>, vector<64x128xf32> -> vector<64x128xf32>
    %c0_9 = arith.constant 0 : index
    %c0_10 = arith.constant 0 : index
    %14 = vector.load %arg5[%c0_9, %c0_10] : memref<1x128xf32, #tpu.memory_space<vmem>>, vector<1x128xf32>
    %15 = vector.broadcast %14 : vector<1x128xf32> to vector<64x128xf32>
    %16 = arith.addf %13, %15 : vector<64x128xf32>
    %c0_11 = arith.constant 0 : index
    %c0_12 = arith.constant 0 : index
    %17 = vector.load %arg6[%c0_11, %c0_12] : memref<1x128xf32, #tpu.memory_space<vmem>>, vector<1x128xf32>
    %18 = vector.broadcast %17 : vector<1x128xf32> to vector<64x128xf32>
    %19 = arith.mulf %16, %18 : vector<64x128xf32>
    %c0_13 = arith.constant 0 : index
    %c0_14 = arith.constant 0 : index
    %20 = vector.load %arg7[%c0_13, %c0_14] : memref<1x128xf32, #tpu.memory_space<vmem>>, vector<1x128xf32>
    %21 = vector.broadcast %20 : vector<1x128xf32> to vector<64x128xf32>
    %22 = arith.addf %19, %21 : vector<64x128xf32>
    %cst_15 = arith.constant 0.000000e+00 : f32
    %23 = vector.broadcast %cst_15 : f32 to vector<64x128xf32>
    %24 = arith.maximumf %22, %23 : vector<64x128xf32>
    %25 = arith.truncf %24 : vector<64x128xf32> to vector<64x128xbf16>
    %cst_16 = arith.constant 0.000000e+00 : bf16
    %26 = vector.broadcast %cst_16 : bf16 to vector<1x16x128xbf16>
    %c0_17 = arith.constant 0 : index
    %c0_18 = arith.constant 0 : index
    %c0_19 = arith.constant 0 : index
    %27 = vector.load %arg19[%c0_17, %c0_18, %c0_19] : memref<10x16x128xbf16, #tpu.memory_space<vmem>>, vector<1x16x128xbf16>
    tpu.vector_store %arg19[%c0_17, %c0_18, %c0_19], %26 {strides = array<i32>} : memref<10x16x128xbf16, #tpu.memory_space<vmem>>, vector<1x16x128xbf16>,
    %cst_20 = arith.constant 0.000000e+00 : bf16
    %28 = vector.broadcast %cst_20 : bf16 to vector<1x16x128xbf16>
    %c9 = arith.constant 9 : index
    %c0_21 = arith.constant 0 : index
    %c0_22 = arith.constant 0 : index
    %29 = vector.load %arg19[%c9, %c0_21, %c0_22] : memref<10x16x128xbf16, #tpu.memory_space<vmem>>, vector<1x16x128xbf16>
    tpu.vector_store %arg19[%c9, %c0_21, %c0_22], %28 {strides = array<i32>} : memref<10x16x128xbf16, #tpu.memory_space<vmem>>, vector<1x16x128xbf16>,
    %cst_23 = arith.constant 0.000000e+00 : bf16
    %30 = vector.broadcast %cst_23 : bf16 to vector<10x1x128xbf16>
    %c0_24 = arith.constant 0 : index
    %c0_25 = arith.constant 0 : index
    %c0_26 = arith.constant 0 : index
    %31 = vector.load %arg19[%c0_24, %c0_25, %c0_26] : memref<10x16x128xbf16, #tpu.memory_space<vmem>>, vector<10x1x128xbf16>
    tpu.vector_store %arg19[%c0_24, %c0_25, %c0_26], %30 {strides = array<i32>} : memref<10x16x128xbf16, #tpu.memory_space<vmem>>, vector<10x1x128xbf16>,
    %cst_27 = arith.constant 0.000000e+00 : bf16
    %32 = vector.broadcast %cst_27 : bf16 to vector<10x1x128xbf16>
    %c0_28 = arith.constant 0 : index
    %c9_29 = arith.constant 9 : index
    %c0_30 = arith.constant 0 : index
    %33 = vector.load %arg19[%c0_28, %c9_29, %c0_30] : memref<10x16x128xbf16, #tpu.memory_space<vmem>>, vector<10x1x128xbf16>
    tpu.vector_store %arg19[%c0_28, %c9_29, %c0_30], %32 {strides = array<i32>} : memref<10x16x128xbf16, #tpu.memory_space<vmem>>, vector<10x1x128xbf16>,
    %34 = vector.shape_cast %25 : vector<64x128xbf16> to vector<8x8x128xbf16>
    %c1 = arith.constant 1 : index
    %c1_31 = arith.constant 1 : index
    %c0_32 = arith.constant 0 : index
    %35 = vector.load %arg19[%c1, %c1_31, %c0_32] : memref<10x16x128xbf16, #tpu.memory_space<vmem>>, vector<8x8x128xbf16>
    tpu.vector_store %arg19[%c1, %c1_31, %c0_32], %34 {strides = array<i32>} : memref<10x16x128xbf16, #tpu.memory_space<vmem>>, vector<8x8x128xbf16>,
    %c0_33 = arith.constant 0 : index
    %c0_34 = arith.constant 0 : index
    %c0_35 = arith.constant 0 : index
    %36 = vector.load %arg19[%c0_33, %c0_34, %c0_35] : memref<10x16x128xbf16, #tpu.memory_space<vmem>>, vector<10x8x128xbf16>
    %37 = vector.shape_cast %36 : vector<10x8x128xbf16> to vector<80x128xbf16>
    %38 = vector.extract_strided_slice %37 {offsets = [0, 0], sizes = [64, 128], strides = [1, 1]} : vector<80x128xbf16> to vector<64x128xbf16>
    %c0_36 = arith.constant 0 : index
    %c0_37 = arith.constant 0 : index
    %c0_38 = arith.constant 0 : index
    %39 = vector.load %arg8[%c0_36, %c0_37, %c0_38] : memref<9x128x128xbf16, #tpu.memory_space<vmem>>, vector<1x128x128xbf16>
    %40 = vector.shape_cast %39 : vector<1x128x128xbf16> to vector<128x128xbf16>
    %cst_39 = arith.constant dense<0.000000e+00> : vector<64x128xf32>
    %41 = tpu.matmul %38, %40, %cst_39 {dimension_numbers = #tpu.dot_dimension_numbers<[1], [0], [0], [1], [0, 0, 1, 1], [], []>} : vector<64x128xbf16>, vector<128x128xbf16>, vector<64x128xf32> -> vector<64x128xf32>
    %42 = vector.extract_strided_slice %37 {offsets = [8, 0], sizes = [64, 128], strides = [1, 1]} : vector<80x128xbf16> to vector<64x128xbf16>
    %c3 = arith.constant 3 : index
    %c0_40 = arith.constant 0 : index
    %c0_41 = arith.constant 0 : index
    %43 = vector.load %arg8[%c3, %c0_40, %c0_41] : memref<9x128x128xbf16, #tpu.memory_space<vmem>>, vector<1x128x128xbf16>
    %44 = vector.shape_cast %43 : vector<1x128x128xbf16> to vector<128x128xbf16>
    %cst_42 = arith.constant dense<0.000000e+00> : vector<64x128xf32>
    %45 = tpu.matmul %42, %44, %cst_42 {dimension_numbers = #tpu.dot_dimension_numbers<[1], [0], [0], [1], [0, 0, 1, 1], [], []>} : vector<64x128xbf16>, vector<128x128xbf16>, vector<64x128xf32> -> vector<64x128xf32>
    %46 = arith.addf %41, %45 : vector<64x128xf32>
    %47 = vector.extract_strided_slice %37 {offsets = [16, 0], sizes = [64, 128], strides = [1, 1]} : vector<80x128xbf16> to vector<64x128xbf16>
    %c6 = arith.constant 6 : index
    %c0_43 = arith.constant 0 : index
    %c0_44 = arith.constant 0 : index
    %48 = vector.load %arg8[%c6, %c0_43, %c0_44] : memref<9x128x128xbf16, #tpu.memory_space<vmem>>, vector<1x128x128xbf16>
    %49 = vector.shape_cast %48 : vector<1x128x128xbf16> to vector<128x128xbf16>
    %cst_45 = arith.constant dense<0.000000e+00> : vector<64x128xf32>
    %50 = tpu.matmul %47, %49, %cst_45 {dimension_numbers = #tpu.dot_dimension_numbers<[1], [0], [0], [1], [0, 0, 1, 1], [], []>} : vector<64x128xbf16>, vector<128x128xbf16>, vector<64x128xf32> -> vector<64x128xf32>
    %51 = arith.addf %46, %50 : vector<64x128xf32>
    %c0_46 = arith.constant 0 : index
    %c1_47 = arith.constant 1 : index
    %c0_48 = arith.constant 0 : index
    %52 = vector.load %arg19[%c0_46, %c1_47, %c0_48] : memref<10x16x128xbf16, #tpu.memory_space<vmem>>, vector<10x8x128xbf16>
    %53 = vector.shape_cast %52 : vector<10x8x128xbf16> to vector<80x128xbf16>
    %54 = vector.extract_strided_slice %53 {offsets = [0, 0], sizes = [64, 128], strides = [1, 1]} : vector<80x128xbf16> to vector<64x128xbf16>
    %c1_49 = arith.constant 1 : index
    %c0_50 = arith.constant 0 : index
    %c0_51 = arith.constant 0 : index
    %55 = vector.load %arg8[%c1_49, %c0_50, %c0_51] : memref<9x128x128xbf16, #tpu.memory_space<vmem>>, vector<1x128x128xbf16>
    %56 = vector.shape_cast %55 : vector<1x128x128xbf16> to vector<128x128xbf16>
    %cst_52 = arith.constant dense<0.000000e+00> : vector<64x128xf32>
    %57 = tpu.matmul %54, %56, %cst_52 {dimension_numbers = #tpu.dot_dimension_numbers<[1], [0], [0], [1], [0, 0, 1, 1], [], []>} : vector<64x128xbf16>, vector<128x128xbf16>, vector<64x128xf32> -> vector<64x128xf32>
    %58 = arith.addf %51, %57 : vector<64x128xf32>
    %59 = vector.extract_strided_slice %53 {offsets = [8, 0], sizes = [64, 128], strides = [1, 1]} : vector<80x128xbf16> to vector<64x128xbf16>
    %c4 = arith.constant 4 : index
    %c0_53 = arith.constant 0 : index
    %c0_54 = arith.constant 0 : index
    %60 = vector.load %arg8[%c4, %c0_53, %c0_54] : memref<9x128x128xbf16, #tpu.memory_space<vmem>>, vector<1x128x128xbf16>
    %61 = vector.shape_cast %60 : vector<1x128x128xbf16> to vector<128x128xbf16>
    %cst_55 = arith.constant dense<0.000000e+00> : vector<64x128xf32>
    %62 = tpu.matmul %59, %61, %cst_55 {dimension_numbers = #tpu.dot_dimension_numbers<[1], [0], [0], [1], [0, 0, 1, 1], [], []>} : vector<64x128xbf16>, vector<128x128xbf16>, vector<64x128xf32> -> vector<64x128xf32>
    %63 = arith.addf %58, %62 : vector<64x128xf32>
    %64 = vector.extract_strided_slice %53 {offsets = [16, 0], sizes = [64, 128], strides = [1, 1]} : vector<80x128xbf16> to vector<64x128xbf16>
    %c7 = arith.constant 7 : index
    %c0_56 = arith.constant 0 : index
    %c0_57 = arith.constant 0 : index
    %65 = vector.load %arg8[%c7, %c0_56, %c0_57] : memref<9x128x128xbf16, #tpu.memory_space<vmem>>, vector<1x128x128xbf16>
    %66 = vector.shape_cast %65 : vector<1x128x128xbf16> to vector<128x128xbf16>
    %cst_58 = arith.constant dense<0.000000e+00> : vector<64x128xf32>
    %67 = tpu.matmul %64, %66, %cst_58 {dimension_numbers = #tpu.dot_dimension_numbers<[1], [0], [0], [1], [0, 0, 1, 1], [], []>} : vector<64x128xbf16>, vector<128x128xbf16>, vector<64x128xf32> -> vector<64x128xf32>
    %68 = arith.addf %63, %67 : vector<64x128xf32>
    %c0_59 = arith.constant 0 : index
    %c2 = arith.constant 2 : index
    %c0_60 = arith.constant 0 : index
    %69 = vector.load %arg19[%c0_59, %c2, %c0_60] : memref<10x16x128xbf16, #tpu.memory_space<vmem>>, vector<10x8x128xbf16>
    %70 = vector.shape_cast %69 : vector<10x8x128xbf16> to vector<80x128xbf16>
    %71 = vector.extract_strided_slice %70 {offsets = [0, 0], sizes = [64, 128], strides = [1, 1]} : vector<80x128xbf16> to vector<64x128xbf16>
    %c2_61 = arith.constant 2 : index
    %c0_62 = arith.constant 0 : index
    %c0_63 = arith.constant 0 : index
    %72 = vector.load %arg8[%c2_61, %c0_62, %c0_63] : memref<9x128x128xbf16, #tpu.memory_space<vmem>>, vector<1x128x128xbf16>
    %73 = vector.shape_cast %72 : vector<1x128x128xbf16> to vector<128x128xbf16>
    %cst_64 = arith.constant dense<0.000000e+00> : vector<64x128xf32>
    %74 = tpu.matmul %71, %73, %cst_64 {dimension_numbers = #tpu.dot_dimension_numbers<[1], [0], [0], [1], [0, 0, 1, 1], [], []>} : vector<64x128xbf16>, vector<128x128xbf16>, vector<64x128xf32> -> vector<64x128xf32>
    %75 = arith.addf %68, %74 : vector<64x128xf32>
    %76 = vector.extract_strided_slice %70 {offsets = [8, 0], sizes = [64, 128], strides = [1, 1]} : vector<80x128xbf16> to vector<64x128xbf16>
    %c5 = arith.constant 5 : index
    %c0_65 = arith.constant 0 : index
    %c0_66 = arith.constant 0 : index
    %77 = vector.load %arg8[%c5, %c0_65, %c0_66] : memref<9x128x128xbf16, #tpu.memory_space<vmem>>, vector<1x128x128xbf16>
    %78 = vector.shape_cast %77 : vector<1x128x128xbf16> to vector<128x128xbf16>
    %cst_67 = arith.constant dense<0.000000e+00> : vector<64x128xf32>
    %79 = tpu.matmul %76, %78, %cst_67 {dimension_numbers = #tpu.dot_dimension_numbers<[1], [0], [0], [1], [0, 0, 1, 1], [], []>} : vector<64x128xbf16>, vector<128x128xbf16>, vector<64x128xf32> -> vector<64x128xf32>
    %80 = arith.addf %75, %79 : vector<64x128xf32>
    %81 = vector.extract_strided_slice %70 {offsets = [16, 0], sizes = [64, 128], strides = [1, 1]} : vector<80x128xbf16> to vector<64x128xbf16>
    %c8 = arith.constant 8 : index
    %c0_68 = arith.constant 0 : index
    %c0_69 = arith.constant 0 : index
    %82 = vector.load %arg8[%c8, %c0_68, %c0_69] : memref<9x128x128xbf16, #tpu.memory_space<vmem>>, vector<1x128x128xbf16>
    %83 = vector.shape_cast %82 : vector<1x128x128xbf16> to vector<128x128xbf16>
    %cst_70 = arith.constant dense<0.000000e+00> : vector<64x128xf32>
    %84 = tpu.matmul %81, %83, %cst_70 {dimension_numbers = #tpu.dot_dimension_numbers<[1], [0], [0], [1], [0, 0, 1, 1], [], []>} : vector<64x128xbf16>, vector<128x128xbf16>, vector<64x128xf32> -> vector<64x128xf32>
    %85 = arith.addf %80, %84 : vector<64x128xf32>
    %c0_71 = arith.constant 0 : index
    %c0_72 = arith.constant 0 : index
    %86 = vector.load %arg9[%c0_71, %c0_72] : memref<1x128xf32, #tpu.memory_space<vmem>>, vector<1x128xf32>
    %87 = vector.broadcast %86 : vector<1x128xf32> to vector<64x128xf32>
    %88 = arith.addf %85, %87 : vector<64x128xf32>
    %c0_73 = arith.constant 0 : index
    %c0_74 = arith.constant 0 : index
    %89 = vector.load %arg10[%c0_73, %c0_74] : memref<1x128xf32, #tpu.memory_space<vmem>>, vector<1x128xf32>
    %90 = vector.broadcast %89 : vector<1x128xf32> to vector<64x128xf32>
    %91 = arith.mulf %88, %90 : vector<64x128xf32>
    %c0_75 = arith.constant 0 : index
    %c0_76 = arith.constant 0 : index
    %92 = vector.load %arg11[%c0_75, %c0_76] : memref<1x128xf32, #tpu.memory_space<vmem>>, vector<1x128xf32>
    %93 = vector.broadcast %92 : vector<1x128xf32> to vector<64x128xf32>
    %94 = arith.addf %91, %93 : vector<64x128xf32>
    %cst_77 = arith.constant 0.000000e+00 : f32
    %95 = vector.broadcast %cst_77 : f32 to vector<64x128xf32>
    %96 = arith.maximumf %94, %95 : vector<64x128xf32>
    %97 = arith.truncf %96 : vector<64x128xf32> to vector<64x128xbf16>
    %c0_78 = arith.constant 0 : index
    %c0_79 = arith.constant 0 : index
    %98 = vector.load %arg12[%c0_78, %c0_79] : memref<128x128xbf16, #tpu.memory_space<vmem>>, vector<128x128xbf16>
    %cst_80 = arith.constant dense<0.000000e+00> : vector<64x128xf32>
    %99 = tpu.matmul %97, %98, %cst_80 {dimension_numbers = #tpu.dot_dimension_numbers<[1], [0], [0], [1], [0, 0, 1, 1], [], []>} : vector<64x128xbf16>, vector<128x128xbf16>, vector<64x128xf32> -> vector<64x128xf32>
    %c0_81 = arith.constant 0 : index
    %c0_82 = arith.constant 0 : index
    %100 = vector.load %arg13[%c0_81, %c0_82] : memref<1x128xf32, #tpu.memory_space<vmem>>, vector<1x128xf32>
    %101 = vector.broadcast %100 : vector<1x128xf32> to vector<64x128xf32>
    %102 = arith.addf %99, %101 : vector<64x128xf32>
    %c0_83 = arith.constant 0 : index
    %c0_84 = arith.constant 0 : index
    %103 = vector.load %arg14[%c0_83, %c0_84] : memref<1x128xf32, #tpu.memory_space<vmem>>, vector<1x128xf32>
    %104 = vector.broadcast %103 : vector<1x128xf32> to vector<64x128xf32>
    %105 = arith.mulf %2, %104 : vector<64x128xf32>
    %c0_85 = arith.constant 0 : index
    %c0_86 = arith.constant 0 : index
    %106 = vector.load %arg15[%c0_85, %c0_86] : memref<1x128xf32, #tpu.memory_space<vmem>>, vector<1x128xf32>
    %107 = vector.broadcast %106 : vector<1x128xf32> to vector<64x128xf32>
    %108 = arith.addf %105, %107 : vector<64x128xf32>
    %cst_87 = arith.constant 0.000000e+00 : f32
    %109 = vector.broadcast %cst_87 : f32 to vector<64x128xf32>
    %110 = arith.maximumf %108, %109 : vector<64x128xf32>
    %111 = arith.truncf %110 : vector<64x128xf32> to vector<64x128xbf16>
    %c0_88 = arith.constant 0 : index
    %c0_89 = arith.constant 0 : index
    %112 = vector.load %arg16[%c0_88, %c0_89] : memref<128x128xbf16, #tpu.memory_space<vmem>>, vector<128x128xbf16>
    %cst_90 = arith.constant dense<0.000000e+00> : vector<64x128xf32>
    %113 = tpu.matmul %111, %112, %cst_90 {dimension_numbers = #tpu.dot_dimension_numbers<[1], [0], [0], [1], [0, 0, 1, 1], [], []>} : vector<64x128xbf16>, vector<128x128xbf16>, vector<64x128xf32> -> vector<64x128xf32>
    %c0_91 = arith.constant 0 : index
    %c0_92 = arith.constant 0 : index
    %114 = vector.load %arg17[%c0_91, %c0_92] : memref<1x128xf32, #tpu.memory_space<vmem>>, vector<1x128xf32>
    %115 = vector.broadcast %114 : vector<1x128xf32> to vector<64x128xf32>
    %116 = arith.addf %113, %115 : vector<64x128xf32>
    %117 = arith.addf %102, %116 : vector<64x128xf32>
    %118 = arith.truncf %117 : vector<64x128xf32> to vector<64x128xbf16>
    %c0_93 = arith.constant 0 : index
    %c0_94 = arith.constant 0 : index
    %c0_95 = arith.constant 0 : index
    %119 = vector.load %arg18[%c0_93, %c0_94, %c0_95] : memref<1x64x128xbf16, #tpu.memory_space<vmem>>, vector<1x64x128xbf16>
    %120 = vector.shape_cast %119 : vector<1x64x128xbf16> to vector<64x128xbf16>
    %121 = vector.shape_cast %118 : vector<64x128xbf16> to vector<1x64x128xbf16>
    tpu.vector_store %arg18[%c0_93, %c0_94, %c0_95], %121 {strides = array<i32>} : memref<1x64x128xbf16, #tpu.memory_space<vmem>>, vector<1x64x128xbf16>,
    return
  }
  func.func @transform_0(%arg0: i32) -> (i32, i32, i32) {
    %c0_i32 = arith.constant 0 : i32
    %c0_i32_0 = arith.constant 0 : i32
    %c0_i32_1 = arith.constant 0 : i32
    return %arg0, %c0_i32, %c0_i32_0 : i32, i32, i32
  }
  func.func @transform_1(%arg0: i32) -> (i32, i32) {
    %c0_i32 = arith.constant 0 : i32
    %c0_i32_0 = arith.constant 0 : i32
    %c0_i32_1 = arith.constant 0 : i32
    return %c0_i32, %c0_i32_0 : i32, i32
  }
  func.func @transform_2(%arg0: i32) -> (i32, i32) {
    %c0_i32 = arith.constant 0 : i32
    %c0_i32_0 = arith.constant 0 : i32
    %c0_i32_1 = arith.constant 0 : i32
    return %c0_i32, %c0_i32_0 : i32, i32
  }
  func.func @transform_3(%arg0: i32) -> (i32, i32) {
    %c0_i32 = arith.constant 0 : i32
    %c0_i32_0 = arith.constant 0 : i32
    %c0_i32_1 = arith.constant 0 : i32
    return %c0_i32, %c0_i32_0 : i32, i32
  }
  func.func @transform_4(%arg0: i32) -> (i32, i32) {
    %c0_i32 = arith.constant 0 : i32
    %c0_i32_0 = arith.constant 0 : i32
    %c0_i32_1 = arith.constant 0 : i32
    return %c0_i32, %c0_i32_0 : i32, i32
  }
  func.func @transform_5(%arg0: i32) -> (i32, i32) {
    %c0_i32 = arith.constant 0 : i32
    %c0_i32_0 = arith.constant 0 : i32
    %c0_i32_1 = arith.constant 0 : i32
    return %c0_i32, %c0_i32_0 : i32, i32
  }
  func.func @transform_6(%arg0: i32) -> (i32, i32) {
    %c0_i32 = arith.constant 0 : i32
    %c0_i32_0 = arith.constant 0 : i32
    %c0_i32_1 = arith.constant 0 : i32
    return %c0_i32, %c0_i32_0 : i32, i32
  }
  func.func @transform_7(%arg0: i32) -> (i32, i32, i32) {
    %c0_i32 = arith.constant 0 : i32
    %c0_i32_0 = arith.constant 0 : i32
    %c0_i32_1 = arith.constant 0 : i32
    %c0_i32_2 = arith.constant 0 : i32
    return %c0_i32, %c0_i32_0, %c0_i32_1 : i32, i32, i32
  }
  func.func @transform_8(%arg0: i32) -> (i32, i32) {
    %c0_i32 = arith.constant 0 : i32
    %c0_i32_0 = arith.constant 0 : i32
    %c0_i32_1 = arith.constant 0 : i32
    return %c0_i32, %c0_i32_0 : i32, i32
  }
  func.func @transform_9(%arg0: i32) -> (i32, i32) {
    %c0_i32 = arith.constant 0 : i32
    %c0_i32_0 = arith.constant 0 : i32
    %c0_i32_1 = arith.constant 0 : i32
    return %c0_i32, %c0_i32_0 : i32, i32
  }
  func.func @transform_10(%arg0: i32) -> (i32, i32) {
    %c0_i32 = arith.constant 0 : i32
    %c0_i32_0 = arith.constant 0 : i32
    %c0_i32_1 = arith.constant 0 : i32
    return %c0_i32, %c0_i32_0 : i32, i32
  }
  func.func @transform_11(%arg0: i32) -> (i32, i32) {
    %c0_i32 = arith.constant 0 : i32
    %c0_i32_0 = arith.constant 0 : i32
    %c0_i32_1 = arith.constant 0 : i32
    return %c0_i32, %c0_i32_0 : i32, i32
  }
  func.func @transform_12(%arg0: i32) -> (i32, i32) {
    %c0_i32 = arith.constant 0 : i32
    %c0_i32_0 = arith.constant 0 : i32
    %c0_i32_1 = arith.constant 0 : i32
    return %c0_i32, %c0_i32_0 : i32, i32
  }
  func.func @transform_13(%arg0: i32) -> (i32, i32) {
    %c0_i32 = arith.constant 0 : i32
    %c0_i32_0 = arith.constant 0 : i32
    %c0_i32_1 = arith.constant 0 : i32
    return %c0_i32, %c0_i32_0 : i32, i32
  }
  func.func @transform_14(%arg0: i32) -> (i32, i32) {
    %c0_i32 = arith.constant 0 : i32
    %c0_i32_0 = arith.constant 0 : i32
    %c0_i32_1 = arith.constant 0 : i32
    return %c0_i32, %c0_i32_0 : i32, i32
  }
  func.func @transform_15(%arg0: i32) -> (i32, i32) {
    %c0_i32 = arith.constant 0 : i32
    %c0_i32_0 = arith.constant 0 : i32
    %c0_i32_1 = arith.constant 0 : i32
    return %c0_i32, %c0_i32_0 : i32, i32
  }
  func.func @transform_16(%arg0: i32) -> (i32, i32) {
    %c0_i32 = arith.constant 0 : i32
    %c0_i32_0 = arith.constant 0 : i32
    %c0_i32_1 = arith.constant 0 : i32
    return %c0_i32, %c0_i32_0 : i32, i32
  }
  func.func @transform_17(%arg0: i32) -> (i32, i32, i32) {
    %c0_i32 = arith.constant 0 : i32
    %c0_i32_0 = arith.constant 0 : i32
    %c0_i32_1 = arith.constant 0 : i32
    return %arg0, %c0_i32, %c0_i32_0 : i32, i32, i32
  }
}

</mosaic_0001>

<llo_original>
// kernel: preact_bottleneck.1
$region0: #{preact_bottleneck.1}
  #allocation0 [shape = 'u32[]', space=smem, size = 0x4, offset = 0x4, fixed_abs, tag = 'smem constant byte address 0x4 - core index']
  #allocation1 [shape = 'u32[144,128]{1,0:T(1,128)}', space=vmem, size = 0x12000, scoped, tag = 'internal scratch']
  #allocation2 [shape = 'bf16[10,16,128]{2,1,0:T(16,128)(2,1)}', space=vmem, size = 0xa000, scoped, tag = 'scratch operand']
  %s0 = inlined_call_operand.vmem [shape: bf16[2,64,128], index: 0, kind: input, shape index: {}]
  %s1 = inlined_call_operand.vmem [shape: f32[1,128], index: 1, kind: input, shape index: {}]
  %s2 = inlined_call_operand.vmem [shape: f32[1,128], index: 2, kind: input, shape index: {}]
  %s3 = inlined_call_operand.vmem [shape: bf16[128,128], index: 3, kind: input, shape index: {}]
  %s4 = inlined_call_operand.vmem [shape: f32[1,128], index: 4, kind: input, shape index: {}]
  %s5 = inlined_call_operand.vmem [shape: f32[1,128], index: 5, kind: input, shape index: {}]
  %s6 = inlined_call_operand.vmem [shape: f32[1,128], index: 6, kind: input, shape index: {}]
  %s7 = inlined_call_operand.vmem [shape: bf16[9,128,128], index: 7, kind: input, shape index: {}]
  %s8 = inlined_call_operand.vmem [shape: f32[1,128], index: 8, kind: input, shape index: {}]
  %s9 = inlined_call_operand.vmem [shape: f32[1,128], index: 9, kind: input, shape index: {}]
  %s10 = inlined_call_operand.vmem [shape: f32[1,128], index: 10, kind: input, shape index: {}]
  %s11 = inlined_call_operand.vmem [shape: bf16[128,128], index: 11, kind: input, shape index: {}]
  %s12 = inlined_call_operand.vmem [shape: f32[1,128], index: 12, kind: input, shape index: {}]
  %s13 = inlined_call_operand.vmem [shape: f32[1,128], index: 13, kind: input, shape index: {}]
  %s14 = inlined_call_operand.vmem [shape: f32[1,128], index: 14, kind: input, shape index: {}]
  %s15 = inlined_call_operand.vmem [shape: bf16[128,128], index: 15, kind: input, shape index: {}]
  %s16 = inlined_call_operand.vmem [shape: f32[1,128], index: 16, kind: input, shape index: {}]
  %s17 = inlined_call_operand.vmem [shape: bf16[2,64,128], index: 17, kind: output, shape index: {}]
  %s18 = sld [smem:[#allocation0]]
  $region101: #{preact_bottleneck.1} parent=0
    _
  %s20 = ssub.s32 1, %s18
  %s21 = scalar_select 0, %s20, %s18
  loop: start=0, step=1, limit=4
  $region2: #{preact_bottleneck.1} parent=0 // loop_pre_header
    _
  $region3: #{preact_bottleneck.1} parent=0 // loop_header
    %s23 = sphi 0, %s27
    %p24 = scmp.ge.s32.totalorder %s23, 4
    %s33 = sphi 0, %s35
    %s36 = sphi 0, %s33
    %s37 = sphi 0, %s36
    %s53 = sphi 0, %s37
    %s57 = sphi 0, %s57
    %s59 = sphi 0, %s57
    %s60 = sphi 0, %s59
    %s74 = sphi 0, %s60
    %s78 = sphi 0, %s78
    %s80 = sphi 0, %s78
    %s81 = sphi 0, %s80
    %s95 = sphi 0, %s81
    %s99 = sphi 0, %s99
    %s101 = sphi 0, %s99
    %s102 = sphi 0, %s101
    %s116 = sphi 0, %s102
    %s120 = sphi 0, %s120
    %s122 = sphi 0, %s120
    %s123 = sphi 0, %s122
    %s137 = sphi 0, %s123
    %s141 = sphi 0, %s141
    %s143 = sphi 0, %s141
    %s144 = sphi 0, %s143
    %s158 = sphi 0, %s144
    %s162 = sphi 0, %s162
    %s164 = sphi 0, %s162
    %s165 = sphi 0, %s164
    %s179 = sphi 0, %s165
    %s183 = sphi 0, %s183
    %s185 = sphi 0, %s183
    %s186 = sphi 0, %s185
    %s200 = sphi 0, %s186
    %s204 = sphi 0, %s204
    %s206 = sphi 0, %s204
    %s207 = sphi 0, %s206
    %s221 = sphi 0, %s207
    %s225 = sphi 0, %s225
    %s227 = sphi 0, %s225
    %s228 = sphi 0, %s227
    %s242 = sphi 0, %s228
    %s246 = sphi 0, %s246
    %s248 = sphi 0, %s246
    %s249 = sphi 0, %s248
    %s263 = sphi 0, %s249
    %s267 = sphi 0, %s267
    %s269 = sphi 0, %s267
    %s270 = sphi 0, %s269
    %s284 = sphi 0, %s270
    %s288 = sphi 0, %s288
    %s290 = sphi 0, %s288
    %s291 = sphi 0, %s290
    %s305 = sphi 0, %s291
    %s309 = sphi 0, %s309
    %s311 = sphi 0, %s309
    %s312 = sphi 0, %s311
    %s326 = sphi 0, %s312
    %s330 = sphi 0, %s330
    %s332 = sphi 0, %s330
    %s333 = sphi 0, %s332
    %s347 = sphi 0, %s333
    %s351 = sphi 0, %s351
    %s353 = sphi 0, %s351
    %s354 = sphi 0, %s353
    %s368 = sphi 0, %s354
    %s372 = sphi 0, %s372
    %s374 = sphi 0, %s372
    %s375 = sphi 0, %s374
    %s389 = sphi 0, %s375
    %s395 = sphi 0, %s397
    %s398 = sphi 0, %s395
    %s399 = sphi 0, %s398
    %s415 = sphi 0, %s399
  $region4: #{preact_bottleneck.1} parent=0 // loop_header_branch
    %26 = sbr.rel (%p24) target = $region8
  $region5: #{preact_bottleneck.1} parent=0 // loop_body
    %s28 = ssub.s32 %s23, 1
    %s29 = ssub.s32 %s23, 2
    %s30 = sadd.s32 %s23, 1
    %s31 = ssub.s32 %s23, %s30
    %p32 = scmp.eq.s32.totalorder %s31, 0
    %s34 = sadd.s32 %s33, 1
    %s35 = scalar_select %p32, %s33, %s34
    %p38 = pneg %p32
    %p39 = scmp.eq.s32.totalorder %s23, 1
    %p40 = por %p38, %p39
    %p41 = scmp.ne.s32.totalorder %s33, %s36
    %p42 = scmp.eq.s32.totalorder %s23, 0
    %p43 = por %p41, %p42
    %p44 = scmp.ne.s32.totalorder %s33, %s36
    %p45 = scmp.eq.s32.totalorder %s28, 1
    %p46 = por %p44, %p45
    %p47 = scmp.ne.s32.totalorder %s36, %s37
    %p48 = scmp.eq.s32.totalorder %s28, 0
    %p49 = por %p47, %p48
    %p50 = scmp.ne.s32.totalorder %s36, %s37
    %p51 = scmp.eq.s32.totalorder %s29, 1
    %p52 = por %p50, %p51
    %p54 = scmp.ne.s32.totalorder %s37, %s53
    %p55 = scmp.eq.s32.totalorder %s29, 0
    %p56 = por %p54, %p55
    %s58 = sadd.s32 %s57, 1
    %p61 = scmp.eq.s32.totalorder %s23, 1
    %p62 = scmp.ne.s32.totalorder %s57, %s59
    %p63 = scmp.eq.s32.totalorder %s23, 0
    %p64 = por %p62, %p63
    %p65 = scmp.ne.s32.totalorder %s57, %s59
    %p66 = scmp.eq.s32.totalorder %s28, 1
    %p67 = por %p65, %p66
    %p68 = scmp.ne.s32.totalorder %s59, %s60
    %p69 = scmp.eq.s32.totalorder %s28, 0
    %p70 = por %p68, %p69
    %p71 = scmp.ne.s32.totalorder %s59, %s60
    %p72 = scmp.eq.s32.totalorder %s29, 1
    %p73 = por %p71, %p72
    %p75 = scmp.ne.s32.totalorder %s60, %s74
    %p76 = scmp.eq.s32.totalorder %s29, 0
    %p77 = por %p75, %p76
    %s79 = sadd.s32 %s78, 1
    %p82 = scmp.eq.s32.totalorder %s23, 1
    %p83 = scmp.ne.s32.totalorder %s78, %s80
    %p84 = scmp.eq.s32.totalorder %s23, 0
    %p85 = por %p83, %p84
    %p86 = scmp.ne.s32.totalorder %s78, %s80
    %p87 = scmp.eq.s32.totalorder %s28, 1
    %p88 = por %p86, %p87
    %p89 = scmp.ne.s32.totalorder %s80, %s81
    %p90 = scmp.eq.s32.totalorder %s28, 0
    %p91 = por %p89, %p90
    %p92 = scmp.ne.s32.totalorder %s80, %s81
    %p93 = scmp.eq.s32.totalorder %s29, 1
    %p94 = por %p92, %p93
    %p96 = scmp.ne.s32.totalorder %s81, %s95
    %p97 = scmp.eq.s32.totalorder %s29, 0
    %p98 = por %p96, %p97
    %s100 = sadd.s32 %s99, 1
    %p103 = scmp.eq.s32.totalorder %s23, 1
    %p104 = scmp.ne.s32.totalorder %s99, %s101
    %p105 = scmp.eq.s32.totalorder %s23, 0
    %p106 = por %p104, %p105
    %p107 = scmp.ne.s32.totalorder %s99, %s101
    %p108 = scmp.eq.s32.totalorder %s28, 1
    %p109 = por %p107, %p108
    %p110 = scmp.ne.s32.totalorder %s101, %s102
    %p111 = scmp.eq.s32.totalorder %s28, 0
    %p112 = por %p110, %p111
    %p113 = scmp.ne.s32.totalorder %s101, %s102
    %p114 = scmp.eq.s32.totalorder %s29, 1
    %p115 = por %p113, %p114
    %p117 = scmp.ne.s32.totalorder %s102, %s116
    %p118 = scmp.eq.s32.totalorder %s29, 0
    %p119 = por %p117, %p118
    %s121 = sadd.s32 %s120, 1
    %p124 = scmp.eq.s32.totalorder %s23, 1
    %p125 = scmp.ne.s32.totalorder %s120, %s122
    %p126 = scmp.eq.s32.totalorder %s23, 0
    %p127 = por %p125, %p126
    %p128 = scmp.ne.s32.totalorder %s120, %s122
    %p129 = scmp.eq.s32.totalorder %s28, 1
    %p130 = por %p128, %p129
    %p131 = scmp.ne.s32.totalorder %s122, %s123
    %p132 = scmp.eq.s32.totalorder %s28, 0
    %p133 = por %p131, %p132
    %p134 = scmp.ne.s32.totalorder %s122, %s123
    %p135 = scmp.eq.s32.totalorder %s29, 1
    %p136 = por %p134, %p135
    %p138 = scmp.ne.s32.totalorder %s123, %s137
    %p139 = scmp.eq.s32.totalorder %s29, 0
    %p140 = por %p138, %p139
    %s142 = sadd.s32 %s141, 1
    %p145 = scmp.eq.s32.totalorder %s23, 1
    %p146 = scmp.ne.s32.totalorder %s141, %s143
    %p147 = scmp.eq.s32.totalorder %s23, 0
    %p148 = por %p146, %p147
    %p149 = scmp.ne.s32.totalorder %s141, %s143
    %p150 = scmp.eq.s32.totalorder %s28, 1
    %p151 = por %p149, %p150
    %p152 = scmp.ne.s32.totalorder %s143, %s144
    %p153 = scmp.eq.s32.totalorder %s28, 0
    %p154 = por %p152, %p153
    %p155 = scmp.ne.s32.totalorder %s143, %s144
    %p156 = scmp.eq.s32.totalorder %s29, 1
    %p157 = por %p155, %p156
    %p159 = scmp.ne.s32.totalorder %s144, %s158
    %p160 = scmp.eq.s32.totalorder %s29, 0
    %p161 = por %p159, %p160
    %s163 = sadd.s32 %s162, 1
    %p166 = scmp.eq.s32.totalorder %s23, 1
    %p167 = scmp.ne.s32.totalorder %s162, %s164
    %p168 = scmp.eq.s32.totalorder %s23, 0
    %p169 = por %p167, %p168
    %p170 = scmp.ne.s32.totalorder %s162, %s164
    %p171 = scmp.eq.s32.totalorder %s28, 1
    %p172 = por %p170, %p171
    %p173 = scmp.ne.s32.totalorder %s164, %s165
    %p174 = scmp.eq.s32.totalorder %s28, 0
    %p175 = por %p173, %p174
    %p176 = scmp.ne.s32.totalorder %s164, %s165
    %p177 = scmp.eq.s32.totalorder %s29, 1
    %p178 = por %p176, %p177
    %p180 = scmp.ne.s32.totalorder %s165, %s179
    %p181 = scmp.eq.s32.totalorder %s29, 0
    %p182 = por %p180, %p181
    %s184 = sadd.s32 %s183, 1
    %p187 = scmp.eq.s32.totalorder %s23, 1
    %p188 = scmp.ne.s32.totalorder %s183, %s185
    %p189 = scmp.eq.s32.totalorder %s23, 0
    %p190 = por %p188, %p189
    %p191 = scmp.ne.s32.totalorder %s183, %s185
    %p192 = scmp.eq.s32.totalorder %s28, 1
    %p193 = por %p191, %p192
    %p194 = scmp.ne.s32.totalorder %s185, %s186
    %p195 = scmp.eq.s32.totalorder %s28, 0
    %p196 = por %p194, %p195
    %p197 = scmp.ne.s32.totalorder %s185, %s186
    %p198 = scmp.eq.s32.totalorder %s29, 1
    %p199 = por %p197, %p198
    %p201 = scmp.ne.s32.totalorder %s186, %s200
    %p202 = scmp.eq.s32.totalorder %s29, 0
    %p203 = por %p201, %p202
    %s205 = sadd.s32 %s204, 1
    %p208 = scmp.eq.s32.totalorder %s23, 1
    %p209 = scmp.ne.s32.totalorder %s204, %s206
    %p210 = scmp.eq.s32.totalorder %s23, 0
    %p211 = por %p209, %p210
    %p212 = scmp.ne.s32.totalorder %s204, %s206
    %p213 = scmp.eq.s32.totalorder %s28, 1
    %p214 = por %p212, %p213
    %p215 = scmp.ne.s32.totalorder %s206, %s207
    %p216 = scmp.eq.s32.totalorder %s28, 0
    %p217 = por %p215, %p216
    %p218 = scmp.ne.s32.totalorder %s206, %s207
    %p219 = scmp.eq.s32.totalorder %s29, 1
    %p220 = por %p218, %p219
    %p222 = scmp.ne.s32.totalorder %s207, %s221
    %p223 = scmp.eq.s32.totalorder %s29, 0
    %p224 = por %p222, %p223
    %s226 = sadd.s32 %s225, 1
    %p229 = scmp.eq.s32.totalorder %s23, 1
    %p230 = scmp.ne.s32.totalorder %s225, %s227
    %p231 = scmp.eq.s32.totalorder %s23, 0
    %p232 = por %p230, %p231
    %p233 = scmp.ne.s32.totalorder %s225, %s227
    %p234 = scmp.eq.s32.totalorder %s28, 1
    %p235 = por %p233, %p234
    %p236 = scmp.ne.s32.totalorder %s227, %s228
    %p237 = scmp.eq.s32.totalorder %s28, 0
    %p238 = por %p236, %p237
    %p239 = scmp.ne.s32.totalorder %s227, %s228
    %p240 = scmp.eq.s32.totalorder %s29, 1
    %p241 = por %p239, %p240
    %p243 = scmp.ne.s32.totalorder %s228, %s242
    %p244 = scmp.eq.s32.totalorder %s29, 0
    %p245 = por %p243, %p244
    %s247 = sadd.s32 %s246, 1
    %p250 = scmp.eq.s32.totalorder %s23, 1
    %p251 = scmp.ne.s32.totalorder %s246, %s248
    %p252 = scmp.eq.s32.totalorder %s23, 0
    %p253 = por %p251, %p252
    %p254 = scmp.ne.s32.totalorder %s246, %s248
    %p255 = scmp.eq.s32.totalorder %s28, 1
    %p256 = por %p254, %p255
    %p257 = scmp.ne.s32.totalorder %s248, %s249
    %p258 = scmp.eq.s32.totalorder %s28, 0
    %p259 = por %p257, %p258
    %p260 = scmp.ne.s32.totalorder %s248, %s249
    %p261 = scmp.eq.s32.totalorder %s29, 1
    %p262 = por %p260, %p261
    %p264 = scmp.ne.s32.totalorder %s249, %s263
    %p265 = scmp.eq.s32.totalorder %s29, 0
    %p266 = por %p264, %p265
    %s268 = sadd.s32 %s267, 1
    %p271 = scmp.eq.s32.totalorder %s23, 1
    %p272 = scmp.ne.s32.totalorder %s267, %s269
    %p273 = scmp.eq.s32.totalorder %s23, 0
    %p274 = por %p272, %p273
    %p275 = scmp.ne.s32.totalorder %s267, %s269
    %p276 = scmp.eq.s32.totalorder %s28, 1
    %p277 = por %p275, %p276
    %p278 = scmp.ne.s32.totalorder %s269, %s270
    %p279 = scmp.eq.s32.totalorder %s28, 0
    %p280 = por %p278, %p279
    %p281 = scmp.ne.s32.totalorder %s269, %s270
    %p282 = scmp.eq.s32.totalorder %s29, 1
    %p283 = por %p281, %p282
    %p285 = scmp.ne.s32.totalorder %s270, %s284
    %p286 = scmp.eq.s32.totalorder %s29, 0
    %p287 = por %p285, %p286
    %s289 = sadd.s32 %s288, 1
    %p292 = scmp.eq.s32.totalorder %s23, 1
    %p293 = scmp.ne.s32.totalorder %s288, %s290
    %p294 = scmp.eq.s32.totalorder %s23, 0
    %p295 = por %p293, %p294
    %p296 = scmp.ne.s32.totalorder %s288, %s290
    %p297 = scmp.eq.s32.totalorder %s28, 1
    %p298 = por %p296, %p297
    %p299 = scmp.ne.s32.totalorder %s290, %s291
    %p300 = scmp.eq.s32.totalorder %s28, 0
    %p301 = por %p299, %p300
    %p302 = scmp.ne.s32.totalorder %s290, %s291
    %p303 = scmp.eq.s32.totalorder %s29, 1
    %p304 = por %p302, %p303
    %p306 = scmp.ne.s32.totalorder %s291, %s305
    %p307 = scmp.eq.s32.totalorder %s29, 0
    %p308 = por %p306, %p307
    %s310 = sadd.s32 %s309, 1
    %p313 = scmp.eq.s32.totalorder %s23, 1
    %p314 = scmp.ne.s32.totalorder %s309, %s311
    %p315 = scmp.eq.s32.totalorder %s23, 0
    %p316 = por %p314, %p315
    %p317 = scmp.ne.s32.totalorder %s309, %s311
    %p318 = scmp.eq.s32.totalorder %s28, 1
    %p319 = por %p317, %p318
    %p320 = scmp.ne.s32.totalorder %s311, %s312
    %p321 = scmp.eq.s32.totalorder %s28, 0
    %p322 = por %p320, %p321
    %p323 = scmp.ne.s32.totalorder %s311, %s312
    %p324 = scmp.eq.s32.totalorder %s29, 1
    %p325 = por %p323, %p324
    %p327 = scmp.ne.s32.totalorder %s312, %s326
    %p328 = scmp.eq.s32.totalorder %s29, 0
    %p329 = por %p327, %p328
    %s331 = sadd.s32 %s330, 1
    %p334 = scmp.eq.s32.totalorder %s23, 1
    %p335 = scmp.ne.s32.totalorder %s330, %s332
    %p336 = scmp.eq.s32.totalorder %s23, 0
    %p337 = por %p335, %p336
    %p338 = scmp.ne.s32.totalorder %s330, %s332
    %p339 = scmp.eq.s32.totalorder %s28, 1
    %p340 = por %p338, %p339
    %p341 = scmp.ne.s32.totalorder %s332, %s333
    %p342 = scmp.eq.s32.totalorder %s28, 0
    %p343 = por %p341, %p342
    %p344 = scmp.ne.s32.totalorder %s332, %s333
    %p345 = scmp.eq.s32.totalorder %s29, 1
    %p346 = por %p344, %p345
    %p348 = scmp.ne.s32.totalorder %s333, %s347
    %p349 = scmp.eq.s32.totalorder %s29, 0
    %p350 = por %p348, %p349
    %s352 = sadd.s32 %s351, 1
    %p355 = scmp.eq.s32.totalorder %s23, 1
    %p356 = scmp.ne.s32.totalorder %s351, %s353
    %p357 = scmp.eq.s32.totalorder %s23, 0
    %p358 = por %p356, %p357
    %p359 = scmp.ne.s32.totalorder %s351, %s353
    %p360 = scmp.eq.s32.totalorder %s28, 1
    %p361 = por %p359, %p360
    %p362 = scmp.ne.s32.totalorder %s353, %s354
    %p363 = scmp.eq.s32.totalorder %s28, 0
    %p364 = por %p362, %p363
    %p365 = scmp.ne.s32.totalorder %s353, %s354
    %p366 = scmp.eq.s32.totalorder %s29, 1
    %p367 = por %p365, %p366
    %p369 = scmp.ne.s32.totalorder %s354, %s368
    %p370 = scmp.eq.s32.totalorder %s29, 0
    %p371 = por %p369, %p370
    %s373 = sadd.s32 %s372, 1
    %p376 = scmp.eq.s32.totalorder %s23, 1
    %p377 = scmp.ne.s32.totalorder %s372, %s374
    %p378 = scmp.eq.s32.totalorder %s23, 0
    %p379 = por %p377, %p378
    %p380 = scmp.ne.s32.totalorder %s372, %s374
    %p381 = scmp.eq.s32.totalorder %s28, 1
    %p382 = por %p380, %p381
    %p383 = scmp.ne.s32.totalorder %s374, %s375
    %p384 = scmp.eq.s32.totalorder %s28, 0
    %p385 = por %p383, %p384
    %p386 = scmp.ne.s32.totalorder %s374, %s375
    %p387 = scmp.eq.s32.totalorder %s29, 1
    %p388 = por %p386, %p387
    %p390 = scmp.ne.s32.totalorder %s375, %s389
    %p391 = scmp.eq.s32.totalorder %s29, 0
    %p392 = por %p390, %p391
    %s393 = ssub.s32 %s23, %s30
    %p394 = scmp.eq.s32.totalorder %s393, 0
    %s396 = sadd.s32 %s395, 1
    %s397 = scalar_select %p394, %s395, %s396
    %p400 = pneg %p394
    %p401 = scmp.eq.s32.totalorder %s23, 1
    %p402 = por %p400, %p401
    %p403 = scmp.ne.s32.totalorder %s395, %s398
    %p404 = scmp.eq.s32.totalorder %s23, 0
    %p405 = por %p403, %p404
    %p406 = scmp.ne.s32.totalorder %s395, %s398
    %p407 = scmp.eq.s32.totalorder %s28, 1
    %p408 = por %p406, %p407
    %p409 = scmp.ne.s32.totalorder %s398, %s399
    %p410 = scmp.eq.s32.totalorder %s28, 0
    %p411 = por %p409, %p410
    %p412 = scmp.ne.s32.totalorder %s398, %s399
    %p413 = scmp.eq.s32.totalorder %s29, 1
    %p414 = por %p412, %p413
    %p416 = scmp.ne.s32.totalorder %s399, %s415
    %p417 = scmp.eq.s32.totalorder %s29, 0
    %p418 = por %p416, %p417
    %p419 = scmp.le.s32.totalorder 1, %s23
    %p420 = scmp.lt.s32.totalorder %s23, 3
    %p421 = pnand %p419, %p420
    %p422 = pneg %p421
    // Predicated region
    $region9: #{preact_bottleneck.1} parent=5 // pred_check
      _
    $region10: #{preact_bottleneck.1} parent=5 // pred_check_branch
      %424 = sbr.rel (%p421) target = $region12
    $region11: #{preact_bottleneck.1} parent=5 // pred_region
      %s425 = ssub.s32 %s23, 1
      // Predicated region
      $region13: #{preact_bottleneck.1} parent=11 // pred_check
        %p426 = pneg %p70
      $region14: #{preact_bottleneck.1} parent=11 // pred_check_branch
        %428 = sbr.rel (%p426) target = $region16
      $region15: #{preact_bottleneck.1} parent=11 // pred_region
        _
      $region16: #{preact_bottleneck.1} parent=11 // pred_fallthru
        _
      // Predicated region
      $region17: #{preact_bottleneck.1} parent=11 // pred_check
        %p429 = pneg %p91
      $region18: #{preact_bottleneck.1} parent=11 // pred_check_branch
        %431 = sbr.rel (%p429) target = $region20
      $region19: #{preact_bottleneck.1} parent=11 // pred_region
        _
      $region20: #{preact_bottleneck.1} parent=11 // pred_fallthru
        _
      // Predicated region
      $region21: #{preact_bottleneck.1} parent=11 // pred_check
        %p432 = pneg %p112
      $region22: #{preact_bottleneck.1} parent=11 // pred_check_branch
        %434 = sbr.rel (%p432) target = $region24
      $region23: #{preact_bottleneck.1} parent=11 // pred_region
        _
      $region24: #{preact_bottleneck.1} parent=11 // pred_fallthru
        _
      // Predicated region
      $region25: #{preact_bottleneck.1} parent=11 // pred_check
        %p435 = pneg %p133
      $region26: #{preact_bottleneck.1} parent=11 // pred_check_branch
        %437 = sbr.rel (%p435) target = $region28
      $region27: #{preact_bottleneck.1} parent=11 // pred_region
        _
      $region28: #{preact_bottleneck.1} parent=11 // pred_fallthru
        _
      // Predicated region
      $region29: #{preact_bottleneck.1} parent=11 // pred_check
        %p438 = pneg %p154
      $region30: #{preact_bottleneck.1} parent=11 // pred_check_branch
        %440 = sbr.rel (%p438) target = $region32
      $region31: #{preact_bottleneck.1} parent=11 // pred_region
        _
      $region32: #{preact_bottleneck.1} parent=11 // pred_fallthru
        _
      // Predicated region
      $region33: #{preact_bottleneck.1} parent=11 // pred_check
        %p441 = pneg %p175
      $region34: #{preact_bottleneck.1} parent=11 // pred_check_branch
        %443 = sbr.rel (%p441) target = $region36
      $region35: #{preact_bottleneck.1} parent=11 // pred_region
        _
      $region36: #{preact_bottleneck.1} parent=11 // pred_fallthru
        _
      // Predicated region
      $region37: #{preact_bottleneck.1} parent=11 // pred_check
        %p444 = pneg %p196
      $region38: #{preact_bottleneck.1} parent=11 // pred_check_branch
        %446 = sbr.rel (%p444) target = $region40
      $region39: #{preact_bottleneck.1} parent=11 // pred_region
        _
      $region40: #{preact_bottleneck.1} parent=11 // pred_fallthru
        _
      // Predicated region
      $region41: #{preact_bottleneck.1} parent=11 // pred_check
        %p447 = pneg %p217
      $region42: #{preact_bottleneck.1} parent=11 // pred_check_branch
        %449 = sbr.rel (%p447) target = $region44
      $region43: #{preact_bottleneck.1} parent=11 // pred_region
        _
      $region44: #{preact_bottleneck.1} parent=11 // pred_fallthru
        _
      // Predicated region
      $region45: #{preact_bottleneck.1} parent=11 // pred_check
        %p450 = pneg %p238
      $region46: #{preact_bottleneck.1} parent=11 // pred_check_branch
        %452 = sbr.rel (%p450) target = $region48
      $region47: #{preact_bottleneck.1} parent=11 // pred_region
        _
      $region48: #{preact_bottleneck.1} parent=11 // pred_fallthru
        _
      // Predicated region
      $region49: #{preact_bottleneck.1} parent=11 // pred_check
        %p453 = pneg %p259
      $region50: #{preact_bottleneck.1} parent=11 // pred_check_branch
        %455 = sbr.rel (%p453) target = $region52
      $region51: #{preact_bottleneck.1} parent=11 // pred_region
        _
      $region52: #{preact_bottleneck.1} parent=11 // pred_fallthru
        _
      // Predicated region
      $region53: #{preact_bottleneck.1} parent=11 // pred_check
        %p456 = pneg %p280
      $region54: #{preact_bottleneck.1} parent=11 // pred_check_branch
        %458 = sbr.rel (%p456) target = $region56
      $region55: #{preact_bottleneck.1} parent=11 // pred_region
        _
      $region56: #{preact_bottleneck.1} parent=11 // pred_fallthru
        _
      // Predicated region
      $region57: #{preact_bottleneck.1} parent=11 // pred_check
        %p459 = pneg %p301
      $region58: #{preact_bottleneck.1} parent=11 // pred_check_branch
        %461 = sbr.rel (%p459) target = $region60
      $region59: #{preact_bottleneck.1} parent=11 // pred_region
        _
      $region60: #{preact_bottleneck.1} parent=11 // pred_fallthru
        _
      // Predicated region
      $region61: #{preact_bottleneck.1} parent=11 // pred_check
        %p462 = pneg %p322
      $region62: #{preact_bottleneck.1} parent=11 // pred_check_branch
        %464 = sbr.rel (%p462) target = $region64
      $region63: #{preact_bottleneck.1} parent=11 // pred_region
        _
      $region64: #{preact_bottleneck.1} parent=11 // pred_fallthru
        _
      // Predicated region
      $region65: #{preact_bottleneck.1} parent=11 // pred_check
        %p465 = pneg %p343
      $region66: #{preact_bottleneck.1} parent=11 // pred_check_branch
        %467 = sbr.rel (%p465) target = $region68
      $region67: #{preact_bottleneck.1} parent=11 // pred_region
        _
      $region68: #{preact_bottleneck.1} parent=11 // pred_fallthru
        _
      // Predicated region
      $region69: #{preact_bottleneck.1} parent=11 // pred_check
        %p468 = pneg %p364
      $region70: #{preact_bottleneck.1} parent=11 // pred_check_branch
        %470 = sbr.rel (%p468) target = $region72
      $region71: #{preact_bottleneck.1} parent=11 // pred_region
        _
      $region72: #{preact_bottleneck.1} parent=11 // pred_fallthru
        _
      // Predicated region
      $region73: #{preact_bottleneck.1} parent=11 // pred_check
        %p471 = pneg %p385
      $region74: #{preact_bottleneck.1} parent=11 // pred_check_branch
        %473 = sbr.rel (%p471) target = $region76
      $region75: #{preact_bottleneck.1} parent=11 // pred_region
        _
      $region76: #{preact_bottleneck.1} parent=11 // pred_fallthru
        _
    $region12: #{preact_bottleneck.1} parent=5 // pred_fallthru
      _
    %p474 = scmp.lt.s32.totalorder %s23, 2
    // Predicated region
    $region77: #{preact_bottleneck.1} parent=5 // pred_check
      %p475 = pneg %p474
    $region78: #{preact_bottleneck.1} parent=5 // pred_check_branch
      %477 = sbr.rel (%p475) target = $region80
    $region79: #{preact_bottleneck.1} parent=5 // pred_region
      // Predicated region
      $region81: #{preact_bottleneck.1} parent=79 // pred_check
        %p478 = pneg %p43
      $region82: #{preact_bottleneck.1} parent=79 // pred_check_branch
        %480 = sbr.rel (%p478) target = $region84
      $region83: #{preact_bottleneck.1} parent=79 // pred_region
        %p481 = scmp.lt.s32.totalorder %s23, 1
        %s482 = scalar_select %p481, %s23, 1
        %s483 = smul.addr %s482, 8
        %s484 = smul.addr %s483, 4
        %s485 = scalar_lea.vmem %s0, %s484
      $region84: #{preact_bottleneck.1} parent=79 // pred_fallthru
        _
    $region80: #{preact_bottleneck.1} parent=5 // pred_fallthru
      _
    %p486 = scmp.le.s32.totalorder 1, %s23
    %p487 = scmp.lt.s32.totalorder %s23, 3
    %p488 = pnand %p486, %p487
    %p489 = pneg %p488
    // Predicated region
    $region85: #{preact_bottleneck.1} parent=5 // pred_check
      _
    $region86: #{preact_bottleneck.1} parent=5 // pred_check_branch
      %491 = sbr.rel (%p488) target = $region88
    $region87: #{preact_bottleneck.1} parent=5 // pred_region
      %s492 = ssub.s32 %s23, 1
      %p493 = scmp.lt.s32.totalorder %s28, 1
      %s494 = scalar_select %p493, %s28, 1
      %s495 = smul.addr %s494, 8
      %s496 = smul.addr %s495, 4
      %s497 = scalar_lea.vmem %s0, %s496
      %p498 = pneg %p49
      %p499 = pneg %p46
      %p500 = pneg %p70
      %p501 = pneg %p67
      %p502 = pneg %p91
      %p503 = pneg %p88
      %p504 = pneg %p112
      %p505 = pneg %p109
      %p506 = pneg %p133
      %p507 = pneg %p130
      %p508 = pneg %p154
      %p509 = pneg %p151
      %p510 = pneg %p175
      %p511 = pneg %p172
      %p512 = pneg %p196
      %p513 = pneg %p193
      %p514 = pneg %p217
      %p515 = pneg %p214
      %p516 = pneg %p238
      %p517 = pneg %p235
      %p518 = pneg %p259
      %p519 = pneg %p256
      %p520 = pneg %p280
      %p521 = pneg %p277
      %p522 = pneg %p301
      %p523 = pneg %p298
      %p524 = pneg %p322
      %p525 = pneg %p319
      %p526 = pneg %p343
      %p527 = pneg %p340
      %p528 = pneg %p364
      %p529 = pneg %p361
      %p530 = pneg %p385
      %p531 = pneg %p382
      %p532 = pneg %p411
      %p533 = pneg %p408
      %p534 = scmp.lt.s32.totalorder %s28, 1
      %s535 = scalar_select %p534, %s28, 1
      %s536 = smul.addr %s535, 8
      %s537 = smul.addr %s536, 4
      %s538 = scalar_lea.vmem %s17, %s537
      %p539 = scmp.lt.s32.totalorder %s28, 1
      %s540 = scalar_select %p539, %s28, 1
      %s541 = smul.addr %s540, 8
      %s542 = smul.addr %s541, 4
      %s543 = scalar_lea.vmem %s0, %s542
      %p544 = scmp.lt.s32.totalorder %s28, 1
      %s545 = scalar_select %p544, %s28, 1
      %s546 = smul.addr %s545, 8
      %s547 = smul.addr %s546, 4
      %s548 = scalar_lea.vmem %s17, %s547
      %v550 = vld [vmem:[%s543] sm:$0xf]
      %v551 = vld [vmem:[%s543 + $0x4] sm:$0xf]
      %v552 = vld [vmem:[%s543 + $0x8] sm:$0xf]
      %v553 = vld [vmem:[%s543 + $0xc] sm:$0xf]
      %v554 = vld [vmem:[%s543 + $0x10] sm:$0xf]
      %v555 = vld [vmem:[%s543 + $0x14] sm:$0xf]
      %v556 = vld [vmem:[%s543 + $0x18] sm:$0xf]
      %v557 = vld [vmem:[%s543 + $0x1c] sm:$0xf]
      %v558 = vunpack.c.l.bf16 %v550
      %v559 = vunpack.c.l.bf16 %v551
      %v560 = vunpack.c.l.bf16 %v552
      %v561 = vunpack.c.l.bf16 %v553
      %v562 = vunpack.c.l.bf16 %v554
      %v563 = vunpack.c.l.bf16 %v555
      %v564 = vunpack.c.l.bf16 %v556
      %v565 = vunpack.c.l.bf16 %v557
      %v566 = vld [vmem:[%s1] sm:$0x1]
      %v568 = vlaneseq
      %v569 = vshrl.u32 %v568, 7
      %v570 = vsub.s32 0, %v569
      %v571 = vrot.slane %v566, %v570
      %v573 = vmul.f32 %v558, %v571
      %v574 = vmul.f32 %v559, %v571
      %v575 = vmul.f32 %v560, %v571
      %v576 = vmul.f32 %v561, %v571
      %v577 = vmul.f32 %v562, %v571
      %v578 = vmul.f32 %v563, %v571
      %v579 = vmul.f32 %v564, %v571
      %v580 = vmul.f32 %v565, %v571
      %v581 = vld [vmem:[%s2] sm:$0x1]
      %v583 = vlaneseq
      %v584 = vshrl.u32 %v583, 7
      %v585 = vsub.s32 0, %v584
      %v586 = vrot.slane %v581, %v585
      %v588 = vadd.f32 %v573, %v586
      %v589 = vadd.f32 %v574, %v586
      %v590 = vadd.f32 %v575, %v586
      %v591 = vadd.f32 %v576, %v586
      %v592 = vadd.f32 %v577, %v586
      %v593 = vadd.f32 %v578, %v586
      %v594 = vadd.f32 %v579, %v586
      %v595 = vadd.f32 %v580, %v586
      %v596 = vmax.f32 %v588, 0.0
      %v597 = vmax.f32 %v589, 0.0
      %v598 = vmax.f32 %v590, 0.0
      %v599 = vmax.f32 %v591, 0.0
      %v600 = vmax.f32 %v592, 0.0
      %v601 = vmax.f32 %v593, 0.0
      %v602 = vmax.f32 %v594, 0.0
      %v603 = vmax.f32 %v595, 0.0
      %v604 = vpack.c.bf16 %v597, %v596
      %v605 = vpack.c.bf16 %v599, %v598
      %v606 = vpack.c.bf16 %v601, %v600
      %v607 = vpack.c.bf16 %v603, %v602
      %v608 = vld [vmem:[%s3] sm:$0xf]
      %v609 = vld [vmem:[%s3 + $0x4] sm:$0xf]
      %v610 = vld [vmem:[%s3 + $0x8] sm:$0xf]
      %v611 = vld [vmem:[%s3 + $0xc] sm:$0xf]
      %v612 = vld [vmem:[%s3 + $0x10] sm:$0xf]
      %v613 = vld [vmem:[%s3 + $0x14] sm:$0xf]
      %v614 = vld [vmem:[%s3 + $0x18] sm:$0xf]
      %v615 = vld [vmem:[%s3 + $0x1c] sm:$0xf]
      %v616 = vld [vmem:[%s3 + $0x20] sm:$0xf]
      %v617 = vld [vmem:[%s3 + $0x24] sm:$0xf]
      %v618 = vld [vmem:[%s3 + $0x28] sm:$0xf]
      %v619 = vld [vmem:[%s3 + $0x2c] sm:$0xf]
      %v620 = vld [vmem:[%s3 + $0x30] sm:$0xf]
      %v621 = vld [vmem:[%s3 + $0x34] sm:$0xf]
      %v622 = vld [vmem:[%s3 + $0x38] sm:$0xf]
      %v623 = vld [vmem:[%s3 + $0x3c] sm:$0xf]
      %v624 = vld [vmem:[%s4] sm:$0x1]
      %v626 = vlaneseq
      %v627 = vshrl.u32 %v626, 7
      %v628 = vsub.s32 0, %v627
      %v629 = vrot.slane %v624, %v628
      %v647 = vunpack.c.l.b16 %v608
      %v648 = vunpack.c.l.b16 %v609
      %v649 = vunpack.c.l.b16 %v610
      %v650 = vunpack.c.l.b16 %v611
      %v651 = vunpack.c.l.b16 %v612
      %v652 = vunpack.c.l.b16 %v613
      %v653 = vunpack.c.l.b16 %v614
      %v654 = vunpack.c.l.b16 %v615
      %v655 = vunpack.c.l.b16 %v616
      %v656 = vunpack.c.l.b16 %v617
      %v657 = vunpack.c.l.b16 %v618
      %v658 = vunpack.c.l.b16 %v619
      %v659 = vunpack.c.l.b16 %v620
      %v660 = vunpack.c.l.b16 %v621
      %v661 = vunpack.c.l.b16 %v622
      %v662 = vunpack.c.l.b16 %v623
      %v663 = vpack.c.b16 %v648, %v647
      %v664 = vpack.c.b16 %v650, %v649
      %v665 = vpack.c.b16 %v652, %v651
      %v666 = vpack.c.b16 %v654, %v653
      %v667 = vpack.c.b16 %v656, %v655
      %v668 = vpack.c.b16 %v658, %v657
      %v669 = vpack.c.b16 %v660, %v659
      %v670 = vpack.c.b16 %v662, %v661
      %679 = vmatprep.subr.bf16.mxu0 0
      %680 = vmatpush1.bf16.msra.mxu0 %v663
      %681 = vmatprep.subr.bf16.mxu0 0
      %682 = vmatpush1.bf16.msra.mxu0 %v664
      %683 = vmatprep.subr.bf16.mxu0 0
      %684 = vmatpush1.bf16.msra.mxu0 %v665
      %685 = vmatprep.subr.bf16.mxu0 0
      %686 = vmatpush1.bf16.msra.mxu0 %v666
      %687 = vmatprep.subr.bf16.mxu0 0
      %688 = vmatpush1.bf16.msra.mxu0 %v667
      %689 = vmatprep.subr.bf16.mxu0 0
      %690 = vmatpush1.bf16.msra.mxu0 %v668
      %691 = vmatprep.subr.bf16.mxu0 0
      %692 = vmatpush1.bf16.msra.mxu0 %v669
      %693 = vmatprep.subr.bf16.mxu0 0
      %694 = vmatpush1.bf16.msra.mxu0 %v670
      %695 = vmatprep.subr.bf16.mxu0 0
      %696 = vmatpush1.bf16.msra.mxu0 0
      %697 = vmatprep.subr.bf16.mxu0 0
      %698 = vmatpush1.bf16.msra.mxu0 0
      %699 = vmatprep.subr.bf16.mxu0 0
      %700 = vmatpush1.bf16.msra.mxu0 0
      %701 = vmatprep.subr.bf16.mxu0 0
      %702 = vmatpush1.bf16.msra.mxu0 0
      %703 = vmatprep.subr.bf16.mxu0 0
      %704 = vmatpush1.bf16.msra.mxu0 0
      %705 = vmatprep.subr.bf16.mxu0 0
      %706 = vmatpush1.bf16.msra.mxu0 0
      %707 = vmatprep.subr.bf16.mxu0 0
      %708 = vmatpush1.bf16.msra.mxu0 0
      %709 = vmatprep.subr.bf16.mxu0 0
      %710 = vmatpush1.bf16.msra.mxu0 0
      %711 = vmatprep.mubr.bf16.mxu0 0
      %712 = vmatmul.mubr.bf16.gmra.mrb[0].mxu0 %v604
      %v713 = vpop.f32.mrb[0].mxu0
      %v714 = vadd.f32 %v629, %v713
      %v715 = vpop.f32.mrb[0].mxu0
      %v716 = vpop.f32.mrb[0].mxu0
      %v717 = vadd.f32 %v629, %v716
      %v718 = vpop.f32.mrb[0].mxu0
      %719 = vmatprep.mubr.bf16.mxu0 0
      %720 = vmatmul.mubr.bf16.gmra.mrb[0].mxu0 %v605
      %v721 = vpop.f32.mrb[0].mxu0
      %v722 = vadd.f32 %v629, %v721
      %v723 = vpop.f32.mrb[0].mxu0
      %v724 = vpop.f32.mrb[0].mxu0
      %v725 = vadd.f32 %v629, %v724
      %v726 = vpop.f32.mrb[0].mxu0
      %727 = vmatprep.mubr.bf16.mxu0 0
      %728 = vmatmul.mubr.bf16.gmra.mrb[0].mxu0 %v606
      %v729 = vpop.f32.mrb[0].mxu0
      %v730 = vadd.f32 %v629, %v729
      %v731 = vpop.f32.mrb[0].mxu0
      %v732 = vpop.f32.mrb[0].mxu0
      %v733 = vadd.f32 %v629, %v732
      %v734 = vpop.f32.mrb[0].mxu0
      %735 = vmatprep.mubr.bf16.mxu0 0
      %736 = vmatmul.mubr.bf16.gmra.mrb[0].mxu0 %v607
      %v737 = vpop.f32.mrb[0].mxu0
      %v738 = vadd.f32 %v629, %v737
      %v739 = vpop.f32.mrb[0].mxu0
      %v740 = vpop.f32.mrb[0].mxu0
      %v741 = vadd.f32 %v629, %v740
      %v742 = vpop.f32.mrb[0].mxu0
      %743 = vdwg.mxu0
      %v744 = vld [vmem:[%s5] sm:$0x1]
      %v746 = vlaneseq
      %v747 = vshrl.u32 %v746, 7
      %v748 = vsub.s32 0, %v747
      %v749 = vrot.slane %v744, %v748
      %v751 = vmul.f32 %v714, %v749
      %v752 = vmul.f32 %v717, %v749
      %v753 = vmul.f32 %v722, %v749
      %v754 = vmul.f32 %v725, %v749
      %v755 = vmul.f32 %v730, %v749
      %v756 = vmul.f32 %v733, %v749
      %v757 = vmul.f32 %v738, %v749
      %v758 = vmul.f32 %v741, %v749
      %v759 = vld [vmem:[%s6] sm:$0x1]
      %v761 = vlaneseq
      %v762 = vshrl.u32 %v761, 7
      %v763 = vsub.s32 0, %v762
      %v764 = vrot.slane %v759, %v763
      %v766 = vadd.f32 %v751, %v764
      %v767 = vadd.f32 %v752, %v764
      %v768 = vadd.f32 %v753, %v764
      %v769 = vadd.f32 %v754, %v764
      %v770 = vadd.f32 %v755, %v764
      %v771 = vadd.f32 %v756, %v764
      %v772 = vadd.f32 %v757, %v764
      %v773 = vadd.f32 %v758, %v764
      %v774 = vmax.f32 %v766, 0.0
      %v775 = vmax.f32 %v767, 0.0
      %v776 = vmax.f32 %v768, 0.0
      %v777 = vmax.f32 %v769, 0.0
      %v778 = vmax.f32 %v770, 0.0
      %v779 = vmax.f32 %v771, 0.0
      %v780 = vmax.f32 %v772, 0.0
      %v781 = vmax.f32 %v773, 0.0
      %v782 = vpack.c.bf16 %v775, %v774
      %v783 = vpack.c.bf16 %v777, %v776
      %v784 = vpack.c.bf16 %v779, %v778
      %v785 = vpack.c.bf16 %v781, %v780
      %786 = vst [vmem:[#allocation2] sm:$0xff] 0
      %s787 = scalar_lea.vmem [#allocation2], 72
      %788 = vst [vmem:[%s787] sm:$0xff] 0
      %vm789 = vcmask 1040384
      %vm790 = vsmask.f32 256
      %vm791 = vmand %vm789, %vm790
      %v792 = vld [vmem:[#allocation2] sm:$0x1]
      %v793 = vsel %vm791, 0, %v792
      %794 = vst [vmem:[#allocation2] sm:$0x1] %v793
      %v795 = vld [vmem:[#allocation2 + $0x8] sm:$0x1]
      %v796 = vsel %vm791, 0, %v795
      %797 = vst [vmem:[#allocation2 + $0x8] sm:$0x1] %v796
      %v798 = vld [vmem:[#allocation2 + $0x10] sm:$0x1]
      %v799 = vsel %vm791, 0, %v798
      %800 = vst [vmem:[#allocation2 + $0x10] sm:$0x1] %v799
      %v801 = vld [vmem:[#allocation2 + $0x18] sm:$0x1]
      %v802 = vsel %vm791, 0, %v801
      %803 = vst [vmem:[#allocation2 + $0x18] sm:$0x1] %v802
      %v804 = vld [vmem:[#allocation2 + $0x20] sm:$0x1]
      %v805 = vsel %vm791, 0, %v804
      %806 = vst [vmem:[#allocation2 + $0x20] sm:$0x1] %v805
      %v807 = vld [vmem:[#allocation2 + $0x28] sm:$0x1]
      %v808 = vsel %vm791, 0, %v807
      %809 = vst [vmem:[#allocation2 + $0x28] sm:$0x1] %v808
      %v810 = vld [vmem:[#allocation2 + $0x30] sm:$0x1]
      %v811 = vsel %vm791, 0, %v810
      %812 = vst [vmem:[#allocation2 + $0x30] sm:$0x1] %v811
      %v813 = vld [vmem:[#allocation2 + $0x38] sm:$0x1]
      %v814 = vsel %vm791, 0, %v813
      %815 = vst [vmem:[#allocation2 + $0x38] sm:$0x1] %v814
      %v816 = vld [vmem:[#allocation2 + $0x40] sm:$0x1]
      %v817 = vsel %vm791, 0, %v816
      %818 = vst [vmem:[#allocation2 + $0x40] sm:$0x1] %v817
      %v819 = vld [vmem:[#allocation2 + $0x48] sm:$0x1]
      %v820 = vsel %vm791, 0, %v819
      %821 = vst [vmem:[#allocation2 + $0x48] sm:$0x1] %v820
      %vm822 = vcmask 1044484
      %vm823 = vsmask.f32 7954
      %vm824 = vmand %vm822, %vm823
      %v825 = vld [vmem:[#allocation2] sm:$0x10]
      %v826 = vsel %vm824, 0, %v825
      %827 = vst [vmem:[#allocation2] sm:$0x10] %v826
      %v828 = vld [vmem:[#allocation2 + $0x8] sm:$0x10]
      %v829 = vsel %vm824, 0, %v828
      %830 = vst [vmem:[#allocation2 + $0x8] sm:$0x10] %v829
      %v831 = vld [vmem:[#allocation2 + $0x10] sm:$0x10]
      %v832 = vsel %vm824, 0, %v831
      %833 = vst [vmem:[#allocation2 + $0x10] sm:$0x10] %v832
      %v834 = vld [vmem:[#allocation2 + $0x18] sm:$0x10]
      %v835 = vsel %vm824, 0, %v834
      %836 = vst [vmem:[#allocation2 + $0x18] sm:$0x10] %v835
      %v837 = vld [vmem:[#allocation2 + $0x20] sm:$0x10]
      %v838 = vsel %vm824, 0, %v837
      %839 = vst [vmem:[#allocation2 + $0x20] sm:$0x10] %v838
      %v840 = vld [vmem:[#allocation2 + $0x28] sm:$0x10]
      %v841 = vsel %vm824, 0, %v840
      %842 = vst [vmem:[#allocation2 + $0x28] sm:$0x10] %v841
      %v843 = vld [vmem:[#allocation2 + $0x30] sm:$0x10]
      %v844 = vsel %vm824, 0, %v843
      %845 = vst [vmem:[#allocation2 + $0x30] sm:$0x10] %v844
      %v846 = vld [vmem:[#allocation2 + $0x38] sm:$0x10]
      %v847 = vsel %vm824, 0, %v846
      %848 = vst [vmem:[#allocation2 + $0x38] sm:$0x10] %v847
      %v849 = vld [vmem:[#allocation2 + $0x40] sm:$0x10]
      %v850 = vsel %vm824, 0, %v849
      %851 = vst [vmem:[#allocation2 + $0x40] sm:$0x10] %v850
      %v852 = vld [vmem:[#allocation2 + $0x48] sm:$0x10]
      %v853 = vsel %vm824, 0, %v852
      %854 = vst [vmem:[#allocation2 + $0x48] sm:$0x10] %v853
      %v859 = vunpack.c.l.b16 %v782
      %v860 = vunpack.c.h.b16 %v782
      %v861 = vunpack.c.l.b16 %v783
      %v862 = vunpack.c.h.b16 %v783
      %v863 = vunpack.c.l.b16 %v784
      %v864 = vunpack.c.h.b16 %v784
      %v865 = vunpack.c.l.b16 %v785
      %v866 = vunpack.c.h.b16 %v785
      %v867 = vpack.c.b16 %v859, %v859
      %v868 = vpack.c.b16 %v860, %v860
      %v869 = vpack.c.b16 %v861, %v861
      %v870 = vpack.c.b16 %v862, %v862
      %v871 = vpack.c.b16 %v863, %v863
      %v872 = vpack.c.b16 %v864, %v864
      %v873 = vpack.c.b16 %v865, %v865
      %v874 = vpack.c.b16 %v866, %v866
      %v876 = vshrl.u32 %v867, 16
      %v878 = vrot.slane %v876, 7
      %v879 = vshll.u32 %v867, 16
      %v881 = vor.u32 %v878, %v879
      %v883 = vshrl.u32 %v868, 16
      %v885 = vrot.slane %v883, 7
      %v886 = vshll.u32 %v868, 16
      %v888 = vor.u32 %v885, %v886
      %v890 = vshrl.u32 %v869, 16
      %v892 = vrot.slane %v890, 7
      %v893 = vshll.u32 %v869, 16
      %v895 = vor.u32 %v892, %v893
      %v897 = vshrl.u32 %v870, 16
      %v899 = vrot.slane %v897, 7
      %v900 = vshll.u32 %v870, 16
      %v902 = vor.u32 %v899, %v900
      %v904 = vshrl.u32 %v871, 16
      %v906 = vrot.slane %v904, 7
      %v907 = vshll.u32 %v871, 16
      %v909 = vor.u32 %v906, %v907
      %v911 = vshrl.u32 %v872, 16
      %v913 = vrot.slane %v911, 7
      %v914 = vshll.u32 %v872, 16
      %v916 = vor.u32 %v913, %v914
      %v918 = vshrl.u32 %v873, 16
      %v920 = vrot.slane %v918, 7
      %v921 = vshll.u32 %v873, 16
      %v923 = vor.u32 %v920, %v921
      %v925 = vshrl.u32 %v874, 16
      %v927 = vrot.slane %v925, 7
      %v928 = vshll.u32 %v874, 16
      %v930 = vor.u32 %v927, %v928
      %s939 = scalar_lea.vmem [#allocation2], 8
      %vm940 = vcmask 1044480
      %vm941 = vsmask.f32 4354
      %vm942 = vmand %vm940, %vm941
      %v943 = vld [vmem:[%s939] sm:$0x1f]
      %v944 = vsel %vm942, %v881, %v943
      %945 = vst [vmem:[%s939] sm:$0x1f] %v944
      %v946 = vld [vmem:[%s939 + $0x8] sm:$0x1f]
      %v947 = vsel %vm942, %v888, %v946
      %948 = vst [vmem:[%s939 + $0x8] sm:$0x1f] %v947
      %v949 = vld [vmem:[%s939 + $0x10] sm:$0x1f]
      %v950 = vsel %vm942, %v895, %v949
      %951 = vst [vmem:[%s939 + $0x10] sm:$0x1f] %v950
      %v952 = vld [vmem:[%s939 + $0x18] sm:$0x1f]
      %v953 = vsel %vm942, %v902, %v952
      %954 = vst [vmem:[%s939 + $0x18] sm:$0x1f] %v953
      %v955 = vld [vmem:[%s939 + $0x20] sm:$0x1f]
      %v956 = vsel %vm942, %v909, %v955
      %957 = vst [vmem:[%s939 + $0x20] sm:$0x1f] %v956
      %v958 = vld [vmem:[%s939 + $0x28] sm:$0x1f]
      %v959 = vsel %vm942, %v916, %v958
      %960 = vst [vmem:[%s939 + $0x28] sm:$0x1f] %v959
      %v961 = vld [vmem:[%s939 + $0x30] sm:$0x1f]
      %v962 = vsel %vm942, %v923, %v961
      %963 = vst [vmem:[%s939 + $0x30] sm:$0x1f] %v962
      %v964 = vld [vmem:[%s939 + $0x38] sm:$0x1f]
      %v965 = vsel %vm942, %v930, %v964
      %966 = vst [vmem:[%s939 + $0x38] sm:$0x1f] %v965
      %v967 = vld [vmem:[#allocation2] sm:$0xf]
      %v968 = vld [vmem:[#allocation2 + $0x8] sm:$0xf]
      %v969 = vld [vmem:[#allocation2 + $0x10] sm:$0xf]
      %v970 = vld [vmem:[#allocation2 + $0x18] sm:$0xf]
      %v971 = vld [vmem:[#allocation2 + $0x20] sm:$0xf]
      %v972 = vld [vmem:[#allocation2 + $0x28] sm:$0xf]
      %v973 = vld [vmem:[#allocation2 + $0x30] sm:$0xf]
      %v974 = vld [vmem:[#allocation2 + $0x38] sm:$0xf]
      %v975 = vld [vmem:[#allocation2 + $0x40] sm:$0xf]
      %v976 = vld [vmem:[#allocation2 + $0x48] sm:$0xf]
      %v977 = vld [vmem:[%s7] sm:$0xf]
      %v978 = vld [vmem:[%s7 + $0x4] sm:$0xf]
      %v979 = vld [vmem:[%s7 + $0x8] sm:$0xf]
      %v980 = vld [vmem:[%s7 + $0xc] sm:$0xf]
      %v981 = vld [vmem:[%s7 + $0x10] sm:$0xf]
      %v982 = vld [vmem:[%s7 + $0x14] sm:$0xf]
      %v983 = vld [vmem:[%s7 + $0x18] sm:$0xf]
      %v984 = vld [vmem:[%s7 + $0x1c] sm:$0xf]
      %v985 = vld [vmem:[%s7 + $0x20] sm:$0xf]
      %v986 = vld [vmem:[%s7 + $0x24] sm:$0xf]
      %v987 = vld [vmem:[%s7 + $0x28] sm:$0xf]
      %v988 = vld [vmem:[%s7 + $0x2c] sm:$0xf]
      %v989 = vld [vmem:[%s7 + $0x30] sm:$0xf]
      %v990 = vld [vmem:[%s7 + $0x34] sm:$0xf]
      %v991 = vld [vmem:[%s7 + $0x38] sm:$0xf]
      %v992 = vld [vmem:[%s7 + $0x3c] sm:$0xf]
      %s993 = scalar_lea.vmem %s7, 192
      %v994 = vld [vmem:[%s993] sm:$0xf]
      %v995 = vld [vmem:[%s993 + $0x4] sm:$0xf]
      %v996 = vld [vmem:[%s993 + $0x8] sm:$0xf]
      %v997 = vld [vmem:[%s993 + $0xc] sm:$0xf]
      %v998 = vld [vmem:[%s993 + $0x10] sm:$0xf]
      %v999 = vld [vmem:[%s993 + $0x14] sm:$0xf]
      %v1000 = vld [vmem:[%s993 + $0x18] sm:$0xf]
      %v1001 = vld [vmem:[%s993 + $0x1c] sm:$0xf]
      %v1002 = vld [vmem:[%s993 + $0x20] sm:$0xf]
      %v1003 = vld [vmem:[%s993 + $0x24] sm:$0xf]
      %v1004 = vld [vmem:[%s993 + $0x28] sm:$0xf]
      %v1005 = vld [vmem:[%s993 + $0x2c] sm:$0xf]
      %v1006 = vld [vmem:[%s993 + $0x30] sm:$0xf]
      %v1007 = vld [vmem:[%s993 + $0x34] sm:$0xf]
      %v1008 = vld [vmem:[%s993 + $0x38] sm:$0xf]
      %v1009 = vld [vmem:[%s993 + $0x3c] sm:$0xf]
      %v1018 = vunpack.c.l.b16 %v968
      %v1019 = vunpack.c.l.b16 %v969
      %v1020 = vunpack.c.l.b16 %v970
      %v1021 = vunpack.c.l.b16 %v971
      %v1022 = vunpack.c.l.b16 %v972
      %v1023 = vunpack.c.l.b16 %v973
      %v1024 = vunpack.c.l.b16 %v974
      %v1025 = vunpack.c.l.b16 %v975
      %v1026 = vpack.c.b16 %v1019, %v1018
      %v1027 = vpack.c.b16 %v1021, %v1020
      %v1028 = vpack.c.b16 %v1023, %v1022
      %v1029 = vpack.c.b16 %v1025, %v1024
      %v1050 = vunpack.c.l.b16 %v994
      %v1051 = vunpack.c.l.b16 %v995
      %v1052 = vunpack.c.l.b16 %v996
      %v1053 = vunpack.c.l.b16 %v997
      %v1054 = vunpack.c.l.b16 %v998
      %v1055 = vunpack.c.l.b16 %v999
      %v1056 = vunpack.c.l.b16 %v1000
      %v1057 = vunpack.c.l.b16 %v1001
      %v1058 = vunpack.c.l.b16 %v1002
      %v1059 = vunpack.c.l.b16 %v1003
      %v1060 = vunpack.c.l.b16 %v1004
      %v1061 = vunpack.c.l.b16 %v1005
      %v1062 = vunpack.c.l.b16 %v1006
      %v1063 = vunpack.c.l.b16 %v1007
      %v1064 = vunpack.c.l.b16 %v1008
      %v1065 = vunpack.c.l.b16 %v1009
      %v1066 = vpack.c.b16 %v1051, %v1050
      %v1067 = vpack.c.b16 %v1053, %v1052
      %v1068 = vpack.c.b16 %v1055, %v1054
      %v1069 = vpack.c.b16 %v1057, %v1056
      %v1070 = vpack.c.b16 %v1059, %v1058
      %v1071 = vpack.c.b16 %v1061, %v1060
      %v1072 = vpack.c.b16 %v1063, %v1062
      %v1073 = vpack.c.b16 %v1065, %v1064
      %1082 = vmatprep.subr.bf16.mxu0 0
      %1083 = vmatpush1.bf16.msra.mxu0 %v1066
      %1084 = vmatprep.subr.bf16.mxu0 0
      %1085 = vmatpush1.bf16.msra.mxu0 %v1067
      %1086 = vmatprep.subr.bf16.mxu0 0
      %1087 = vmatpush1.bf16.msra.mxu0 %v1068
      %1088 = vmatprep.subr.bf16.mxu0 0
      %1089 = vmatpush1.bf16.msra.mxu0 %v1069
      %1090 = vmatprep.subr.bf16.mxu0 0
      %1091 = vmatpush1.bf16.msra.mxu0 %v1070
      %1092 = vmatprep.subr.bf16.mxu0 0
      %1093 = vmatpush1.bf16.msra.mxu0 %v1071
      %1094 = vmatprep.subr.bf16.mxu0 0
      %1095 = vmatpush1.bf16.msra.mxu0 %v1072
      %1096 = vmatprep.subr.bf16.mxu0 0
      %1097 = vmatpush1.bf16.msra.mxu0 %v1073
      %1098 = vmatprep.subr.bf16.mxu0 0
      %1099 = vmatpush1.bf16.msra.mxu0 0
      %1100 = vmatprep.subr.bf16.mxu0 0
      %1101 = vmatpush1.bf16.msra.mxu0 0
      %1102 = vmatprep.subr.bf16.mxu0 0
      %1103 = vmatpush1.bf16.msra.mxu0 0
      %1104 = vmatprep.subr.bf16.mxu0 0
      %1105 = vmatpush1.bf16.msra.mxu0 0
      %1106 = vmatprep.subr.bf16.mxu0 0
      %1107 = vmatpush1.bf16.msra.mxu0 0
      %1108 = vmatprep.subr.bf16.mxu0 0
      %1109 = vmatpush1.bf16.msra.mxu0 0
      %1110 = vmatprep.subr.bf16.mxu0 0
      %1111 = vmatpush1.bf16.msra.mxu0 0
      %1112 = vmatprep.subr.bf16.mxu0 0
      %1113 = vmatpush1.bf16.msra.mxu0 0
      %1114 = vmatprep.mubr.bf16.mxu0 0
      %1115 = vmatmul.mubr.bf16.gmra.mrb[0].mxu0 %v1026
      %v1116 = vpop.f32.mrb[0].mxu0
      %v1117 = vadd.f32 0.0, %v1116
      %v1118 = vpop.f32.mrb[0].mxu0
      %v1119 = vpop.f32.mrb[0].mxu0
      %v1120 = vadd.f32 0.0, %v1119
      %v1121 = vpop.f32.mrb[0].mxu0
      %1122 = vmatprep.mubr.bf16.mxu0 0
      %1123 = vmatmul.mubr.bf16.gmra.mrb[0].mxu0 %v1027
      %v1124 = vpop.f32.mrb[0].mxu0
      %v1125 = vadd.f32 0.0, %v1124
      %v1126 = vpop.f32.mrb[0].mxu0
      %v1127 = vpop.f32.mrb[0].mxu0
      %v1128 = vadd.f32 0.0, %v1127
      %v1129 = vpop.f32.mrb[0].mxu0
      %1130 = vmatprep.mubr.bf16.mxu0 0
      %1131 = vmatmul.mubr.bf16.gmra.mrb[0].mxu0 %v1028
      %v1132 = vpop.f32.mrb[0].mxu0
      %v1133 = vadd.f32 0.0, %v1132
      %v1134 = vpop.f32.mrb[0].mxu0
      %v1135 = vpop.f32.mrb[0].mxu0
      %v1136 = vadd.f32 0.0, %v1135
      %v1137 = vpop.f32.mrb[0].mxu0
      %1138 = vmatprep.mubr.bf16.mxu0 0
      %1139 = vmatmul.mubr.bf16.gmra.mrb[0].mxu0 %v1029
      %v1140 = vpop.f32.mrb[0].mxu0
      %v1141 = vadd.f32 0.0, %v1140
      %v1142 = vpop.f32.mrb[0].mxu0
      %v1143 = vpop.f32.mrb[0].mxu0
      %v1144 = vadd.f32 0.0, %v1143
      %v1145 = vpop.f32.mrb[0].mxu0
      %1146 = vdwg.mxu0
      %v1148 = vunpack.c.l.b16 %v967
      %v1149 = vpack.c.b16 %v1018, %v1148
      %v1150 = vpack.c.b16 %v1020, %v1019
      %v1151 = vpack.c.b16 %v1022, %v1021
      %v1152 = vpack.c.b16 %v1024, %v1023
      %v1173 = vunpack.c.l.b16 %v977
      %v1174 = vunpack.c.l.b16 %v978
      %v1175 = vunpack.c.l.b16 %v979
      %v1176 = vunpack.c.l.b16 %v980
      %v1177 = vunpack.c.l.b16 %v981
      %v1178 = vunpack.c.l.b16 %v982
      %v1179 = vunpack.c.l.b16 %v983
      %v1180 = vunpack.c.l.b16 %v984
      %v1181 = vunpack.c.l.b16 %v985
      %v1182 = vunpack.c.l.b16 %v986
      %v1183 = vunpack.c.l.b16 %v987
      %v1184 = vunpack.c.l.b16 %v988
      %v1185 = vunpack.c.l.b16 %v989
      %v1186 = vunpack.c.l.b16 %v990
      %v1187 = vunpack.c.l.b16 %v991
      %v1188 = vunpack.c.l.b16 %v992
      %v1189 = vpack.c.b16 %v1174, %v1173
      %v1190 = vpack.c.b16 %v1176, %v1175
      %v1191 = vpack.c.b16 %v1178, %v1177
      %v1192 = vpack.c.b16 %v1180, %v1179
      %v1193 = vpack.c.b16 %v1182, %v1181
      %v1194 = vpack.c.b16 %v1184, %v1183
      %v1195 = vpack.c.b16 %v1186, %v1185
      %v1196 = vpack.c.b16 %v1188, %v1187
      %1205 = vmatprep.subr.bf16.mxu0 0
      %1206 = vmatpush1.bf16.msra.mxu0 %v1189
      %1207 = vmatprep.subr.bf16.mxu0 0
      %1208 = vmatpush1.bf16.msra.mxu0 %v1190
      %1209 = vmatprep.subr.bf16.mxu0 0
      %1210 = vmatpush1.bf16.msra.mxu0 %v1191
      %1211 = vmatprep.subr.bf16.mxu0 0
      %1212 = vmatpush1.bf16.msra.mxu0 %v1192
      %1213 = vmatprep.subr.bf16.mxu0 0
      %1214 = vmatpush1.bf16.msra.mxu0 %v1193
      %1215 = vmatprep.subr.bf16.mxu0 0
      %1216 = vmatpush1.bf16.msra.mxu0 %v1194
      %1217 = vmatprep.subr.bf16.mxu0 0
      %1218 = vmatpush1.bf16.msra.mxu0 %v1195
      %1219 = vmatprep.subr.bf16.mxu0 0
      %1220 = vmatpush1.bf16.msra.mxu0 %v1196
      %1221 = vmatprep.subr.bf16.mxu0 0
      %1222 = vmatpush1.bf16.msra.mxu0 0
      %1223 = vmatprep.subr.bf16.mxu0 0
      %1224 = vmatpush1.bf16.msra.mxu0 0
      %1225 = vmatprep.subr.bf16.mxu0 0
      %1226 = vmatpush1.bf16.msra.mxu0 0
      %1227 = vmatprep.subr.bf16.mxu0 0
      %1228 = vmatpush1.bf16.msra.mxu0 0
      %1229 = vmatprep.subr.bf16.mxu0 0
      %1230 = vmatpush1.bf16.msra.mxu0 0
      %1231 = vmatprep.subr.bf16.mxu0 0
      %1232 = vmatpush1.bf16.msra.mxu0 0
      %1233 = vmatprep.subr.bf16.mxu0 0
      %1234 = vmatpush1.bf16.msra.mxu0 0
      %1235 = vmatprep.subr.bf16.mxu0 0
      %1236 = vmatpush1.bf16.msra.mxu0 0
      %1237 = vmatprep.mubr.bf16.mxu0 0
      %1238 = vmatmul.mubr.bf16.gmra.mrb[0].mxu0 %v1149
      %v1239 = vpop.f32.mrb[0].mxu0
      %v1240 = vadd.f32 %v1117, %v1239
      %v1241 = vpop.f32.mrb[0].mxu0
      %v1242 = vpop.f32.mrb[0].mxu0
      %v1243 = vadd.f32 %v1120, %v1242
      %v1244 = vpop.f32.mrb[0].mxu0
      %1245 = vmatprep.mubr.bf16.mxu0 0
      %1246 = vmatmul.mubr.bf16.gmra.mrb[0].mxu0 %v1150
      %v1247 = vpop.f32.mrb[0].mxu0
      %v1248 = vadd.f32 %v1125, %v1247
      %v1249 = vpop.f32.mrb[0].mxu0
      %v1250 = vpop.f32.mrb[0].mxu0
      %v1251 = vadd.f32 %v1128, %v1250
      %v1252 = vpop.f32.mrb[0].mxu0
      %1253 = vmatprep.mubr.bf16.mxu0 0
      %1254 = vmatmul.mubr.bf16.gmra.mrb[0].mxu0 %v1151
      %v1255 = vpop.f32.mrb[0].mxu0
      %v1256 = vadd.f32 %v1133, %v1255
      %v1257 = vpop.f32.mrb[0].mxu0
      %v1258 = vpop.f32.mrb[0].mxu0
      %v1259 = vadd.f32 %v1136, %v1258
      %v1260 = vpop.f32.mrb[0].mxu0
      %1261 = vmatprep.mubr.bf16.mxu0 0
      %1262 = vmatmul.mubr.bf16.gmra.mrb[0].mxu0 %v1152
      %v1263 = vpop.f32.mrb[0].mxu0
      %v1264 = vadd.f32 %v1141, %v1263
      %v1265 = vpop.f32.mrb[0].mxu0
      %v1266 = vpop.f32.mrb[0].mxu0
      %v1267 = vadd.f32 %v1144, %v1266
      %v1268 = vpop.f32.mrb[0].mxu0
      %1269 = vdwg.mxu0
      %s1270 = scalar_lea.vmem %s7, 384
      %v1271 = vld [vmem:[%s1270] sm:$0xf]
      %v1272 = vld [vmem:[%s1270 + $0x4] sm:$0xf]
      %v1273 = vld [vmem:[%s1270 + $0x8] sm:$0xf]
      %v1274 = vld [vmem:[%s1270 + $0xc] sm:$0xf]
      %v1275 = vld [vmem:[%s1270 + $0x10] sm:$0xf]
      %v1276 = vld [vmem:[%s1270 + $0x14] sm:$0xf]
      %v1277 = vld [vmem:[%s1270 + $0x18] sm:$0xf]
      %v1278 = vld [vmem:[%s1270 + $0x1c] sm:$0xf]
      %v1279 = vld [vmem:[%s1270 + $0x20] sm:$0xf]
      %v1280 = vld [vmem:[%s1270 + $0x24] sm:$0xf]
      %v1281 = vld [vmem:[%s1270 + $0x28] sm:$0xf]
      %v1282 = vld [vmem:[%s1270 + $0x2c] sm:$0xf]
      %v1283 = vld [vmem:[%s1270 + $0x30] sm:$0xf]
      %v1284 = vld [vmem:[%s1270 + $0x34] sm:$0xf]
      %v1285 = vld [vmem:[%s1270 + $0x38] sm:$0xf]
      %v1286 = vld [vmem:[%s1270 + $0x3c] sm:$0xf]
      %v1288 = vunpack.c.l.b16 %v976
      %v1289 = vpack.c.b16 %v1288, %v1025
      %v1307 = vunpack.c.l.b16 %v1271
      %v1308 = vunpack.c.l.b16 %v1272
      %v1309 = vunpack.c.l.b16 %v1273
      %v1310 = vunpack.c.l.b16 %v1274
      %v1311 = vunpack.c.l.b16 %v1275
      %v1312 = vunpack.c.l.b16 %v1276
      %v1313 = vunpack.c.l.b16 %v1277
      %v1314 = vunpack.c.l.b16 %v1278
      %v1315 = vunpack.c.l.b16 %v1279
      %v1316 = vunpack.c.l.b16 %v1280
      %v1317 = vunpack.c.l.b16 %v1281
      %v1318 = vunpack.c.l.b16 %v1282
      %v1319 = vunpack.c.l.b16 %v1283
      %v1320 = vunpack.c.l.b16 %v1284
      %v1321 = vunpack.c.l.b16 %v1285
      %v1322 = vunpack.c.l.b16 %v1286
      %v1323 = vpack.c.b16 %v1308, %v1307
      %v1324 = vpack.c.b16 %v1310, %v1309
      %v1325 = vpack.c.b16 %v1312, %v1311
      %v1326 = vpack.c.b16 %v1314, %v1313
      %v1327 = vpack.c.b16 %v1316, %v1315
      %v1328 = vpack.c.b16 %v1318, %v1317
      %v1329 = vpack.c.b16 %v1320, %v1319
      %v1330 = vpack.c.b16 %v1322, %v1321
      %1339 = vmatprep.subr.bf16.mxu0 0
      %1340 = vmatpush1.bf16.msra.mxu0 %v1323
      %1341 = vmatprep.subr.bf16.mxu0 0
      %1342 = vmatpush1.bf16.msra.mxu0 %v1324
      %1343 = vmatprep.subr.bf16.mxu0 0
      %1344 = vmatpush1.bf16.msra.mxu0 %v1325
      %1345 = vmatprep.subr.bf16.mxu0 0
      %1346 = vmatpush1.bf16.msra.mxu0 %v1326
      %1347 = vmatprep.subr.bf16.mxu0 0
      %1348 = vmatpush1.bf16.msra.mxu0 %v1327
      %1349 = vmatprep.subr.bf16.mxu0 0
      %1350 = vmatpush1.bf16.msra.mxu0 %v1328
      %1351 = vmatprep.subr.bf16.mxu0 0
      %1352 = vmatpush1.bf16.msra.mxu0 %v1329
      %1353 = vmatprep.subr.bf16.mxu0 0
      %1354 = vmatpush1.bf16.msra.mxu0 %v1330
      %1355 = vmatprep.subr.bf16.mxu0 0
      %1356 = vmatpush1.bf16.msra.mxu0 0
      %1357 = vmatprep.subr.bf16.mxu0 0
      %1358 = vmatpush1.bf16.msra.mxu0 0
      %1359 = vmatprep.subr.bf16.mxu0 0
      %1360 = vmatpush1.bf16.msra.mxu0 0
      %1361 = vmatprep.subr.bf16.mxu0 0
      %1362 = vmatpush1.bf16.msra.mxu0 0
      %1363 = vmatprep.subr.bf16.mxu0 0
      %1364 = vmatpush1.bf16.msra.mxu0 0
      %1365 = vmatprep.subr.bf16.mxu0 0
      %1366 = vmatpush1.bf16.msra.mxu0 0
      %1367 = vmatprep.subr.bf16.mxu0 0
      %1368 = vmatpush1.bf16.msra.mxu0 0
      %1369 = vmatprep.subr.bf16.mxu0 0
      %1370 = vmatpush1.bf16.msra.mxu0 0
      %1371 = vmatprep.mubr.bf16.mxu0 0
      %1372 = vmatmul.mubr.bf16.gmra.mrb[0].mxu0 %v1150
      %v1373 = vpop.f32.mrb[0].mxu0
      %v1374 = vadd.f32 0.0, %v1373
      %v1375 = vpop.f32.mrb[0].mxu0
      %v1376 = vpop.f32.mrb[0].mxu0
      %v1377 = vadd.f32 0.0, %v1376
      %v1378 = vpop.f32.mrb[0].mxu0
      %1379 = vmatprep.mubr.bf16.mxu0 0
      %1380 = vmatmul.mubr.bf16.gmra.mrb[0].mxu0 %v1151
      %v1381 = vpop.f32.mrb[0].mxu0
      %v1382 = vadd.f32 0.0, %v1381
      %v1383 = vpop.f32.mrb[0].mxu0
      %v1384 = vpop.f32.mrb[0].mxu0
      %v1385 = vadd.f32 0.0, %v1384
      %v1386 = vpop.f32.mrb[0].mxu0
      %1387 = vmatprep.mubr.bf16.mxu0 0
      %1388 = vmatmul.mubr.bf16.gmra.mrb[0].mxu0 %v1152
      %v1389 = vpop.f32.mrb[0].mxu0
      %v1390 = vadd.f32 0.0, %v1389
      %v1391 = vpop.f32.mrb[0].mxu0
      %v1392 = vpop.f32.mrb[0].mxu0
      %v1393 = vadd.f32 0.0, %v1392
      %v1394 = vpop.f32.mrb[0].mxu0
      %1395 = vmatprep.mubr.bf16.mxu0 0
      %1396 = vmatmul.mubr.bf16.gmra.mrb[0].mxu0 %v1289
      %v1397 = vpop.f32.mrb[0].mxu0
      %v1398 = vadd.f32 0.0, %v1397
      %v1399 = vpop.f32.mrb[0].mxu0
      %v1400 = vpop.f32.mrb[0].mxu0
      %v1401 = vadd.f32 0.0, %v1400
      %v1402 = vpop.f32.mrb[0].mxu0
      %1403 = vdwg.mxu0
      %v1404 = vadd.f32 %v1240, %v1374
      %v1405 = vadd.f32 %v1243, %v1377
      %v1406 = vadd.f32 %v1248, %v1382
      %v1407 = vadd.f32 %v1251, %v1385
      %v1408 = vadd.f32 %v1256, %v1390
      %v1409 = vadd.f32 %v1259, %v1393
      %v1410 = vadd.f32 %v1264, %v1398
      %v1411 = vadd.f32 %v1267, %v1401
      %v1412 = vld [vmem:[#allocation2] sm:$0x1f]
      %v1413 = vld [vmem:[#allocation2 + $0x8] sm:$0x1f]
      %v1414 = vld [vmem:[#allocation2 + $0x10] sm:$0x1f]
      %v1415 = vld [vmem:[#allocation2 + $0x18] sm:$0x1f]
      %v1416 = vld [vmem:[#allocation2 + $0x20] sm:$0x1f]
      %v1417 = vld [vmem:[#allocation2 + $0x28] sm:$0x1f]
      %v1418 = vld [vmem:[#allocation2 + $0x30] sm:$0x1f]
      %v1419 = vld [vmem:[#allocation2 + $0x38] sm:$0x1f]
      %v1420 = vld [vmem:[#allocation2 + $0x40] sm:$0x1f]
      %v1421 = vld [vmem:[#allocation2 + $0x48] sm:$0x1f]
      %v1432 = vunpack.c.l.b16 %v1412
      %v1433 = vunpack.c.h.b16 %v1412
      %v1434 = vunpack.c.l.b16 %v1413
      %v1435 = vunpack.c.h.b16 %v1413
      %v1436 = vunpack.c.l.b16 %v1414
      %v1437 = vunpack.c.h.b16 %v1414
      %v1438 = vunpack.c.l.b16 %v1415
      %v1439 = vunpack.c.h.b16 %v1415
      %v1440 = vunpack.c.l.b16 %v1416
      %v1441 = vunpack.c.h.b16 %v1416
      %v1442 = vunpack.c.l.b16 %v1417
      %v1443 = vunpack.c.h.b16 %v1417
      %v1444 = vunpack.c.l.b16 %v1418
      %v1445 = vunpack.c.h.b16 %v1418
      %v1446 = vunpack.c.l.b16 %v1419
      %v1447 = vunpack.c.h.b16 %v1419
      %v1448 = vunpack.c.l.b16 %v1420
      %v1449 = vunpack.c.h.b16 %v1420
      %v1450 = vunpack.c.l.b16 %v1421
      %v1451 = vunpack.c.h.b16 %v1421
      %v1452 = vpack.c.b16 %v1432, %v1432
      %v1453 = vpack.c.b16 %v1433, %v1433
      %v1454 = vpack.c.b16 %v1434, %v1434
      %v1455 = vpack.c.b16 %v1435, %v1435
      %v1456 = vpack.c.b16 %v1436, %v1436
      %v1457 = vpack.c.b16 %v1437, %v1437
      %v1458 = vpack.c.b16 %v1438, %v1438
      %v1459 = vpack.c.b16 %v1439, %v1439
      %v1460 = vpack.c.b16 %v1440, %v1440
      %v1461 = vpack.c.b16 %v1441, %v1441
      %v1462 = vpack.c.b16 %v1442, %v1442
      %v1463 = vpack.c.b16 %v1443, %v1443
      %v1464 = vpack.c.b16 %v1444, %v1444
      %v1465 = vpack.c.b16 %v1445, %v1445
      %v1466 = vpack.c.b16 %v1446, %v1446
      %v1467 = vpack.c.b16 %v1447, %v1447
      %v1468 = vpack.c.b16 %v1448, %v1448
      %v1469 = vpack.c.b16 %v1449, %v1449
      %v1470 = vpack.c.b16 %v1450, %v1450
      %v1471 = vpack.c.b16 %v1451, %v1451
      %vm1472 = vsmask.f32 3328
      %vm1473 = vsmask.f32 7440
      %vm1474 = vmor %vm1472, %vm1473
      %v1476 = vshrl.u32 %v1452, 16
      %v1478 = vrot.slane %v1476, 4
      %v1479 = vshll.u32 %v1452, 16
      %v1481 = vrot.slane %v1479, 5
      %v1482 = vor.u32 %v1478, %v1481
      %v1483 = vrot.slane %v1482, 4
      %v1485 = vshll.u32 %v1453, 16
      %v1487 = vrot.slane %v1485, 5
      %v1488 = vsel %vm1474, %v1483, %v1487
      %v1490 = vshrl.u32 %v1454, 16
      %v1492 = vrot.slane %v1490, 4
      %v1493 = vshll.u32 %v1454, 16
      %v1495 = vrot.slane %v1493, 5
      %v1496 = vor.u32 %v1492, %v1495
      %v1497 = vrot.slane %v1496, 4
      %v1499 = vshll.u32 %v1455, 16
      %v1501 = vrot.slane %v1499, 5
      %v1502 = vsel %vm1474, %v1497, %v1501
      %v1504 = vshrl.u32 %v1456, 16
      %v1506 = vrot.slane %v1504, 4
      %v1507 = vshll.u32 %v1456, 16
      %v1509 = vrot.slane %v1507, 5
      %v1510 = vor.u32 %v1506, %v1509
      %v1511 = vrot.slane %v1510, 4
      %v1513 = vshll.u32 %v1457, 16
      %v1515 = vrot.slane %v1513, 5
      %v1516 = vsel %vm1474, %v1511, %v1515
      %v1518 = vshrl.u32 %v1458, 16
      %v1520 = vrot.slane %v1518, 4
      %v1521 = vshll.u32 %v1458, 16
      %v1523 = vrot.slane %v1521, 5
      %v1524 = vor.u32 %v1520, %v1523
      %v1525 = vrot.slane %v1524, 4
      %v1527 = vshll.u32 %v1459, 16
      %v1529 = vrot.slane %v1527, 5
      %v1530 = vsel %vm1474, %v1525, %v1529
      %v1532 = vshrl.u32 %v1460, 16
      %v1534 = vrot.slane %v1532, 4
      %v1535 = vshll.u32 %v1460, 16
      %v1537 = vrot.slane %v1535, 5
      %v1538 = vor.u32 %v1534, %v1537
      %v1539 = vrot.slane %v1538, 4
      %v1541 = vshll.u32 %v1461, 16
      %v1543 = vrot.slane %v1541, 5
      %v1544 = vsel %vm1474, %v1539, %v1543
      %v1546 = vshrl.u32 %v1462, 16
      %v1548 = vrot.slane %v1546, 4
      %v1549 = vshll.u32 %v1462, 16
      %v1551 = vrot.slane %v1549, 5
      %v1552 = vor.u32 %v1548, %v1551
      %v1553 = vrot.slane %v1552, 4
      %v1555 = vshll.u32 %v1463, 16
      %v1557 = vrot.slane %v1555, 5
      %v1558 = vsel %vm1474, %v1553, %v1557
      %v1560 = vshrl.u32 %v1464, 16
      %v1562 = vrot.slane %v1560, 4
      %v1563 = vshll.u32 %v1464, 16
      %v1565 = vrot.slane %v1563, 5
      %v1566 = vor.u32 %v1562, %v1565
      %v1567 = vrot.slane %v1566, 4
      %v1569 = vshll.u32 %v1465, 16
      %v1571 = vrot.slane %v1569, 5
      %v1572 = vsel %vm1474, %v1567, %v1571
      %v1574 = vshrl.u32 %v1466, 16
      %v1576 = vrot.slane %v1574, 4
      %v1577 = vshll.u32 %v1466, 16
      %v1579 = vrot.slane %v1577, 5
      %v1580 = vor.u32 %v1576, %v1579
      %v1581 = vrot.slane %v1580, 4
      %v1583 = vshll.u32 %v1467, 16
      %v1585 = vrot.slane %v1583, 5
      %v1586 = vsel %vm1474, %v1581, %v1585
      %v1588 = vshrl.u32 %v1468, 16
      %v1590 = vrot.slane %v1588, 4
      %v1591 = vshll.u32 %v1468, 16
      %v1593 = vrot.slane %v1591, 5
      %v1594 = vor.u32 %v1590, %v1593
      %v1595 = vrot.slane %v1594, 4
      %v1597 = vshll.u32 %v1469, 16
      %v1599 = vrot.slane %v1597, 5
      %v1600 = vsel %vm1474, %v1595, %v1599
      %v1602 = vshrl.u32 %v1470, 16
      %v1604 = vrot.slane %v1602, 4
      %v1605 = vshll.u32 %v1470, 16
      %v1607 = vrot.slane %v1605, 5
      %v1608 = vor.u32 %v1604, %v1607
      %v1609 = vrot.slane %v1608, 4
      %v1611 = vshll.u32 %v1471, 16
      %v1613 = vrot.slane %v1611, 5
      %v1614 = vsel %vm1474, %v1609, %v1613
      %s1615 = scalar_lea.vmem %s7, 64
      %v1616 = vld [vmem:[%s1615] sm:$0xf]
      %v1617 = vld [vmem:[%s1615 + $0x4] sm:$0xf]
      %v1618 = vld [vmem:[%s1615 + $0x8] sm:$0xf]
      %v1619 = vld [vmem:[%s1615 + $0xc] sm:$0xf]
      %v1620 = vld [vmem:[%s1615 + $0x10] sm:$0xf]
      %v1621 = vld [vmem:[%s1615 + $0x14] sm:$0xf]
      %v1622 = vld [vmem:[%s1615 + $0x18] sm:$0xf]
      %v1623 = vld [vmem:[%s1615 + $0x1c] sm:$0xf]
      %v1624 = vld [vmem:[%s1615 + $0x20] sm:$0xf]
      %v1625 = vld [vmem:[%s1615 + $0x24] sm:$0xf]
      %v1626 = vld [vmem:[%s1615 + $0x28] sm:$0xf]
      %v1627 = vld [vmem:[%s1615 + $0x2c] sm:$0xf]
      %v1628 = vld [vmem:[%s1615 + $0x30] sm:$0xf]
      %v1629 = vld [vmem:[%s1615 + $0x34] sm:$0xf]
      %v1630 = vld [vmem:[%s1615 + $0x38] sm:$0xf]
      %v1631 = vld [vmem:[%s1615 + $0x3c] sm:$0xf]
      %v1632 = vunpack.c.l.b16 %v1488
      %v1633 = vunpack.c.l.b16 %v1502
      %v1634 = vunpack.c.l.b16 %v1516
      %v1635 = vunpack.c.l.b16 %v1530
      %v1636 = vunpack.c.l.b16 %v1544
      %v1637 = vunpack.c.l.b16 %v1558
      %v1638 = vunpack.c.l.b16 %v1572
      %v1639 = vunpack.c.l.b16 %v1586
      %v1640 = vpack.c.b16 %v1633, %v1632
      %v1641 = vpack.c.b16 %v1635, %v1634
      %v1642 = vpack.c.b16 %v1637, %v1636
      %v1643 = vpack.c.b16 %v1639, %v1638
      %v1664 = vunpack.c.l.b16 %v1616
      %v1665 = vunpack.c.l.b16 %v1617
      %v1666 = vunpack.c.l.b16 %v1618
      %v1667 = vunpack.c.l.b16 %v1619
      %v1668 = vunpack.c.l.b16 %v1620
      %v1669 = vunpack.c.l.b16 %v1621
      %v1670 = vunpack.c.l.b16 %v1622
      %v1671 = vunpack.c.l.b16 %v1623
      %v1672 = vunpack.c.l.b16 %v1624
      %v1673 = vunpack.c.l.b16 %v1625
      %v1674 = vunpack.c.l.b16 %v1626
      %v1675 = vunpack.c.l.b16 %v1627
      %v1676 = vunpack.c.l.b16 %v1628
      %v1677 = vunpack.c.l.b16 %v1629
      %v1678 = vunpack.c.l.b16 %v1630
      %v1679 = vunpack.c.l.b16 %v1631
      %v1680 = vpack.c.b16 %v1665, %v1664
      %v1681 = vpack.c.b16 %v1667, %v1666
      %v1682 = vpack.c.b16 %v1669, %v1668
      %v1683 = vpack.c.b16 %v1671, %v1670
      %v1684 = vpack.c.b16 %v1673, %v1672
      %v1685 = vpack.c.b16 %v1675, %v1674
      %v1686 = vpack.c.b16 %v1677, %v1676
      %v1687 = vpack.c.b16 %v1679, %v1678
      %1696 = vmatprep.subr.bf16.mxu0 0
      %1697 = vmatpush1.bf16.msra.mxu0 %v1680
      %1698 = vmatprep.subr.bf16.mxu0 0
      %1699 = vmatpush1.bf16.msra.mxu0 %v1681
      %1700 = vmatprep.subr.bf16.mxu0 0
      %1701 = vmatpush1.bf16.msra.mxu0 %v1682
      %1702 = vmatprep.subr.bf16.mxu0 0
      %1703 = vmatpush1.bf16.msra.mxu0 %v1683
      %1704 = vmatprep.subr.bf16.mxu0 0
      %1705 = vmatpush1.bf16.msra.mxu0 %v1684
      %1706 = vmatprep.subr.bf16.mxu0 0
      %1707 = vmatpush1.bf16.msra.mxu0 %v1685
      %1708 = vmatprep.subr.bf16.mxu0 0
      %1709 = vmatpush1.bf16.msra.mxu0 %v1686
      %1710 = vmatprep.subr.bf16.mxu0 0
      %1711 = vmatpush1.bf16.msra.mxu0 %v1687
      %1712 = vmatprep.subr.bf16.mxu0 0
      %1713 = vmatpush1.bf16.msra.mxu0 0
      %1714 = vmatprep.subr.bf16.mxu0 0
      %1715 = vmatpush1.bf16.msra.mxu0 0
      %1716 = vmatprep.subr.bf16.mxu0 0
      %1717 = vmatpush1.bf16.msra.mxu0 0
      %1718 = vmatprep.subr.bf16.mxu0 0
      %1719 = vmatpush1.bf16.msra.mxu0 0
      %1720 = vmatprep.subr.bf16.mxu0 0
      %1721 = vmatpush1.bf16.msra.mxu0 0
      %1722 = vmatprep.subr.bf16.mxu0 0
      %1723 = vmatpush1.bf16.msra.mxu0 0
      %1724 = vmatprep.subr.bf16.mxu0 0
      %1725 = vmatpush1.bf16.msra.mxu0 0
      %1726 = vmatprep.subr.bf16.mxu0 0
      %1727 = vmatpush1.bf16.msra.mxu0 0
      %1728 = vmatprep.mubr.bf16.mxu0 0
      %1729 = vmatmul.mubr.bf16.gmra.mrb[0].mxu0 %v1640
      %v1730 = vpop.f32.mrb[0].mxu0
      %v1731 = vadd.f32 0.0, %v1730
      %v1732 = vpop.f32.mrb[0].mxu0
      %v1733 = vpop.f32.mrb[0].mxu0
      %v1734 = vadd.f32 0.0, %v1733
      %v1735 = vpop.f32.mrb[0].mxu0
      %1736 = vmatprep.mubr.bf16.mxu0 0
      %1737 = vmatmul.mubr.bf16.gmra.mrb[0].mxu0 %v1641
      %v1738 = vpop.f32.mrb[0].mxu0
      %v1739 = vadd.f32 0.0, %v1738
      %v1740 = vpop.f32.mrb[0].mxu0
      %v1741 = vpop.f32.mrb[0].mxu0
      %v1742 = vadd.f32 0.0, %v1741
      %v1743 = vpop.f32.mrb[0].mxu0
      %1744 = vmatprep.mubr.bf16.mxu0 0
      %1745 = vmatmul.mubr.bf16.gmra.mrb[0].mxu0 %v1642
      %v1746 = vpop.f32.mrb[0].mxu0
      %v1747 = vadd.f32 0.0, %v1746
      %v1748 = vpop.f32.mrb[0].mxu0
      %v1749 = vpop.f32.mrb[0].mxu0
      %v1750 = vadd.f32 0.0, %v1749
      %v1751 = vpop.f32.mrb[0].mxu0
      %1752 = vmatprep.mubr.bf16.mxu0 0
      %1753 = vmatmul.mubr.bf16.gmra.mrb[0].mxu0 %v1643
      %v1754 = vpop.f32.mrb[0].mxu0
      %v1755 = vadd.f32 0.0, %v1754
      %v1756 = vpop.f32.mrb[0].mxu0
      %v1757 = vpop.f32.mrb[0].mxu0
      %v1758 = vadd.f32 0.0, %v1757
      %v1759 = vpop.f32.mrb[0].mxu0
      %1760 = vdwg.mxu0
      %v1761 = vadd.f32 %v1404, %v1731
      %v1762 = vadd.f32 %v1405, %v1734
      %v1763 = vadd.f32 %v1406, %v1739
      %v1764 = vadd.f32 %v1407, %v1742
      %v1765 = vadd.f32 %v1408, %v1747
      %v1766 = vadd.f32 %v1409, %v1750
      %v1767 = vadd.f32 %v1410, %v1755
      %v1768 = vadd.f32 %v1411, %v1758
      %s1769 = scalar_lea.vmem %s7, 256
      %v1770 = vld [vmem:[%s1769] sm:$0xf]
      %v1771 = vld [vmem:[%s1769 + $0x4] sm:$0xf]
      %v1772 = vld [vmem:[%s1769 + $0x8] sm:$0xf]
      %v1773 = vld [vmem:[%s1769 + $0xc] sm:$0xf]
      %v1774 = vld [vmem:[%s1769 + $0x10] sm:$0xf]
      %v1775 = vld [vmem:[%s1769 + $0x14] sm:$0xf]
      %v1776 = vld [vmem:[%s1769 + $0x18] sm:$0xf]
      %v1777 = vld [vmem:[%s1769 + $0x1c] sm:$0xf]
      %v1778 = vld [vmem:[%s1769 + $0x20] sm:$0xf]
      %v1779 = vld [vmem:[%s1769 + $0x24] sm:$0xf]
      %v1780 = vld [vmem:[%s1769 + $0x28] sm:$0xf]
      %v1781 = vld [vmem:[%s1769 + $0x2c] sm:$0xf]
      %v1782 = vld [vmem:[%s1769 + $0x30] sm:$0xf]
      %v1783 = vld [vmem:[%s1769 + $0x34] sm:$0xf]
      %v1784 = vld [vmem:[%s1769 + $0x38] sm:$0xf]
      %v1785 = vld [vmem:[%s1769 + $0x3c] sm:$0xf]
      %v1786 = vunpack.c.l.b16 %v1600
      %v1787 = vpack.c.b16 %v1634, %v1633
      %v1788 = vpack.c.b16 %v1636, %v1635
      %v1789 = vpack.c.b16 %v1638, %v1637
      %v1790 = vpack.c.b16 %v1786, %v1639
      %v1811 = vunpack.c.l.b16 %v1770
      %v1812 = vunpack.c.l.b16 %v1771
      %v1813 = vunpack.c.l.b16 %v1772
      %v1814 = vunpack.c.l.b16 %v1773
      %v1815 = vunpack.c.l.b16 %v1774
      %v1816 = vunpack.c.l.b16 %v1775
      %v1817 = vunpack.c.l.b16 %v1776
      %v1818 = vunpack.c.l.b16 %v1777
      %v1819 = vunpack.c.l.b16 %v1778
      %v1820 = vunpack.c.l.b16 %v1779
      %v1821 = vunpack.c.l.b16 %v1780
      %v1822 = vunpack.c.l.b16 %v1781
      %v1823 = vunpack.c.l.b16 %v1782
      %v1824 = vunpack.c.l.b16 %v1783
      %v1825 = vunpack.c.l.b16 %v1784
      %v1826 = vunpack.c.l.b16 %v1785
      %v1827 = vpack.c.b16 %v1812, %v1811
      %v1828 = vpack.c.b16 %v1814, %v1813
      %v1829 = vpack.c.b16 %v1816, %v1815
      %v1830 = vpack.c.b16 %v1818, %v1817
      %v1831 = vpack.c.b16 %v1820, %v1819
      %v1832 = vpack.c.b16 %v1822, %v1821
      %v1833 = vpack.c.b16 %v1824, %v1823
      %v1834 = vpack.c.b16 %v1826, %v1825
      %1843 = vmatprep.subr.bf16.mxu0 0
      %1844 = vmatpush1.bf16.msra.mxu0 %v1827
      %1845 = vmatprep.subr.bf16.mxu0 0
      %1846 = vmatpush1.bf16.msra.mxu0 %v1828
      %1847 = vmatprep.subr.bf16.mxu0 0
      %1848 = vmatpush1.bf16.msra.mxu0 %v1829
      %1849 = vmatprep.subr.bf16.mxu0 0
      %1850 = vmatpush1.bf16.msra.mxu0 %v1830
      %1851 = vmatprep.subr.bf16.mxu0 0
      %1852 = vmatpush1.bf16.msra.mxu0 %v1831
      %1853 = vmatprep.subr.bf16.mxu0 0
      %1854 = vmatpush1.bf16.msra.mxu0 %v1832
      %1855 = vmatprep.subr.bf16.mxu0 0
      %1856 = vmatpush1.bf16.msra.mxu0 %v1833
      %1857 = vmatprep.subr.bf16.mxu0 0
      %1858 = vmatpush1.bf16.msra.mxu0 %v1834
      %1859 = vmatprep.subr.bf16.mxu0 0
      %1860 = vmatpush1.bf16.msra.mxu0 0
      %1861 = vmatprep.subr.bf16.mxu0 0
      %1862 = vmatpush1.bf16.msra.mxu0 0
      %1863 = vmatprep.subr.bf16.mxu0 0
      %1864 = vmatpush1.bf16.msra.mxu0 0
      %1865 = vmatprep.subr.bf16.mxu0 0
      %1866 = vmatpush1.bf16.msra.mxu0 0
      %1867 = vmatprep.subr.bf16.mxu0 0
      %1868 = vmatpush1.bf16.msra.mxu0 0
      %1869 = vmatprep.subr.bf16.mxu0 0
      %1870 = vmatpush1.bf16.msra.mxu0 0
      %1871 = vmatprep.subr.bf16.mxu0 0
      %1872 = vmatpush1.bf16.msra.mxu0 0
      %1873 = vmatprep.subr.bf16.mxu0 0
      %1874 = vmatpush1.bf16.msra.mxu0 0
      %1875 = vmatprep.mubr.bf16.mxu0 0
      %1876 = vmatmul.mubr.bf16.gmra.mrb[0].mxu0 %v1787
      %v1877 = vpop.f32.mrb[0].mxu0
      %v1878 = vadd.f32 0.0, %v1877
      %v1879 = vpop.f32.mrb[0].mxu0
      %v1880 = vpop.f32.mrb[0].mxu0
      %v1881 = vadd.f32 0.0, %v1880
      %v1882 = vpop.f32.mrb[0].mxu0
      %1883 = vmatprep.mubr.bf16.mxu0 0
      %1884 = vmatmul.mubr.bf16.gmra.mrb[0].mxu0 %v1788
      %v1885 = vpop.f32.mrb[0].mxu0
      %v1886 = vadd.f32 0.0, %v1885
      %v1887 = vpop.f32.mrb[0].mxu0
      %v1888 = vpop.f32.mrb[0].mxu0
      %v1889 = vadd.f32 0.0, %v1888
      %v1890 = vpop.f32.mrb[0].mxu0
      %1891 = vmatprep.mubr.bf16.mxu0 0
      %1892 = vmatmul.mubr.bf16.gmra.mrb[0].mxu0 %v1789
      %v1893 = vpop.f32.mrb[0].mxu0
      %v1894 = vadd.f32 0.0, %v1893
      %v1895 = vpop.f32.mrb[0].mxu0
      %v1896 = vpop.f32.mrb[0].mxu0
      %v1897 = vadd.f32 0.0, %v1896
      %v1898 = vpop.f32.mrb[0].mxu0
      %1899 = vmatprep.mubr.bf16.mxu0 0
      %1900 = vmatmul.mubr.bf16.gmra.mrb[0].mxu0 %v1790
      %v1901 = vpop.f32.mrb[0].mxu0
      %v1902 = vadd.f32 0.0, %v1901
      %v1903 = vpop.f32.mrb[0].mxu0
      %v1904 = vpop.f32.mrb[0].mxu0
      %v1905 = vadd.f32 0.0, %v1904
      %v1906 = vpop.f32.mrb[0].mxu0
      %1907 = vdwg.mxu0
      %v1908 = vadd.f32 %v1761, %v1878
      %v1909 = vadd.f32 %v1762, %v1881
      %v1910 = vadd.f32 %v1763, %v1886
      %v1911 = vadd.f32 %v1764, %v1889
      %v1912 = vadd.f32 %v1765, %v1894
      %v1913 = vadd.f32 %v1766, %v1897
      %v1914 = vadd.f32 %v1767, %v1902
      %v1915 = vadd.f32 %v1768, %v1905
      %s1916 = scalar_lea.vmem %s7, 448
      %v1917 = vld [vmem:[%s1916] sm:$0xf]
      %v1918 = vld [vmem:[%s1916 + $0x4] sm:$0xf]
      %v1919 = vld [vmem:[%s1916 + $0x8] sm:$0xf]
      %v1920 = vld [vmem:[%s1916 + $0xc] sm:$0xf]
      %v1921 = vld [vmem:[%s1916 + $0x10] sm:$0xf]
      %v1922 = vld [vmem:[%s1916 + $0x14] sm:$0xf]
      %v1923 = vld [vmem:[%s1916 + $0x18] sm:$0xf]
      %v1924 = vld [vmem:[%s1916 + $0x1c] sm:$0xf]
      %v1925 = vld [vmem:[%s1916 + $0x20] sm:$0xf]
      %v1926 = vld [vmem:[%s1916 + $0x24] sm:$0xf]
      %v1927 = vld [vmem:[%s1916 + $0x28] sm:$0xf]
      %v1928 = vld [vmem:[%s1916 + $0x2c] sm:$0xf]
      %v1929 = vld [vmem:[%s1916 + $0x30] sm:$0xf]
      %v1930 = vld [vmem:[%s1916 + $0x34] sm:$0xf]
      %v1931 = vld [vmem:[%s1916 + $0x38] sm:$0xf]
      %v1932 = vld [vmem:[%s1916 + $0x3c] sm:$0xf]
      %v1933 = vunpack.c.l.b16 %v1614
      %v1934 = vpack.c.b16 %v1933, %v1786
      %v1952 = vunpack.c.l.b16 %v1917
      %v1953 = vunpack.c.l.b16 %v1918
      %v1954 = vunpack.c.l.b16 %v1919
      %v1955 = vunpack.c.l.b16 %v1920
      %v1956 = vunpack.c.l.b16 %v1921
      %v1957 = vunpack.c.l.b16 %v1922
      %v1958 = vunpack.c.l.b16 %v1923
      %v1959 = vunpack.c.l.b16 %v1924
      %v1960 = vunpack.c.l.b16 %v1925
      %v1961 = vunpack.c.l.b16 %v1926
      %v1962 = vunpack.c.l.b16 %v1927
      %v1963 = vunpack.c.l.b16 %v1928
      %v1964 = vunpack.c.l.b16 %v1929
      %v1965 = vunpack.c.l.b16 %v1930
      %v1966 = vunpack.c.l.b16 %v1931
      %v1967 = vunpack.c.l.b16 %v1932
      %v1968 = vpack.c.b16 %v1953, %v1952
      %v1969 = vpack.c.b16 %v1955, %v1954
      %v1970 = vpack.c.b16 %v1957, %v1956
      %v1971 = vpack.c.b16 %v1959, %v1958
      %v1972 = vpack.c.b16 %v1961, %v1960
      %v1973 = vpack.c.b16 %v1963, %v1962
      %v1974 = vpack.c.b16 %v1965, %v1964
      %v1975 = vpack.c.b16 %v1967, %v1966
      %1984 = vmatprep.subr.bf16.mxu0 0
      %1985 = vmatpush1.bf16.msra.mxu0 %v1968
      %1986 = vmatprep.subr.bf16.mxu0 0
      %1987 = vmatpush1.bf16.msra.mxu0 %v1969
      %1988 = vmatprep.subr.bf16.mxu0 0
      %1989 = vmatpush1.bf16.msra.mxu0 %v1970
      %1990 = vmatprep.subr.bf16.mxu0 0
      %1991 = vmatpush1.bf16.msra.mxu0 %v1971
      %1992 = vmatprep.subr.bf16.mxu0 0
      %1993 = vmatpush1.bf16.msra.mxu0 %v1972
      %1994 = vmatprep.subr.bf16.mxu0 0
      %1995 = vmatpush1.bf16.msra.mxu0 %v1973
      %1996 = vmatprep.subr.bf16.mxu0 0
      %1997 = vmatpush1.bf16.msra.mxu0 %v1974
      %1998 = vmatprep.subr.bf16.mxu0 0
      %1999 = vmatpush1.bf16.msra.mxu0 %v1975
      %2000 = vmatprep.subr.bf16.mxu0 0
      %2001 = vmatpush1.bf16.msra.mxu0 0
      %2002 = vmatprep.subr.bf16.mxu0 0
      %2003 = vmatpush1.bf16.msra.mxu0 0
      %2004 = vmatprep.subr.bf16.mxu0 0
      %2005 = vmatpush1.bf16.msra.mxu0 0
      %2006 = vmatprep.subr.bf16.mxu0 0
      %2007 = vmatpush1.bf16.msra.mxu0 0
      %2008 = vmatprep.subr.bf16.mxu0 0
      %2009 = vmatpush1.bf16.msra.mxu0 0
      %2010 = vmatprep.subr.bf16.mxu0 0
      %2011 = vmatpush1.bf16.msra.mxu0 0
      %2012 = vmatprep.subr.bf16.mxu0 0
      %2013 = vmatpush1.bf16.msra.mxu0 0
      %2014 = vmatprep.subr.bf16.mxu0 0
      %2015 = vmatpush1.bf16.msra.mxu0 0
      %2016 = vmatprep.mubr.bf16.mxu0 0
      %2017 = vmatmul.mubr.bf16.gmra.mrb[0].mxu0 %v1641
      %v2018 = vpop.f32.mrb[0].mxu0
      %v2019 = vadd.f32 0.0, %v2018
      %v2020 = vpop.f32.mrb[0].mxu0
      %v2021 = vpop.f32.mrb[0].mxu0
      %v2022 = vadd.f32 0.0, %v2021
      %v2023 = vpop.f32.mrb[0].mxu0
      %2024 = vmatprep.mubr.bf16.mxu0 0
      %2025 = vmatmul.mubr.bf16.gmra.mrb[0].mxu0 %v1642
      %v2026 = vpop.f32.mrb[0].mxu0
      %v2027 = vadd.f32 0.0, %v2026
      %v2028 = vpop.f32.mrb[0].mxu0
      %v2029 = vpop.f32.mrb[0].mxu0
      %v2030 = vadd.f32 0.0, %v2029
      %v2031 = vpop.f32.mrb[0].mxu0
      %2032 = vmatprep.mubr.bf16.mxu0 0
      %2033 = vmatmul.mubr.bf16.gmra.mrb[0].mxu0 %v1643
      %v2034 = vpop.f32.mrb[0].mxu0
      %v2035 = vadd.f32 0.0, %v2034
      %v2036 = vpop.f32.mrb[0].mxu0
      %v2037 = vpop.f32.mrb[0].mxu0
      %v2038 = vadd.f32 0.0, %v2037
      %v2039 = vpop.f32.mrb[0].mxu0
      %2040 = vmatprep.mubr.bf16.mxu0 0
      %2041 = vmatmul.mubr.bf16.gmra.mrb[0].mxu0 %v1934
      %v2042 = vpop.f32.mrb[0].mxu0
      %v2043 = vadd.f32 0.0, %v2042
      %v2044 = vpop.f32.mrb[0].mxu0
      %v2045 = vpop.f32.mrb[0].mxu0
      %v2046 = vadd.f32 0.0, %v2045
      %v2047 = vpop.f32.mrb[0].mxu0
      %2048 = vdwg.mxu0
      %v2049 = vadd.f32 %v1908, %v2019
      %v2050 = vadd.f32 %v1909, %v2022
      %v2051 = vadd.f32 %v1910, %v2027
      %v2052 = vadd.f32 %v1911, %v2030
      %v2053 = vadd.f32 %v1912, %v2035
      %v2054 = vadd.f32 %v1913, %v2038
      %v2055 = vadd.f32 %v1914, %v2043
      %v2056 = vadd.f32 %v1915, %v2046
      %v2057 = vld [vmem:[#allocation2] sm:$0x1e]
      %v2058 = vld [vmem:[#allocation2 + $0x8] sm:$0x1e]
      %v2059 = vld [vmem:[#allocation2 + $0x10] sm:$0x1e]
      %v2060 = vld [vmem:[#allocation2 + $0x18] sm:$0x1e]
      %v2061 = vld [vmem:[#allocation2 + $0x20] sm:$0x1e]
      %v2062 = vld [vmem:[#allocation2 + $0x28] sm:$0x1e]
      %v2063 = vld [vmem:[#allocation2 + $0x30] sm:$0x1e]
      %v2064 = vld [vmem:[#allocation2 + $0x38] sm:$0x1e]
      %v2065 = vld [vmem:[#allocation2 + $0x40] sm:$0x1e]
      %v2066 = vld [vmem:[#allocation2 + $0x48] sm:$0x1e]
      %v2077 = vunpack.c.l.b16 %v2057
      %v2078 = vunpack.c.h.b16 %v2057
      %v2079 = vunpack.c.l.b16 %v2058
      %v2080 = vunpack.c.h.b16 %v2058
      %v2081 = vunpack.c.l.b16 %v2059
      %v2082 = vunpack.c.h.b16 %v2059
      %v2083 = vunpack.c.l.b16 %v2060
      %v2084 = vunpack.c.h.b16 %v2060
      %v2085 = vunpack.c.l.b16 %v2061
      %v2086 = vunpack.c.h.b16 %v2061
      %v2087 = vunpack.c.l.b16 %v2062
      %v2088 = vunpack.c.h.b16 %v2062
      %v2089 = vunpack.c.l.b16 %v2063
      %v2090 = vunpack.c.h.b16 %v2063
      %v2091 = vunpack.c.l.b16 %v2064
      %v2092 = vunpack.c.h.b16 %v2064
      %v2093 = vunpack.c.l.b16 %v2065
      %v2094 = vunpack.c.h.b16 %v2065
      %v2095 = vunpack.c.l.b16 %v2066
      %v2096 = vunpack.c.h.b16 %v2066
      %v2097 = vpack.c.b16 %v2077, %v2077
      %v2098 = vpack.c.b16 %v2078, %v2078
      %v2099 = vpack.c.b16 %v2079, %v2079
      %v2100 = vpack.c.b16 %v2080, %v2080
      %v2101 = vpack.c.b16 %v2081, %v2081
      %v2102 = vpack.c.b16 %v2082, %v2082
      %v2103 = vpack.c.b16 %v2083, %v2083
      %v2104 = vpack.c.b16 %v2084, %v2084
      %v2105 = vpack.c.b16 %v2085, %v2085
      %v2106 = vpack.c.b16 %v2086, %v2086
      %v2107 = vpack.c.b16 %v2087, %v2087
      %v2108 = vpack.c.b16 %v2088, %v2088
      %v2109 = vpack.c.b16 %v2089, %v2089
      %v2110 = vpack.c.b16 %v2090, %v2090
      %v2111 = vpack.c.b16 %v2091, %v2091
      %v2112 = vpack.c.b16 %v2092, %v2092
      %v2113 = vpack.c.b16 %v2093, %v2093
      %v2114 = vpack.c.b16 %v2094, %v2094
      %v2115 = vpack.c.b16 %v2095, %v2095
      %v2116 = vpack.c.b16 %v2096, %v2096
      %vm2117 = vcmask 1042432
      %vm2118 = vcmask 1046532
      %vm2119 = vmor %vm2117, %vm2118
      %v2120 = vrot.slane %v2097, 5
      %v2121 = vrot.slane %v2120, 4
      %v2122 = vrot.slane %v2098, 5
      %v2123 = vsel %vm2119, %v2121, %v2122
      %v2124 = vrot.slane %v2099, 5
      %v2125 = vrot.slane %v2124, 4
      %v2126 = vrot.slane %v2100, 5
      %v2127 = vsel %vm2119, %v2125, %v2126
      %v2128 = vrot.slane %v2101, 5
      %v2129 = vrot.slane %v2128, 4
      %v2130 = vrot.slane %v2102, 5
      %v2131 = vsel %vm2119, %v2129, %v2130
      %v2132 = vrot.slane %v2103, 5
      %v2133 = vrot.slane %v2132, 4
      %v2134 = vrot.slane %v2104, 5
      %v2135 = vsel %vm2119, %v2133, %v2134
      %v2136 = vrot.slane %v2105, 5
      %v2137 = vrot.slane %v2136, 4
      %v2138 = vrot.slane %v2106, 5
      %v2139 = vsel %vm2119, %v2137, %v2138
      %v2140 = vrot.slane %v2107, 5
      %v2141 = vrot.slane %v2140, 4
      %v2142 = vrot.slane %v2108, 5
      %v2143 = vsel %vm2119, %v2141, %v2142
      %v2144 = vrot.slane %v2109, 5
      %v2145 = vrot.slane %v2144, 4
      %v2146 = vrot.slane %v2110, 5
      %v2147 = vsel %vm2119, %v2145, %v2146
      %v2148 = vrot.slane %v2111, 5
      %v2149 = vrot.slane %v2148, 4
      %v2150 = vrot.slane %v2112, 5
      %v2151 = vsel %vm2119, %v2149, %v2150
      %v2152 = vrot.slane %v2113, 5
      %v2153 = vrot.slane %v2152, 4
      %v2154 = vrot.slane %v2114, 5
      %v2155 = vsel %vm2119, %v2153, %v2154
      %v2156 = vrot.slane %v2115, 5
      %v2157 = vrot.slane %v2156, 4
      %v2158 = vrot.slane %v2116, 5
      %v2159 = vsel %vm2119, %v2157, %v2158
      %s2160 = scalar_lea.vmem %s7, 128
      %v2161 = vld [vmem:[%s2160] sm:$0xf]
      %v2162 = vld [vmem:[%s2160 + $0x4] sm:$0xf]
      %v2163 = vld [vmem:[%s2160 + $0x8] sm:$0xf]
      %v2164 = vld [vmem:[%s2160 + $0xc] sm:$0xf]
      %v2165 = vld [vmem:[%s2160 + $0x10] sm:$0xf]
      %v2166 = vld [vmem:[%s2160 + $0x14] sm:$0xf]
      %v2167 = vld [vmem:[%s2160 + $0x18] sm:$0xf]
      %v2168 = vld [vmem:[%s2160 + $0x1c] sm:$0xf]
      %v2169 = vld [vmem:[%s2160 + $0x20] sm:$0xf]
      %v2170 = vld [vmem:[%s2160 + $0x24] sm:$0xf]
      %v2171 = vld [vmem:[%s2160 + $0x28] sm:$0xf]
      %v2172 = vld [vmem:[%s2160 + $0x2c] sm:$0xf]
      %v2173 = vld [vmem:[%s2160 + $0x30] sm:$0xf]
      %v2174 = vld [vmem:[%s2160 + $0x34] sm:$0xf]
      %v2175 = vld [vmem:[%s2160 + $0x38] sm:$0xf]
      %v2176 = vld [vmem:[%s2160 + $0x3c] sm:$0xf]
      %v2177 = vunpack.c.l.b16 %v2123
      %v2178 = vunpack.c.l.b16 %v2127
      %v2179 = vunpack.c.l.b16 %v2131
      %v2180 = vunpack.c.l.b16 %v2135
      %v2181 = vunpack.c.l.b16 %v2139
      %v2182 = vunpack.c.l.b16 %v2143
      %v2183 = vunpack.c.l.b16 %v2147
      %v2184 = vunpack.c.l.b16 %v2151
      %v2185 = vpack.c.b16 %v2178, %v2177
      %v2186 = vpack.c.b16 %v2180, %v2179
      %v2187 = vpack.c.b16 %v2182, %v2181
      %v2188 = vpack.c.b16 %v2184, %v2183
      %v2209 = vunpack.c.l.b16 %v2161
      %v2210 = vunpack.c.l.b16 %v2162
      %v2211 = vunpack.c.l.b16 %v2163
      %v2212 = vunpack.c.l.b16 %v2164
      %v2213 = vunpack.c.l.b16 %v2165
      %v2214 = vunpack.c.l.b16 %v2166
      %v2215 = vunpack.c.l.b16 %v2167
      %v2216 = vunpack.c.l.b16 %v2168
      %v2217 = vunpack.c.l.b16 %v2169
      %v2218 = vunpack.c.l.b16 %v2170
      %v2219 = vunpack.c.l.b16 %v2171
      %v2220 = vunpack.c.l.b16 %v2172
      %v2221 = vunpack.c.l.b16 %v2173
      %v2222 = vunpack.c.l.b16 %v2174
      %v2223 = vunpack.c.l.b16 %v2175
      %v2224 = vunpack.c.l.b16 %v2176
      %v2225 = vpack.c.b16 %v2210, %v2209
      %v2226 = vpack.c.b16 %v2212, %v2211
      %v2227 = vpack.c.b16 %v2214, %v2213
      %v2228 = vpack.c.b16 %v2216, %v2215
      %v2229 = vpack.c.b16 %v2218, %v2217
      %v2230 = vpack.c.b16 %v2220, %v2219
      %v2231 = vpack.c.b16 %v2222, %v2221
      %v2232 = vpack.c.b16 %v2224, %v2223
      %2241 = vmatprep.subr.bf16.mxu0 0
      %2242 = vmatpush1.bf16.msra.mxu0 %v2225
      %2243 = vmatprep.subr.bf16.mxu0 0
      %2244 = vmatpush1.bf16.msra.mxu0 %v2226
      %2245 = vmatprep.subr.bf16.mxu0 0
      %2246 = vmatpush1.bf16.msra.mxu0 %v2227
      %2247 = vmatprep.subr.bf16.mxu0 0
      %2248 = vmatpush1.bf16.msra.mxu0 %v2228
      %2249 = vmatprep.subr.bf16.mxu0 0
      %2250 = vmatpush1.bf16.msra.mxu0 %v2229
      %2251 = vmatprep.subr.bf16.mxu0 0
      %2252 = vmatpush1.bf16.msra.mxu0 %v2230
      %2253 = vmatprep.subr.bf16.mxu0 0
      %2254 = vmatpush1.bf16.msra.mxu0 %v2231
      %2255 = vmatprep.subr.bf16.mxu0 0
      %2256 = vmatpush1.bf16.msra.mxu0 %v2232
      %2257 = vmatprep.subr.bf16.mxu0 0
      %2258 = vmatpush1.bf16.msra.mxu0 0
      %2259 = vmatprep.subr.bf16.mxu0 0
      %2260 = vmatpush1.bf16.msra.mxu0 0
      %2261 = vmatprep.subr.bf16.mxu0 0
      %2262 = vmatpush1.bf16.msra.mxu0 0
      %2263 = vmatprep.subr.bf16.mxu0 0
      %2264 = vmatpush1.bf16.msra.mxu0 0
      %2265 = vmatprep.subr.bf16.mxu0 0
      %2266 = vmatpush1.bf16.msra.mxu0 0
      %2267 = vmatprep.subr.bf16.mxu0 0
      %2268 = vmatpush1.bf16.msra.mxu0 0
      %2269 = vmatprep.subr.bf16.mxu0 0
      %2270 = vmatpush1.bf16.msra.mxu0 0
      %2271 = vmatprep.subr.bf16.mxu0 0
      %2272 = vmatpush1.bf16.msra.mxu0 0
      %2273 = vmatprep.mubr.bf16.mxu0 0
      %2274 = vmatmul.mubr.bf16.gmra.mrb[0].mxu0 %v2185
      %v2275 = vpop.f32.mrb[0].mxu0
      %v2276 = vadd.f32 0.0, %v2275
      %v2277 = vpop.f32.mrb[0].mxu0
      %v2278 = vpop.f32.mrb[0].mxu0
      %v2279 = vadd.f32 0.0, %v2278
      %v2280 = vpop.f32.mrb[0].mxu0
      %2281 = vmatprep.mubr.bf16.mxu0 0
      %2282 = vmatmul.mubr.bf16.gmra.mrb[0].mxu0 %v2186
      %v2283 = vpop.f32.mrb[0].mxu0
      %v2284 = vadd.f32 0.0, %v2283
      %v2285 = vpop.f32.mrb[0].mxu0
      %v2286 = vpop.f32.mrb[0].mxu0
      %v2287 = vadd.f32 0.0, %v2286
      %v2288 = vpop.f32.mrb[0].mxu0
      %2289 = vmatprep.mubr.bf16.mxu0 0
      %2290 = vmatmul.mubr.bf16.gmra.mrb[0].mxu0 %v2187
      %v2291 = vpop.f32.mrb[0].mxu0
      %v2292 = vadd.f32 0.0, %v2291
      %v2293 = vpop.f32.mrb[0].mxu0
      %v2294 = vpop.f32.mrb[0].mxu0
      %v2295 = vadd.f32 0.0, %v2294
      %v2296 = vpop.f32.mrb[0].mxu0
      %2297 = vmatprep.mubr.bf16.mxu0 0
      %2298 = vmatmul.mubr.bf16.gmra.mrb[0].mxu0 %v2188
      %v2299 = vpop.f32.mrb[0].mxu0
      %v2300 = vadd.f32 0.0, %v2299
      %v2301 = vpop.f32.mrb[0].mxu0
      %v2302 = vpop.f32.mrb[0].mxu0
      %v2303 = vadd.f32 0.0, %v2302
      %v2304 = vpop.f32.mrb[0].mxu0
      %2305 = vdwg.mxu0
      %v2306 = vadd.f32 %v2049, %v2276
      %v2307 = vadd.f32 %v2050, %v2279
      %v2308 = vadd.f32 %v2051, %v2284
      %v2309 = vadd.f32 %v2052, %v2287
      %v2310 = vadd.f32 %v2053, %v2292
      %v2311 = vadd.f32 %v2054, %v2295
      %v2312 = vadd.f32 %v2055, %v2300
      %v2313 = vadd.f32 %v2056, %v2303
      %s2314 = scalar_lea.vmem %s7, 320
      %v2315 = vld [vmem:[%s2314] sm:$0xf]
      %v2316 = vld [vmem:[%s2314 + $0x4] sm:$0xf]
      %v2317 = vld [vmem:[%s2314 + $0x8] sm:$0xf]
      %v2318 = vld [vmem:[%s2314 + $0xc] sm:$0xf]
      %v2319 = vld [vmem:[%s2314 + $0x10] sm:$0xf]
      %v2320 = vld [vmem:[%s2314 + $0x14] sm:$0xf]
      %v2321 = vld [vmem:[%s2314 + $0x18] sm:$0xf]
      %v2322 = vld [vmem:[%s2314 + $0x1c] sm:$0xf]
      %v2323 = vld [vmem:[%s2314 + $0x20] sm:$0xf]
      %v2324 = vld [vmem:[%s2314 + $0x24] sm:$0xf]
      %v2325 = vld [vmem:[%s2314 + $0x28] sm:$0xf]
      %v2326 = vld [vmem:[%s2314 + $0x2c] sm:$0xf]
      %v2327 = vld [vmem:[%s2314 + $0x30] sm:$0xf]
      %v2328 = vld [vmem:[%s2314 + $0x34] sm:$0xf]
      %v2329 = vld [vmem:[%s2314 + $0x38] sm:$0xf]
      %v2330 = vld [vmem:[%s2314 + $0x3c] sm:$0xf]
      %v2331 = vunpack.c.l.b16 %v2155
      %v2332 = vpack.c.b16 %v2179, %v2178
      %v2333 = vpack.c.b16 %v2181, %v2180
      %v2334 = vpack.c.b16 %v2183, %v2182
      %v2335 = vpack.c.b16 %v2331, %v2184
      %v2356 = vunpack.c.l.b16 %v2315
      %v2357 = vunpack.c.l.b16 %v2316
      %v2358 = vunpack.c.l.b16 %v2317
      %v2359 = vunpack.c.l.b16 %v2318
      %v2360 = vunpack.c.l.b16 %v2319
      %v2361 = vunpack.c.l.b16 %v2320
      %v2362 = vunpack.c.l.b16 %v2321
      %v2363 = vunpack.c.l.b16 %v2322
      %v2364 = vunpack.c.l.b16 %v2323
      %v2365 = vunpack.c.l.b16 %v2324
      %v2366 = vunpack.c.l.b16 %v2325
      %v2367 = vunpack.c.l.b16 %v2326
      %v2368 = vunpack.c.l.b16 %v2327
      %v2369 = vunpack.c.l.b16 %v2328
      %v2370 = vunpack.c.l.b16 %v2329
      %v2371 = vunpack.c.l.b16 %v2330
      %v2372 = vpack.c.b16 %v2357, %v2356
      %v2373 = vpack.c.b16 %v2359, %v2358
      %v2374 = vpack.c.b16 %v2361, %v2360
      %v2375 = vpack.c.b16 %v2363, %v2362
      %v2376 = vpack.c.b16 %v2365, %v2364
      %v2377 = vpack.c.b16 %v2367, %v2366
      %v2378 = vpack.c.b16 %v2369, %v2368
      %v2379 = vpack.c.b16 %v2371, %v2370
      %2388 = vmatprep.subr.bf16.mxu0 0
      %2389 = vmatpush1.bf16.msra.mxu0 %v2372
      %2390 = vmatprep.subr.bf16.mxu0 0
      %2391 = vmatpush1.bf16.msra.mxu0 %v2373
      %2392 = vmatprep.subr.bf16.mxu0 0
      %2393 = vmatpush1.bf16.msra.mxu0 %v2374
      %2394 = vmatprep.subr.bf16.mxu0 0
      %2395 = vmatpush1.bf16.msra.mxu0 %v2375
      %2396 = vmatprep.subr.bf16.mxu0 0
      %2397 = vmatpush1.bf16.msra.mxu0 %v2376
      %2398 = vmatprep.subr.bf16.mxu0 0
      %2399 = vmatpush1.bf16.msra.mxu0 %v2377
      %2400 = vmatprep.subr.bf16.mxu0 0
      %2401 = vmatpush1.bf16.msra.mxu0 %v2378
      %2402 = vmatprep.subr.bf16.mxu0 0
      %2403 = vmatpush1.bf16.msra.mxu0 %v2379
      %2404 = vmatprep.subr.bf16.mxu0 0
      %2405 = vmatpush1.bf16.msra.mxu0 0
      %2406 = vmatprep.subr.bf16.mxu0 0
      %2407 = vmatpush1.bf16.msra.mxu0 0
      %2408 = vmatprep.subr.bf16.mxu0 0
      %2409 = vmatpush1.bf16.msra.mxu0 0
      %2410 = vmatprep.subr.bf16.mxu0 0
      %2411 = vmatpush1.bf16.msra.mxu0 0
      %2412 = vmatprep.subr.bf16.mxu0 0
      %2413 = vmatpush1.bf16.msra.mxu0 0
      %2414 = vmatprep.subr.bf16.mxu0 0
      %2415 = vmatpush1.bf16.msra.mxu0 0
      %2416 = vmatprep.subr.bf16.mxu0 0
      %2417 = vmatpush1.bf16.msra.mxu0 0
      %2418 = vmatprep.subr.bf16.mxu0 0
      %2419 = vmatpush1.bf16.msra.mxu0 0
      %2420 = vmatprep.mubr.bf16.mxu0 0
      %2421 = vmatmul.mubr.bf16.gmra.mrb[0].mxu0 %v2332
      %v2422 = vpop.f32.mrb[0].mxu0
      %v2423 = vadd.f32 0.0, %v2422
      %v2424 = vpop.f32.mrb[0].mxu0
      %v2425 = vpop.f32.mrb[0].mxu0
      %v2426 = vadd.f32 0.0, %v2425
      %v2427 = vpop.f32.mrb[0].mxu0
      %2428 = vmatprep.mubr.bf16.mxu0 0
      %2429 = vmatmul.mubr.bf16.gmra.mrb[0].mxu0 %v2333
      %v2430 = vpop.f32.mrb[0].mxu0
      %v2431 = vadd.f32 0.0, %v2430
      %v2432 = vpop.f32.mrb[0].mxu0
      %v2433 = vpop.f32.mrb[0].mxu0
      %v2434 = vadd.f32 0.0, %v2433
      %v2435 = vpop.f32.mrb[0].mxu0
      %2436 = vmatprep.mubr.bf16.mxu0 0
      %2437 = vmatmul.mubr.bf16.gmra.mrb[0].mxu0 %v2334
      %v2438 = vpop.f32.mrb[0].mxu0
      %v2439 = vadd.f32 0.0, %v2438
      %v2440 = vpop.f32.mrb[0].mxu0
      %v2441 = vpop.f32.mrb[0].mxu0
      %v2442 = vadd.f32 0.0, %v2441
      %v2443 = vpop.f32.mrb[0].mxu0
      %2444 = vmatprep.mubr.bf16.mxu0 0
      %2445 = vmatmul.mubr.bf16.gmra.mrb[0].mxu0 %v2335
      %v2446 = vpop.f32.mrb[0].mxu0
      %v2447 = vadd.f32 0.0, %v2446
      %v2448 = vpop.f32.mrb[0].mxu0
      %v2449 = vpop.f32.mrb[0].mxu0
      %v2450 = vadd.f32 0.0, %v2449
      %v2451 = vpop.f32.mrb[0].mxu0
      %2452 = vdwg.mxu0
      %v2453 = vadd.f32 %v2306, %v2423
      %v2454 = vadd.f32 %v2307, %v2426
      %v2455 = vadd.f32 %v2308, %v2431
      %v2456 = vadd.f32 %v2309, %v2434
      %v2457 = vadd.f32 %v2310, %v2439
      %v2458 = vadd.f32 %v2311, %v2442
      %v2459 = vadd.f32 %v2312, %v2447
      %v2460 = vadd.f32 %v2313, %v2450
      %s2461 = scalar_lea.vmem %s7, 512
      %v2462 = vld [vmem:[%s2461] sm:$0xf]
      %v2463 = vld [vmem:[%s2461 + $0x4] sm:$0xf]
      %v2464 = vld [vmem:[%s2461 + $0x8] sm:$0xf]
      %v2465 = vld [vmem:[%s2461 + $0xc] sm:$0xf]
      %v2466 = vld [vmem:[%s2461 + $0x10] sm:$0xf]
      %v2467 = vld [vmem:[%s2461 + $0x14] sm:$0xf]
      %v2468 = vld [vmem:[%s2461 + $0x18] sm:$0xf]
      %v2469 = vld [vmem:[%s2461 + $0x1c] sm:$0xf]
      %v2470 = vld [vmem:[%s2461 + $0x20] sm:$0xf]
      %v2471 = vld [vmem:[%s2461 + $0x24] sm:$0xf]
      %v2472 = vld [vmem:[%s2461 + $0x28] sm:$0xf]
      %v2473 = vld [vmem:[%s2461 + $0x2c] sm:$0xf]
      %v2474 = vld [vmem:[%s2461 + $0x30] sm:$0xf]
      %v2475 = vld [vmem:[%s2461 + $0x34] sm:$0xf]
      %v2476 = vld [vmem:[%s2461 + $0x38] sm:$0xf]
      %v2477 = vld [vmem:[%s2461 + $0x3c] sm:$0xf]
      %v2478 = vunpack.c.l.b16 %v2159
      %v2479 = vpack.c.b16 %v2478, %v2331
      %v2497 = vunpack.c.l.b16 %v2462
      %v2498 = vunpack.c.l.b16 %v2463
      %v2499 = vunpack.c.l.b16 %v2464
      %v2500 = vunpack.c.l.b16 %v2465
      %v2501 = vunpack.c.l.b16 %v2466
      %v2502 = vunpack.c.l.b16 %v2467
      %v2503 = vunpack.c.l.b16 %v2468
      %v2504 = vunpack.c.l.b16 %v2469
      %v2505 = vunpack.c.l.b16 %v2470
      %v2506 = vunpack.c.l.b16 %v2471
      %v2507 = vunpack.c.l.b16 %v2472
      %v2508 = vunpack.c.l.b16 %v2473
      %v2509 = vunpack.c.l.b16 %v2474
      %v2510 = vunpack.c.l.b16 %v2475
      %v2511 = vunpack.c.l.b16 %v2476
      %v2512 = vunpack.c.l.b16 %v2477
      %v2513 = vpack.c.b16 %v2498, %v2497
      %v2514 = vpack.c.b16 %v2500, %v2499
      %v2515 = vpack.c.b16 %v2502, %v2501
      %v2516 = vpack.c.b16 %v2504, %v2503
      %v2517 = vpack.c.b16 %v2506, %v2505
      %v2518 = vpack.c.b16 %v2508, %v2507
      %v2519 = vpack.c.b16 %v2510, %v2509
      %v2520 = vpack.c.b16 %v2512, %v2511
      %2529 = vmatprep.subr.bf16.mxu0 0
      %2530 = vmatpush1.bf16.msra.mxu0 %v2513
      %2531 = vmatprep.subr.bf16.mxu0 0
      %2532 = vmatpush1.bf16.msra.mxu0 %v2514
      %2533 = vmatprep.subr.bf16.mxu0 0
      %2534 = vmatpush1.bf16.msra.mxu0 %v2515
      %2535 = vmatprep.subr.bf16.mxu0 0
      %2536 = vmatpush1.bf16.msra.mxu0 %v2516
      %2537 = vmatprep.subr.bf16.mxu0 0
      %2538 = vmatpush1.bf16.msra.mxu0 %v2517
      %2539 = vmatprep.subr.bf16.mxu0 0
      %2540 = vmatpush1.bf16.msra.mxu0 %v2518
      %2541 = vmatprep.subr.bf16.mxu0 0
      %2542 = vmatpush1.bf16.msra.mxu0 %v2519
      %2543 = vmatprep.subr.bf16.mxu0 0
      %2544 = vmatpush1.bf16.msra.mxu0 %v2520
      %2545 = vmatprep.subr.bf16.mxu0 0
      %2546 = vmatpush1.bf16.msra.mxu0 0
      %2547 = vmatprep.subr.bf16.mxu0 0
      %2548 = vmatpush1.bf16.msra.mxu0 0
      %2549 = vmatprep.subr.bf16.mxu0 0
      %2550 = vmatpush1.bf16.msra.mxu0 0
      %2551 = vmatprep.subr.bf16.mxu0 0
      %2552 = vmatpush1.bf16.msra.mxu0 0
      %2553 = vmatprep.subr.bf16.mxu0 0
      %2554 = vmatpush1.bf16.msra.mxu0 0
      %2555 = vmatprep.subr.bf16.mxu0 0
      %2556 = vmatpush1.bf16.msra.mxu0 0
      %2557 = vmatprep.subr.bf16.mxu0 0
      %2558 = vmatpush1.bf16.msra.mxu0 0
      %2559 = vmatprep.subr.bf16.mxu0 0
      %2560 = vmatpush1.bf16.msra.mxu0 0
      %2561 = vmatprep.mubr.bf16.mxu0 0
      %2562 = vmatmul.mubr.bf16.gmra.mrb[0].mxu0 %v2186
      %v2563 = vpop.f32.mrb[0].mxu0
      %v2564 = vadd.f32 0.0, %v2563
      %v2565 = vpop.f32.mrb[0].mxu0
      %v2566 = vpop.f32.mrb[0].mxu0
      %v2567 = vadd.f32 0.0, %v2566
      %v2568 = vpop.f32.mrb[0].mxu0
      %2569 = vmatprep.mubr.bf16.mxu0 0
      %2570 = vmatmul.mubr.bf16.gmra.mrb[0].mxu0 %v2187
      %v2571 = vpop.f32.mrb[0].mxu0
      %v2572 = vadd.f32 0.0, %v2571
      %v2573 = vpop.f32.mrb[0].mxu0
      %v2574 = vpop.f32.mrb[0].mxu0
      %v2575 = vadd.f32 0.0, %v2574
      %v2576 = vpop.f32.mrb[0].mxu0
      %2577 = vmatprep.mubr.bf16.mxu0 0
      %2578 = vmatmul.mubr.bf16.gmra.mrb[0].mxu0 %v2188
      %v2579 = vpop.f32.mrb[0].mxu0
      %v2580 = vadd.f32 0.0, %v2579
      %v2581 = vpop.f32.mrb[0].mxu0
      %v2582 = vpop.f32.mrb[0].mxu0
      %v2583 = vadd.f32 0.0, %v2582
      %v2584 = vpop.f32.mrb[0].mxu0
      %2585 = vmatprep.mubr.bf16.mxu0 0
      %2586 = vmatmul.mubr.bf16.gmra.mrb[0].mxu0 %v2479
      %v2587 = vpop.f32.mrb[0].mxu0
      %v2588 = vadd.f32 0.0, %v2587
      %v2589 = vpop.f32.mrb[0].mxu0
      %v2590 = vpop.f32.mrb[0].mxu0
      %v2591 = vadd.f32 0.0, %v2590
      %v2592 = vpop.f32.mrb[0].mxu0
      %2593 = vdwg.mxu0
      %v2594 = vadd.f32 %v2453, %v2564
      %v2595 = vadd.f32 %v2454, %v2567
      %v2596 = vadd.f32 %v2455, %v2572
      %v2597 = vadd.f32 %v2456, %v2575
      %v2598 = vadd.f32 %v2457, %v2580
      %v2599 = vadd.f32 %v2458, %v2583
      %v2600 = vadd.f32 %v2459, %v2588
      %v2601 = vadd.f32 %v2460, %v2591
      %v2602 = vld [vmem:[%s8] sm:$0x1]
      %v2604 = vlaneseq
      %v2605 = vshrl.u32 %v2604, 7
      %v2606 = vsub.s32 0, %v2605
      %v2607 = vrot.slane %v2602, %v2606
      %v2609 = vadd.f32 %v2594, %v2607
      %v2610 = vadd.f32 %v2595, %v2607
      %v2611 = vadd.f32 %v2596, %v2607
      %v2612 = vadd.f32 %v2597, %v2607
      %v2613 = vadd.f32 %v2598, %v2607
      %v2614 = vadd.f32 %v2599, %v2607
      %v2615 = vadd.f32 %v2600, %v2607
      %v2616 = vadd.f32 %v2601, %v2607
      %v2617 = vld [vmem:[%s9] sm:$0x1]
      %v2619 = vlaneseq
      %v2620 = vshrl.u32 %v2619, 7
      %v2621 = vsub.s32 0, %v2620
      %v2622 = vrot.slane %v2617, %v2621
      %v2624 = vmul.f32 %v2609, %v2622
      %v2625 = vmul.f32 %v2610, %v2622
      %v2626 = vmul.f32 %v2611, %v2622
      %v2627 = vmul.f32 %v2612, %v2622
      %v2628 = vmul.f32 %v2613, %v2622
      %v2629 = vmul.f32 %v2614, %v2622
      %v2630 = vmul.f32 %v2615, %v2622
      %v2631 = vmul.f32 %v2616, %v2622
      %v2632 = vld [vmem:[%s10] sm:$0x1]
      %v2634 = vlaneseq
      %v2635 = vshrl.u32 %v2634, 7
      %v2636 = vsub.s32 0, %v2635
      %v2637 = vrot.slane %v2632, %v2636
      %v2639 = vadd.f32 %v2624, %v2637
      %v2640 = vadd.f32 %v2625, %v2637
      %v2641 = vadd.f32 %v2626, %v2637
      %v2642 = vadd.f32 %v2627, %v2637
      %v2643 = vadd.f32 %v2628, %v2637
      %v2644 = vadd.f32 %v2629, %v2637
      %v2645 = vadd.f32 %v2630, %v2637
      %v2646 = vadd.f32 %v2631, %v2637
      %v2647 = vmax.f32 %v2639, 0.0
      %v2648 = vmax.f32 %v2640, 0.0
      %v2649 = vmax.f32 %v2641, 0.0
      %v2650 = vmax.f32 %v2642, 0.0
      %v2651 = vmax.f32 %v2643, 0.0
      %v2652 = vmax.f32 %v2644, 0.0
      %v2653 = vmax.f32 %v2645, 0.0
      %v2654 = vmax.f32 %v2646, 0.0
      %v2655 = vpack.c.bf16 %v2648, %v2647
      %v2656 = vpack.c.bf16 %v2650, %v2649
      %v2657 = vpack.c.bf16 %v2652, %v2651
      %v2658 = vpack.c.bf16 %v2654, %v2653
      %v2659 = vld [vmem:[%s11] sm:$0xf]
      %v2660 = vld [vmem:[%s11 + $0x4] sm:$0xf]
      %v2661 = vld [vmem:[%s11 + $0x8] sm:$0xf]
      %v2662 = vld [vmem:[%s11 + $0xc] sm:$0xf]
      %v2663 = vld [vmem:[%s11 + $0x10] sm:$0xf]
      %v2664 = vld [vmem:[%s11 + $0x14] sm:$0xf]
      %v2665 = vld [vmem:[%s11 + $0x18] sm:$0xf]
      %v2666 = vld [vmem:[%s11 + $0x1c] sm:$0xf]
      %v2667 = vld [vmem:[%s11 + $0x20] sm:$0xf]
      %v2668 = vld [vmem:[%s11 + $0x24] sm:$0xf]
      %v2669 = vld [vmem:[%s11 + $0x28] sm:$0xf]
      %v2670 = vld [vmem:[%s11 + $0x2c] sm:$0xf]
      %v2671 = vld [vmem:[%s11 + $0x30] sm:$0xf]
      %v2672 = vld [vmem:[%s11 + $0x34] sm:$0xf]
      %v2673 = vld [vmem:[%s11 + $0x38] sm:$0xf]
      %v2674 = vld [vmem:[%s11 + $0x3c] sm:$0xf]
      %v2675 = vld [vmem:[%s12] sm:$0x1]
      %v2677 = vlaneseq
      %v2678 = vshrl.u32 %v2677, 7
      %v2679 = vsub.s32 0, %v2678
      %v2680 = vrot.slane %v2675, %v2679
      %v2698 = vunpack.c.l.b16 %v2659
      %v2699 = vunpack.c.l.b16 %v2660
      %v2700 = vunpack.c.l.b16 %v2661
      %v2701 = vunpack.c.l.b16 %v2662
      %v2702 = vunpack.c.l.b16 %v2663
      %v2703 = vunpack.c.l.b16 %v2664
      %v2704 = vunpack.c.l.b16 %v2665
      %v2705 = vunpack.c.l.b16 %v2666
      %v2706 = vunpack.c.l.b16 %v2667
      %v2707 = vunpack.c.l.b16 %v2668
      %v2708 = vunpack.c.l.b16 %v2669
      %v2709 = vunpack.c.l.b16 %v2670
      %v2710 = vunpack.c.l.b16 %v2671
      %v2711 = vunpack.c.l.b16 %v2672
      %v2712 = vunpack.c.l.b16 %v2673
      %v2713 = vunpack.c.l.b16 %v2674
      %v2714 = vpack.c.b16 %v2699, %v2698
      %v2715 = vpack.c.b16 %v2701, %v2700
      %v2716 = vpack.c.b16 %v2703, %v2702
      %v2717 = vpack.c.b16 %v2705, %v2704
      %v2718 = vpack.c.b16 %v2707, %v2706
      %v2719 = vpack.c.b16 %v2709, %v2708
      %v2720 = vpack.c.b16 %v2711, %v2710
      %v2721 = vpack.c.b16 %v2713, %v2712
      %2730 = vmatprep.subr.bf16.mxu0 0
      %2731 = vmatpush1.bf16.msra.mxu0 %v2714
      %2732 = vmatprep.subr.bf16.mxu0 0
      %2733 = vmatpush1.bf16.msra.mxu0 %v2715
      %2734 = vmatprep.subr.bf16.mxu0 0
      %2735 = vmatpush1.bf16.msra.mxu0 %v2716
      %2736 = vmatprep.subr.bf16.mxu0 0
      %2737 = vmatpush1.bf16.msra.mxu0 %v2717
      %2738 = vmatprep.subr.bf16.mxu0 0
      %2739 = vmatpush1.bf16.msra.mxu0 %v2718
      %2740 = vmatprep.subr.bf16.mxu0 0
      %2741 = vmatpush1.bf16.msra.mxu0 %v2719
      %2742 = vmatprep.subr.bf16.mxu0 0
      %2743 = vmatpush1.bf16.msra.mxu0 %v2720
      %2744 = vmatprep.subr.bf16.mxu0 0
      %2745 = vmatpush1.bf16.msra.mxu0 %v2721
      %2746 = vmatprep.subr.bf16.mxu0 0
      %2747 = vmatpush1.bf16.msra.mxu0 0
      %2748 = vmatprep.subr.bf16.mxu0 0
      %2749 = vmatpush1.bf16.msra.mxu0 0
      %2750 = vmatprep.subr.bf16.mxu0 0
      %2751 = vmatpush1.bf16.msra.mxu0 0
      %2752 = vmatprep.subr.bf16.mxu0 0
      %2753 = vmatpush1.bf16.msra.mxu0 0
      %2754 = vmatprep.subr.bf16.mxu0 0
      %2755 = vmatpush1.bf16.msra.mxu0 0
      %2756 = vmatprep.subr.bf16.mxu0 0
      %2757 = vmatpush1.bf16.msra.mxu0 0
      %2758 = vmatprep.subr.bf16.mxu0 0
      %2759 = vmatpush1.bf16.msra.mxu0 0
      %2760 = vmatprep.subr.bf16.mxu0 0
      %2761 = vmatpush1.bf16.msra.mxu0 0
      %2762 = vmatprep.mubr.bf16.mxu0 0
      %2763 = vmatmul.mubr.bf16.gmra.mrb[0].mxu0 %v2655
      %v2764 = vpop.f32.mrb[0].mxu0
      %v2765 = vadd.f32 %v2680, %v2764
      %v2766 = vpop.f32.mrb[0].mxu0
      %v2767 = vpop.f32.mrb[0].mxu0
      %v2768 = vadd.f32 %v2680, %v2767
      %v2769 = vpop.f32.mrb[0].mxu0
      %2770 = vmatprep.mubr.bf16.mxu0 0
      %2771 = vmatmul.mubr.bf16.gmra.mrb[0].mxu0 %v2656
      %v2772 = vpop.f32.mrb[0].mxu0
      %v2773 = vadd.f32 %v2680, %v2772
      %v2774 = vpop.f32.mrb[0].mxu0
      %v2775 = vpop.f32.mrb[0].mxu0
      %v2776 = vadd.f32 %v2680, %v2775
      %v2777 = vpop.f32.mrb[0].mxu0
      %2778 = vmatprep.mubr.bf16.mxu0 0
      %2779 = vmatmul.mubr.bf16.gmra.mrb[0].mxu0 %v2657
      %v2780 = vpop.f32.mrb[0].mxu0
      %v2781 = vadd.f32 %v2680, %v2780
      %v2782 = vpop.f32.mrb[0].mxu0
      %v2783 = vpop.f32.mrb[0].mxu0
      %v2784 = vadd.f32 %v2680, %v2783
      %v2785 = vpop.f32.mrb[0].mxu0
      %2786 = vmatprep.mubr.bf16.mxu0 0
      %2787 = vmatmul.mubr.bf16.gmra.mrb[0].mxu0 %v2658
      %v2788 = vpop.f32.mrb[0].mxu0
      %v2789 = vadd.f32 %v2680, %v2788
      %v2790 = vpop.f32.mrb[0].mxu0
      %v2791 = vpop.f32.mrb[0].mxu0
      %v2792 = vadd.f32 %v2680, %v2791
      %v2793 = vpop.f32.mrb[0].mxu0
      %2794 = vdwg.mxu0
      %v2795 = vld [vmem:[%s13] sm:$0x1]
      %v2797 = vlaneseq
      %v2798 = vshrl.u32 %v2797, 7
      %v2799 = vsub.s32 0, %v2798
      %v2800 = vrot.slane %v2795, %v2799
      %v2802 = vmul.f32 %v558, %v2800
      %v2803 = vmul.f32 %v559, %v2800
      %v2804 = vmul.f32 %v560, %v2800
      %v2805 = vmul.f32 %v561, %v2800
      %v2806 = vmul.f32 %v562, %v2800
      %v2807 = vmul.f32 %v563, %v2800
      %v2808 = vmul.f32 %v564, %v2800
      %v2809 = vmul.f32 %v565, %v2800
      %v2810 = vld [vmem:[%s14] sm:$0x1]
      %v2812 = vlaneseq
      %v2813 = vshrl.u32 %v2812, 7
      %v2814 = vsub.s32 0, %v2813
      %v2815 = vrot.slane %v2810, %v2814
      %v2817 = vadd.f32 %v2802, %v2815
      %v2818 = vadd.f32 %v2803, %v2815
      %v2819 = vadd.f32 %v2804, %v2815
      %v2820 = vadd.f32 %v2805, %v2815
      %v2821 = vadd.f32 %v2806, %v2815
      %v2822 = vadd.f32 %v2807, %v2815
      %v2823 = vadd.f32 %v2808, %v2815
      %v2824 = vadd.f32 %v2809, %v2815
      %v2825 = vmax.f32 %v2817, 0.0
      %v2826 = vmax.f32 %v2818, 0.0
      %v2827 = vmax.f32 %v2819, 0.0
      %v2828 = vmax.f32 %v2820, 0.0
      %v2829 = vmax.f32 %v2821, 0.0
      %v2830 = vmax.f32 %v2822, 0.0
      %v2831 = vmax.f32 %v2823, 0.0
      %v2832 = vmax.f32 %v2824, 0.0
      %v2833 = vpack.c.bf16 %v2826, %v2825
      %v2834 = vpack.c.bf16 %v2828, %v2827
      %v2835 = vpack.c.bf16 %v2830, %v2829
      %v2836 = vpack.c.bf16 %v2832, %v2831
      %v2837 = vld [vmem:[%s15] sm:$0xf]
      %v2838 = vld [vmem:[%s15 + $0x4] sm:$0xf]
      %v2839 = vld [vmem:[%s15 + $0x8] sm:$0xf]
      %v2840 = vld [vmem:[%s15 + $0xc] sm:$0xf]
      %v2841 = vld [vmem:[%s15 + $0x10] sm:$0xf]
      %v2842 = vld [vmem:[%s15 + $0x14] sm:$0xf]
      %v2843 = vld [vmem:[%s15 + $0x18] sm:$0xf]
      %v2844 = vld [vmem:[%s15 + $0x1c] sm:$0xf]
      %v2845 = vld [vmem:[%s15 + $0x20] sm:$0xf]
      %v2846 = vld [vmem:[%s15 + $0x24] sm:$0xf]
      %v2847 = vld [vmem:[%s15 + $0x28] sm:$0xf]
      %v2848 = vld [vmem:[%s15 + $0x2c] sm:$0xf]
      %v2849 = vld [vmem:[%s15 + $0x30] sm:$0xf]
      %v2850 = vld [vmem:[%s15 + $0x34] sm:$0xf]
      %v2851 = vld [vmem:[%s15 + $0x38] sm:$0xf]
      %v2852 = vld [vmem:[%s15 + $0x3c] sm:$0xf]
      %v2853 = vld [vmem:[%s16] sm:$0x1]
      %v2855 = vlaneseq
      %v2856 = vshrl.u32 %v2855, 7
      %v2857 = vsub.s32 0, %v2856
      %v2858 = vrot.slane %v2853, %v2857
      %v2876 = vunpack.c.l.b16 %v2837
      %v2877 = vunpack.c.l.b16 %v2838
      %v2878 = vunpack.c.l.b16 %v2839
      %v2879 = vunpack.c.l.b16 %v2840
      %v2880 = vunpack.c.l.b16 %v2841
      %v2881 = vunpack.c.l.b16 %v2842
      %v2882 = vunpack.c.l.b16 %v2843
      %v2883 = vunpack.c.l.b16 %v2844
      %v2884 = vunpack.c.l.b16 %v2845
      %v2885 = vunpack.c.l.b16 %v2846
      %v2886 = vunpack.c.l.b16 %v2847
      %v2887 = vunpack.c.l.b16 %v2848
      %v2888 = vunpack.c.l.b16 %v2849
      %v2889 = vunpack.c.l.b16 %v2850
      %v2890 = vunpack.c.l.b16 %v2851
      %v2891 = vunpack.c.l.b16 %v2852
      %v2892 = vpack.c.b16 %v2877, %v2876
      %v2893 = vpack.c.b16 %v2879, %v2878
      %v2894 = vpack.c.b16 %v2881, %v2880
      %v2895 = vpack.c.b16 %v2883, %v2882
      %v2896 = vpack.c.b16 %v2885, %v2884
      %v2897 = vpack.c.b16 %v2887, %v2886
      %v2898 = vpack.c.b16 %v2889, %v2888
      %v2899 = vpack.c.b16 %v2891, %v2890
      %2908 = vmatprep.subr.bf16.mxu0 0
      %2909 = vmatpush1.bf16.msra.mxu0 %v2892
      %2910 = vmatprep.subr.bf16.mxu0 0
      %2911 = vmatpush1.bf16.msra.mxu0 %v2893
      %2912 = vmatprep.subr.bf16.mxu0 0
      %2913 = vmatpush1.bf16.msra.mxu0 %v2894
      %2914 = vmatprep.subr.bf16.mxu0 0
      %2915 = vmatpush1.bf16.msra.mxu0 %v2895
      %2916 = vmatprep.subr.bf16.mxu0 0
      %2917 = vmatpush1.bf16.msra.mxu0 %v2896
      %2918 = vmatprep.subr.bf16.mxu0 0
      %2919 = vmatpush1.bf16.msra.mxu0 %v2897
      %2920 = vmatprep.subr.bf16.mxu0 0
      %2921 = vmatpush1.bf16.msra.mxu0 %v2898
      %2922 = vmatprep.subr.bf16.mxu0 0
      %2923 = vmatpush1.bf16.msra.mxu0 %v2899
      %2924 = vmatprep.subr.bf16.mxu0 0
      %2925 = vmatpush1.bf16.msra.mxu0 0
      %2926 = vmatprep.subr.bf16.mxu0 0
      %2927 = vmatpush1.bf16.msra.mxu0 0
      %2928 = vmatprep.subr.bf16.mxu0 0
      %2929 = vmatpush1.bf16.msra.mxu0 0
      %2930 = vmatprep.subr.bf16.mxu0 0
      %2931 = vmatpush1.bf16.msra.mxu0 0
      %2932 = vmatprep.subr.bf16.mxu0 0
      %2933 = vmatpush1.bf16.msra.mxu0 0
      %2934 = vmatprep.subr.bf16.mxu0 0
      %2935 = vmatpush1.bf16.msra.mxu0 0
      %2936 = vmatprep.subr.bf16.mxu0 0
      %2937 = vmatpush1.bf16.msra.mxu0 0
      %2938 = vmatprep.subr.bf16.mxu0 0
      %2939 = vmatpush1.bf16.msra.mxu0 0
      %2940 = vmatprep.mubr.bf16.mxu0 0
      %2941 = vmatmul.mubr.bf16.gmra.mrb[0].mxu0 %v2833
      %v2942 = vpop.f32.mrb[0].mxu0
      %v2943 = vadd.f32 %v2858, %v2942
      %v2944 = vpop.f32.mrb[0].mxu0
      %v2945 = vpop.f32.mrb[0].mxu0
      %v2946 = vadd.f32 %v2858, %v2945
      %v2947 = vpop.f32.mrb[0].mxu0
      %2948 = vmatprep.mubr.bf16.mxu0 0
      %2949 = vmatmul.mubr.bf16.gmra.mrb[0].mxu0 %v2834
      %v2950 = vpop.f32.mrb[0].mxu0
      %v2951 = vadd.f32 %v2858, %v2950
      %v2952 = vpop.f32.mrb[0].mxu0
      %v2953 = vpop.f32.mrb[0].mxu0
      %v2954 = vadd.f32 %v2858, %v2953
      %v2955 = vpop.f32.mrb[0].mxu0
      %2956 = vmatprep.mubr.bf16.mxu0 0
      %2957 = vmatmul.mubr.bf16.gmra.mrb[0].mxu0 %v2835
      %v2958 = vpop.f32.mrb[0].mxu0
      %v2959 = vadd.f32 %v2858, %v2958
      %v2960 = vpop.f32.mrb[0].mxu0
      %v2961 = vpop.f32.mrb[0].mxu0
      %v2962 = vadd.f32 %v2858, %v2961
      %v2963 = vpop.f32.mrb[0].mxu0
      %2964 = vmatprep.mubr.bf16.mxu0 0
      %2965 = vmatmul.mubr.bf16.gmra.mrb[0].mxu0 %v2836
      %v2966 = vpop.f32.mrb[0].mxu0
      %v2967 = vadd.f32 %v2858, %v2966
      %v2968 = vpop.f32.mrb[0].mxu0
      %v2969 = vpop.f32.mrb[0].mxu0
      %v2970 = vadd.f32 %v2858, %v2969
      %v2971 = vpop.f32.mrb[0].mxu0
      %2972 = vdwg.mxu0
      %v2973 = vadd.f32 %v2765, %v2943
      %v2974 = vadd.f32 %v2768, %v2946
      %v2975 = vadd.f32 %v2773, %v2951
      %v2976 = vadd.f32 %v2776, %v2954
      %v2977 = vadd.f32 %v2781, %v2959
      %v2978 = vadd.f32 %v2784, %v2962
      %v2979 = vadd.f32 %v2789, %v2967
      %v2980 = vadd.f32 %v2792, %v2970
      %v2981 = vpack.c.bf16 %v2974, %v2973
      %v2982 = vpack.c.bf16 %v2976, %v2975
      %v2983 = vpack.c.bf16 %v2978, %v2977
      %v2984 = vpack.c.bf16 %v2980, %v2979
      %v2989 = vunpack.c.l.b16 %v2981
      %v2990 = vunpack.c.h.b16 %v2981
      %v2991 = vunpack.c.l.b16 %v2982
      %v2992 = vunpack.c.h.b16 %v2982
      %v2993 = vunpack.c.l.b16 %v2983
      %v2994 = vunpack.c.h.b16 %v2983
      %v2995 = vunpack.c.l.b16 %v2984
      %v2996 = vunpack.c.h.b16 %v2984
      %v2997 = vpack.c.b16 %v2989, %v2989
      %v2998 = vpack.c.b16 %v2990, %v2990
      %v2999 = vpack.c.b16 %v2991, %v2991
      %v3000 = vpack.c.b16 %v2992, %v2992
      %v3001 = vpack.c.b16 %v2993, %v2993
      %v3002 = vpack.c.b16 %v2994, %v2994
      %v3003 = vpack.c.b16 %v2995, %v2995
      %v3004 = vpack.c.b16 %v2996, %v2996
      %3013 = vst [vmem:[%s548] sm:$0xf] %v2997
      %3014 = vst [vmem:[%s548 + $0x4] sm:$0xf] %v2998
      %3015 = vst [vmem:[%s548 + $0x8] sm:$0xf] %v2999
      %3016 = vst [vmem:[%s548 + $0xc] sm:$0xf] %v3000
      %3017 = vst [vmem:[%s548 + $0x10] sm:$0xf] %v3001
      %3018 = vst [vmem:[%s548 + $0x14] sm:$0xf] %v3002
      %3019 = vst [vmem:[%s548 + $0x18] sm:$0xf] %v3003
      %3020 = vst [vmem:[%s548 + $0x1c] sm:$0xf] %v3004
      %p3021 = scmp.lt.s32.totalorder %s28, 1
      %s3022 = scalar_select %p3021, %s28, 1
      %s3023 = smul.addr %s3022, 8
      %s3024 = smul.addr %s3023, 4
      %s3025 = scalar_lea.vmem %s17, %s3024
      // Predicated region
      $region89: #{preact_bottleneck.1} parent=87 // pred_check
        %p3026 = pneg %p408
      $region90: #{preact_bottleneck.1} parent=87 // pred_check_branch
        %3028 = sbr.rel (%p3026) target = $region92
      $region91: #{preact_bottleneck.1} parent=87 // pred_region
        _
      $region92: #{preact_bottleneck.1} parent=87 // pred_fallthru
        _
    $region88: #{preact_bottleneck.1} parent=5 // pred_fallthru
      _
    %p3029 = scmp.le.s32.totalorder 2, %s23
    // Predicated region
    $region93: #{preact_bottleneck.1} parent=5 // pred_check
      %p3030 = pneg %p3029
    $region94: #{preact_bottleneck.1} parent=5 // pred_check_branch
      %3032 = sbr.rel (%p3030) target = $region96
    $region95: #{preact_bottleneck.1} parent=5 // pred_region
      %s3033 = ssub.s32 %s23, 2
      // Predicated region
      $region97: #{preact_bottleneck.1} parent=95 // pred_check
        %p3034 = pneg %p414
      $region98: #{preact_bottleneck.1} parent=95 // pred_check_branch
        %3036 = sbr.rel (%p3034) target = $region100
      $region99: #{preact_bottleneck.1} parent=95 // pred_region
        %p3037 = scmp.lt.s32.totalorder %s29, 1
        %s3038 = scalar_select %p3037, %s29, 1
        %s3039 = smul.addr %s3038, 8
        %s3040 = smul.addr %s3039, 4
        %s3041 = scalar_lea.vmem %s17, %s3040
      $region100: #{preact_bottleneck.1} parent=95 // pred_fallthru
        _
    $region96: #{preact_bottleneck.1} parent=5 // pred_fallthru
      _
  $region6: #{preact_bottleneck.1} parent=0 // loop_footer
    %s27 = sadd.s32 1, %s23
  $region7: #{preact_bottleneck.1} parent=0 // loop_footer_branch
    %22 = sbr.rel target = $region3
  $region8: #{preact_bottleneck.1} parent=0 // loop_exit
    _

</llo_original>
